<compile_context>
chip_gen: v7x
topology: tpu7x:2x2x1
jax: 0.10.0
libtpu: 0.0.40
codegen_flags: <defaults>
</compile_context>

<pallas_src>
import math
import functools

import jax
import jax.numpy as jnp
from jax.experimental import pallas as pl
from jax.experimental.pallas import tpu as pltpu

D_MODEL = 64
NHEAD = 2
HEAD_DIM = D_MODEL // NHEAD
FF = 128
LN_EPS = 1e-5
LANE = 128           # lane width; output vocab is padded to this
V_PAD = LANE         # padded output-head width (assumes tgt_vocab <= 128)

# ----------------------------- packed layouts ------------------------------
# Every bias / LayerNorm vector lives in one row of a (rows, 128) f32 slab.
_VEC_LAYOUT = [
    # encoder layer
    ("e_bq", D_MODEL), ("e_bk", D_MODEL), ("e_bv", D_MODEL), ("e_bo", D_MODEL),
    ("e_n1w", D_MODEL), ("e_n1b", D_MODEL),
    ("e_b1", FF), ("e_b2", D_MODEL),
    ("e_n2w", D_MODEL), ("e_n2b", D_MODEL),
    ("e_fnw", D_MODEL), ("e_fnb", D_MODEL),
    # decoder layer
    ("d_bq", D_MODEL), ("d_bk", D_MODEL), ("d_bv", D_MODEL), ("d_sbo", D_MODEL),
    ("d_n1w", D_MODEL), ("d_n1b", D_MODEL),
    ("d_cbq", D_MODEL), ("d_cbk", D_MODEL), ("d_cbv", D_MODEL), ("d_cbo", D_MODEL),
    ("d_n2w", D_MODEL), ("d_n2b", D_MODEL),
    ("d_b1", FF), ("d_b2", D_MODEL),
    ("d_n3w", D_MODEL), ("d_n3b", D_MODEL),
    ("d_fnw", D_MODEL), ("d_fnb", D_MODEL),
    # output head bias (padded to V_PAD lanes)
    ("fc_b", V_PAD),
]
_VEC_W = dict(_VEC_LAYOUT)
_VEC_ROW = {name: i for i, (name, _) in enumerate(_VEC_LAYOUT)}


def _col_layout(entries, align=LANE):
    """Column offsets (each entry's start aligned to a vreg lane boundary)."""
    offs, cur = {}, 0
    for name, w in entries:
        offs[name] = cur
        cur += -(-w // align) * align
    return offs, cur


# All (D_MODEL, .) weight matrices concatenated along columns (bf16).
_WD_LAYOUT = [
    ("e_wqkv", 3 * D_MODEL), ("e_wo", D_MODEL), ("e_l1", FF),
    ("d_wqkv", 3 * D_MODEL), ("d_swo", D_MODEL),
    ("d_wq", D_MODEL), ("d_wkv", 2 * D_MODEL), ("d_cwo", D_MODEL),
    ("d_l1", FF), ("fc_w", V_PAD),
]
_WD_W = dict(_WD_LAYOUT)
_WD_OFF, _WD_COLS = _col_layout(_WD_LAYOUT)

# All (FF, .) weight matrices concatenated along columns (bf16).
_WF_LAYOUT = [("e_l2", D_MODEL), ("d_l2", D_MODEL)]
_WF_W = dict(_WF_LAYOUT)
_WF_OFF, _WF_COLS = _col_layout(_WF_LAYOUT)


def _vmem_spec():
    return pl.BlockSpec(memory_space=pltpu.MemorySpace.VMEM)


# --------------------------- fused forward kernel ---------------------------

def _fused_transformer_kernel(ids_ref, tab_ref, pe_ref, vec_ref, wd_ref, wf_ref,
                              out_ref, *, S, T, B, n_vocab):
    emb_scale = math.sqrt(D_MODEL)
    attn_scale = 1.0 / math.sqrt(HEAD_DIM)

    # bf16 operands on the MXU, f32 accumulation.
    def matmul(a, b):
        return jnp.dot(a.astype(jnp.bfloat16), b.astype(jnp.bfloat16),
                       preferred_element_type=jnp.float32)

    def matmul_nt(a, b):  # a @ b.T
        return jax.lax.dot_general(
            a.astype(jnp.bfloat16), b.astype(jnp.bfloat16),
            (((1,), (1,)), ((), ())), preferred_element_type=jnp.float32)

    # Static carves of the packed slabs.
    def vec(name):
        r = _VEC_ROW[name]
        return vec_ref[r:r + 1, 0:_VEC_W[name]]            # (1, w) f32

    def wd(name):
        o = _WD_OFF[name]
        return wd_ref[:, o:o + _WD_W[name]]                 # (D_MODEL, w) bf16

    def wf(name):
        o = _WF_OFF[name]
        return wf_ref[:, o:o + _WF_W[name]]                 # (FF, w) bf16

    def layernorm(x, wname, bname):
        mu = jnp.mean(x, axis=-1, keepdims=True)
        c = x - mu
        var = jnp.mean(c * c, axis=-1, keepdims=True)
        return c * jax.lax.rsqrt(var + LN_EPS) * vec(wname) + vec(bname)

    def sdpa(q, k, v, Lq, Lk, wo, bo):
        # q: (B*Lq, D), k/v: (B*Lk, D); batch-first flattened rows (row = b*L+l).
        # 1) score tiles for every (batch, head) pair, stacked along sublanes so
        #    softmax (max / exp / sum / reciprocal) is issued once, not B*H times.
        tiles = []
        for b in range(B):
            for h in range(NHEAD):
                qs = q[b * Lq:(b + 1) * Lq, h * HEAD_DIM:(h + 1) * HEAD_DIM]
                ks = k[b * Lk:(b + 1) * Lk, h * HEAD_DIM:(h + 1) * HEAD_DIM]
                tiles.append(matmul_nt(qs, ks))
        s = jnp.concatenate(tiles, axis=0) * attn_scale     # (B*H*Lq, Lk) f32
        m = jnp.max(s, axis=-1, keepdims=True)
        p = jnp.exp(s - m)
        p = p * pl.reciprocal(jnp.sum(p, axis=-1, keepdims=True), approx=True)
        # 2) context with W_O folded into the head loop; accumulate in registers
        #    (no VMEM scratch, no masked 32-wide stores).
        outs = []
        for b in range(B):
            acc = None
            for h in range(NHEAD):
                i = b * NHEAD + h
                ph = p[i * Lq:(i + 1) * Lq, :]
                vs = v[b * Lk:(b + 1) * Lk, h * HEAD_DIM:(h + 1) * HEAD_DIM]
                ctx = matmul(ph, vs)                         # (Lq, HEAD_DIM)
                term = matmul(ctx, wo[h * HEAD_DIM:(h + 1) * HEAD_DIM, :])
                acc = term if acc is None else acc + term
            outs.append(acc)
        return jnp.concatenate(outs, axis=0) + bo

    def self_attn(x, L, prefix, wo_name, bo_name):
        qkv = matmul(x, wd(prefix + "_wqkv"))                # fused QKV: (B*L, 3D)
        q = qkv[:, 0:D_MODEL] + vec(prefix + "_bq")
        k = qkv[:, D_MODEL:2 * D_MODEL] + vec(prefix + "_bk")
        v = qkv[:, 2 * D_MODEL:3 * D_MODEL] + vec(prefix + "_bv")
        return sdpa(q, k, v, L, L, wd(wo_name), vec(bo_name))

    def cross_attn(x, mem, Lq, Lk):
        q = matmul(x, wd("d_wq")) + vec("d_cbq")
        kv = matmul(mem, wd("d_wkv"))                        # fused KV: (B*Lk, 2D)
        k = kv[:, 0:D_MODEL] + vec("d_cbk")
        v = kv[:, D_MODEL:2 * D_MODEL] + vec("d_cbv")
        return sdpa(q, k, v, Lq, Lk, wd("d_cwo"), vec("d_cbo"))

    def ffn(x, l1, b1, l2, b2):
        h = jnp.maximum(matmul(x, l1) + b1, 0.0)
        return matmul(h, l2) + b2

    # -------- embeddings: src + tgt fused in ONE one-hot matmul --------
    # TODO(synk): one-hot embedding + fully-resident output head assume a tiny
    # vocab; a realistic vocab needs a scalar-prefetch row gather + gridded head.
    R = B * S + B * T
    ids = ids_ref[...]                                       # (R, 1) int32
    iota = jax.lax.broadcasted_iota(jnp.int32, (R, n_vocab), 1)
    onehot = jnp.where(iota == ids, 1.0, 0.0)                # (R, n_vocab)
    emb = matmul(onehot, tab_ref[...]) * emb_scale           # (R, D) f32

    pe_s = jnp.concatenate([pe_ref[0:S, :]] * B, axis=0)     # (B*S, D)
    pe_t = jnp.concatenate([pe_ref[0:T, :]] * B, axis=0)     # (B*T, D)
    src_x = emb[0:B * S, :] + pe_s
    tgt_x = emb[B * S:R, :] + pe_t
    # TODO(synk): dropout (p=0.1) is evaluated in eval mode (identity).

    # -------- encoder layer (post-norm, ReLU FFN) + encoder final norm --------
    sa = self_attn(src_x, S, "e", "e_wo", "e_bo")
    x1 = layernorm(src_x + sa, "e_n1w", "e_n1b")
    x2 = layernorm(x1 + ffn(x1, wd("e_l1"), vec("e_b1"), wf("e_l2"), vec("e_b2")),
                   "e_n2w", "e_n2b")
    memory = layernorm(x2, "e_fnw", "e_fnb")

    # -------- decoder layer (self-attn unmasked, as in the reference call) ----
    sa = self_attn(tgt_x, T, "d", "d_swo", "d_sbo")
    y1 = layernorm(tgt_x + sa, "d_n1w", "d_n1b")
    ca = cross_attn(y1, memory, T, S)
    y2 = layernorm(y1 + ca, "d_n2w", "d_n2b")
    y3 = layernorm(y2 + ffn(y2, wd("d_l1"), vec("d_b1"), wf("d_l2"), vec("d_b2")),
                   "d_n3w", "d_n3b")
    dec = layernorm(y3, "d_fnw", "d_fnb")

    # -------- output projection: lane-dense (vocab padded to 128) --------
    out_ref[...] = matmul(dec, wd("fc_w")) + vec("fc_b")


# ------------------------------- model glue --------------------------------

def transformer_forward(params, src, tgt, *, src_vocab, tgt_vocab):
    S, B = src.shape
    T = tgt.shape[0]
    n_vocab = src_vocab + tgt_vocab

    # Batch-first flattened token ids (row = b*L + l); tgt ids offset into the
    # fused table.  Tiny layout-only XLA ops; all compute is in the kernel.
    src_ids = src.T.reshape(B * S).astype(jnp.int32)
    tgt_ids = tgt.T.reshape(B * T).astype(jnp.int32) + src_vocab
    ids = jnp.concatenate([src_ids, tgt_ids]).reshape(-1, 1)

    pe = params["pe"][: max(S, T)]

    inputs = [ids, params["emb_tab"], pe,
              params["vec_slab"], params["wd_slab"], params["wf_slab"]]

    out_pad = pl.pallas_call(
        functools.partial(_fused_transformer_kernel,
                          S=S, T=T, B=B, n_vocab=n_vocab),
        out_shape=jax.ShapeDtypeStruct((B * T, V_PAD), jnp.float32),
        in_specs=[_vmem_spec()] * len(inputs),
        out_specs=_vmem_spec(),
    )(*inputs)

    # (B*T, Vpad) -> (T, B, V): tiny layout op outside the kernel.
    return out_pad.reshape(B, T, V_PAD).transpose(1, 0, 2)[:, :, :tgt_vocab]


# ------------------------------- parameters --------------------------------

def make_positional_encoding(max_len, d_model):
    position = jnp.arange(max_len, dtype=jnp.float32)[:, None]
    div_term = jnp.exp(jnp.arange(0, d_model, 2, dtype=jnp.float32)
                       * (-math.log(10000.0) / d_model))
    pe = jnp.zeros((max_len, d_model), jnp.float32)
    pe = pe.at[:, 0::2].set(jnp.sin(position * div_term))
    pe = pe.at[:, 1::2].set(jnp.cos(position * div_term))
    return pe  # (max_len, d_model)


def _pack_vec_slab(vals):
    slab = jnp.zeros((len(_VEC_LAYOUT), LANE), jnp.float32)
    for i, (name, w) in enumerate(_VEC_LAYOUT):
        slab = slab.at[i, :w].set(vals[name].reshape(-1))
    return slab


def _pack_col_slab(vals, layout, offs, total_cols, rows):
    slab = jnp.zeros((rows, total_cols), jnp.bfloat16)
    for name, w in layout:
        slab = slab.at[:, offs[name]:offs[name] + w].set(
            vals[name].astype(jnp.bfloat16))
    return slab


def init_params(key, src_vocab, tgt_vocab):
    assert tgt_vocab <= V_PAD, "packed output head assumes tgt_vocab <= 128"
    keys = iter(jax.random.split(key, 64))

    def nrm(shape, scale=0.02):
        return scale * jax.random.normal(next(keys), shape, dtype=jnp.float32)

    # Weights stored pre-transposed ((in, out)), Q/K/V and cross-attn K/V fused.
    wd_vals = {
        "e_wqkv": nrm((D_MODEL, 3 * D_MODEL)),
        "e_wo":   nrm((D_MODEL, D_MODEL)),
        "e_l1":   nrm((D_MODEL, FF)),
        "d_wqkv": nrm((D_MODEL, 3 * D_MODEL)),
        "d_swo":  nrm((D_MODEL, D_MODEL)),
        "d_wq":   nrm((D_MODEL, D_MODEL)),
        "d_wkv":  nrm((D_MODEL, 2 * D_MODEL)),
        "d_cwo":  nrm((D_MODEL, D_MODEL)),
        "d_l1":   nrm((D_MODEL, FF)),
    }
    fc_w = nrm((tgt_vocab, D_MODEL))
    wd_vals["fc_w"] = (jnp.zeros((D_MODEL, V_PAD), jnp.float32)
                       .at[:, :tgt_vocab].set(fc_w.T))

    wf_vals = {"e_l2": nrm((FF, D_MODEL)), "d_l2": nrm((FF, D_MODEL))}

    ones = jnp.ones((D_MODEL,), jnp.float32)
    zeros = jnp.zeros((D_MODEL,), jnp.float32)
    vec_vals = {
        "e_bq": nrm((D_MODEL,)), "e_bk": nrm((D_MODEL,)), "e_bv": nrm((D_MODEL,)),
        "e_bo": nrm((D_MODEL,)),
        "e_n1w": ones, "e_n1b": zeros,
        "e_b1": nrm((FF,)), "e_b2": nrm((D_MODEL,)),
        "e_n2w": ones, "e_n2b": zeros,
        "e_fnw": ones, "e_fnb": zeros,
        "d_bq": nrm((D_MODEL,)), "d_bk": nrm((D_MODEL,)), "d_bv": nrm((D_MODEL,)),
        "d_sbo": nrm((D_MODEL,)),
        "d_n1w": ones, "d_n1b": zeros,
        "d_cbq": nrm((D_MODEL,)), "d_cbk": nrm((D_MODEL,)), "d_cbv": nrm((D_MODEL,)),
        "d_cbo": nrm((D_MODEL,)),
        "d_n2w": ones, "d_n2b": zeros,
        "d_b1": nrm((FF,)), "d_b2": nrm((D_MODEL,)),
        "d_n3w": ones, "d_n3b": zeros,
        "d_fnw": ones, "d_fnb": zeros,
    }
    fc_b = nrm((tgt_vocab,))
    vec_vals["fc_b"] = jnp.zeros((V_PAD,), jnp.float32).at[:tgt_vocab].set(fc_b)

    # Fused src+tgt embedding table, bf16 MXU operand.
    emb_tab = jnp.concatenate(
        [nrm((src_vocab, D_MODEL), 1.0), nrm((tgt_vocab, D_MODEL), 1.0)],
        axis=0).astype(jnp.bfloat16)

    return {
        "emb_tab": emb_tab,
        "pe": make_positional_encoding(5000, D_MODEL),
        "vec_slab": _pack_vec_slab(vec_vals),
        "wd_slab": _pack_col_slab(wd_vals, _WD_LAYOUT, _WD_OFF, _WD_COLS, D_MODEL),
        "wf_slab": _pack_col_slab(wf_vals, _WF_LAYOUT, _WF_OFF, _WF_COLS, FF),
    }


if __name__ == "__main__":
    SRC_VOCAB, TGT_VOCAB = 32, 32
    S, T, B = 8, 8, 2

    key = jax.random.PRNGKey(0)
    pkey, skey, tkey = jax.random.split(key, 3)
    params = init_params(pkey, SRC_VOCAB, TGT_VOCAB)

    src = jax.random.randint(skey, (S, B), 0, SRC_VOCAB, dtype=jnp.int32)
    tgt = jax.random.randint(tkey, (T, B), 0, TGT_VOCAB, dtype=jnp.int32)

    fwd = jax.jit(functools.partial(transformer_forward,
                                    src_vocab=SRC_VOCAB, tgt_vocab=TGT_VOCAB))
    logits = fwd(params, src, tgt)
    jax.block_until_ready(logits)
    assert logits.shape == (T, B, TGT_VOCAB) and logits.dtype == jnp.float32
    assert bool(jnp.all(jnp.isfinite(logits)))
    print("KERNEL_OK")
</pallas_src>

<mosaic_0001>
module attributes {stable_mosaic.version = 11 : i64} {
  func.func @_fused_transformer_kernel(%arg0: memref<32x1xi32, #tpu.memory_space<vmem>>, %arg1: memref<64x64xbf16, #tpu.memory_space<vmem>>, %arg2: memref<8x64xf32, #tpu.memory_space<vmem>>, %arg3: memref<31x128xf32, #tpu.memory_space<vmem>>, %arg4: memref<64x1536xbf16, #tpu.memory_space<vmem>>, %arg5: memref<128x256xbf16, #tpu.memory_space<vmem>>, %arg6: memref<16x128xf32, #tpu.memory_space<vmem>>) attributes {dimension_semantics = [], scalar_prefetch = 0 : i64, scratch_operands = 0 : i64, tpu.core_type = #tpu.core_type<tc>} {
    %c0 = arith.constant 0 : index
    %c0_0 = arith.constant 0 : index
    %0 = vector.load %arg0[%c0, %c0_0] : memref<32x1xi32, #tpu.memory_space<vmem>>, vector<32x1xi32>
    %1 = tpu.iota {dimensions = array<i32: 1>} : vector<32x64xi32>
    %2 = vector.broadcast %0 : vector<32x1xi32> to vector<32x64xi32>
    %3 = arith.cmpi eq, %1, %2 : vector<32x64xi32>
    %cst = arith.constant 1.000000e+00 : f32
    %cst_1 = arith.constant 0.000000e+00 : f32
    %4 = vector.broadcast %cst : f32 to vector<32x64xf32>
    %5 = vector.broadcast %cst_1 : f32 to vector<32x64xf32>
    %6 = arith.select %3, %4, %5 : vector<32x64xi1>, vector<32x64xf32>
    %c0_2 = arith.constant 0 : index
    %c0_3 = arith.constant 0 : index
    %7 = vector.load %arg1[%c0_2, %c0_3] : memref<64x64xbf16, #tpu.memory_space<vmem>>, vector<64x64xbf16>
    %8 = arith.truncf %6 : vector<32x64xf32> to vector<32x64xbf16>
    %cst_4 = arith.constant dense<0.000000e+00> : vector<32x64xf32>
    %9 = tpu.matmul %8, %7, %cst_4 {dimension_numbers = #tpu.dot_dimension_numbers<[1], [0], [0], [1], [0, 0, 1, 1], [], []>} : vector<32x64xbf16>, vector<64x64xbf16>, vector<32x64xf32> -> vector<32x64xf32>
    %cst_5 = arith.constant 8.000000e+00 : f32
    %10 = vector.broadcast %cst_5 : f32 to vector<32x64xf32>
    %11 = arith.mulf %9, %10 : vector<32x64xf32>
    %c0_6 = arith.constant 0 : index
    %c0_7 = arith.constant 0 : index
    %12 = vector.load %arg2[%c0_6, %c0_7] : memref<8x64xf32, #tpu.memory_space<vmem>>, vector<8x64xf32>
    %13 = tpu.concatenate %12, %12 in 0 : vector<8x64xf32>, vector<8x64xf32> -> vector<16x64xf32>
    %c0_8 = arith.constant 0 : index
    %c0_9 = arith.constant 0 : index
    %14 = vector.load %arg2[%c0_8, %c0_9] : memref<8x64xf32, #tpu.memory_space<vmem>>, vector<8x64xf32>
    %15 = tpu.concatenate %14, %14 in 0 : vector<8x64xf32>, vector<8x64xf32> -> vector<16x64xf32>
    %16 = vector.extract_strided_slice %11 {offsets = [0, 0], sizes = [16, 64], strides = [1, 1]} : vector<32x64xf32> to vector<16x64xf32>
    %17 = arith.addf %16, %13 : vector<16x64xf32>
    %18 = vector.extract_strided_slice %11 {offsets = [16, 0], sizes = [16, 64], strides = [1, 1]} : vector<32x64xf32> to vector<16x64xf32>
    %19 = arith.addf %18, %15 : vector<16x64xf32>
    %c0_10 = arith.constant 0 : index
    %c0_11 = arith.constant 0 : index
    %20 = vector.load %arg4[%c0_10, %c0_11] : memref<64x1536xbf16, #tpu.memory_space<vmem>>, vector<64x192xbf16>
    %21 = arith.truncf %17 : vector<16x64xf32> to vector<16x64xbf16>
    %cst_12 = arith.constant dense<0.000000e+00> : vector<16x192xf32>
    %22 = tpu.matmul %21, %20, %cst_12 {dimension_numbers = #tpu.dot_dimension_numbers<[1], [0], [0], [1], [0, 0, 1, 1], [], []>} : vector<16x64xbf16>, vector<64x192xbf16>, vector<16x192xf32> -> vector<16x192xf32>
    %23 = vector.extract_strided_slice %22 {offsets = [0, 0], sizes = [16, 64], strides = [1, 1]} : vector<16x192xf32> to vector<16x64xf32>
    %c0_13 = arith.constant 0 : index
    %c0_14 = arith.constant 0 : index
    %24 = vector.load %arg3[%c0_13, %c0_14] : memref<31x128xf32, #tpu.memory_space<vmem>>, vector<1x64xf32>
    %25 = vector.broadcast %24 : vector<1x64xf32> to vector<16x64xf32>
    %26 = arith.addf %23, %25 : vector<16x64xf32>
    %27 = vector.extract_strided_slice %22 {offsets = [0, 64], sizes = [16, 64], strides = [1, 1]} : vector<16x192xf32> to vector<16x64xf32>
    %c1 = arith.constant 1 : index
    %c0_15 = arith.constant 0 : index
    %28 = vector.load %arg3[%c1, %c0_15] : memref<31x128xf32, #tpu.memory_space<vmem>>, vector<1x64xf32>
    %29 = vector.broadcast %28 : vector<1x64xf32> to vector<16x64xf32>
    %30 = arith.addf %27, %29 : vector<16x64xf32>
    %31 = vector.extract_strided_slice %22 {offsets = [0, 128], sizes = [16, 64], strides = [1, 1]} : vector<16x192xf32> to vector<16x64xf32>
    %c2 = arith.constant 2 : index
    %c0_16 = arith.constant 0 : index
    %32 = vector.load %arg3[%c2, %c0_16] : memref<31x128xf32, #tpu.memory_space<vmem>>, vector<1x64xf32>
    %33 = vector.broadcast %32 : vector<1x64xf32> to vector<16x64xf32>
    %34 = arith.addf %31, %33 : vector<16x64xf32>
    %c0_17 = arith.constant 0 : index
    %c256 = arith.constant 256 : index
    %35 = vector.load %arg4[%c0_17, %c256] : memref<64x1536xbf16, #tpu.memory_space<vmem>>, vector<64x64xbf16>
    %c3 = arith.constant 3 : index
    %c0_18 = arith.constant 0 : index
    %36 = vector.load %arg3[%c3, %c0_18] : memref<31x128xf32, #tpu.memory_space<vmem>>, vector<1x64xf32>
    %37 = vector.extract_strided_slice %26 {offsets = [0, 0], sizes = [8, 32], strides = [1, 1]} : vector<16x64xf32> to vector<8x32xf32>
    %38 = vector.extract_strided_slice %30 {offsets = [0, 0], sizes = [8, 32], strides = [1, 1]} : vector<16x64xf32> to vector<8x32xf32>
    %39 = arith.truncf %37 : vector<8x32xf32> to vector<8x32xbf16>
    %40 = arith.truncf %38 : vector<8x32xf32> to vector<8x32xbf16>
    %cst_19 = arith.constant dense<0.000000e+00> : vector<8x8xf32>
    %41 = tpu.matmul %39, %40, %cst_19 {dimension_numbers = #tpu.dot_dimension_numbers<[1], [1], [0], [0], [0, 0, 1, 0], [], []>} : vector<8x32xbf16>, vector<8x32xbf16>, vector<8x8xf32> -> vector<8x8xf32>
    %42 = vector.extract_strided_slice %26 {offsets = [0, 32], sizes = [8, 32], strides = [1, 1]} : vector<16x64xf32> to vector<8x32xf32>
    %43 = vector.extract_strided_slice %30 {offsets = [0, 32], sizes = [8, 32], strides = [1, 1]} : vector<16x64xf32> to vector<8x32xf32>
    %44 = arith.truncf %42 : vector<8x32xf32> to vector<8x32xbf16>
    %45 = arith.truncf %43 : vector<8x32xf32> to vector<8x32xbf16>
    %cst_20 = arith.constant dense<0.000000e+00> : vector<8x8xf32>
    %46 = tpu.matmul %44, %45, %cst_20 {dimension_numbers = #tpu.dot_dimension_numbers<[1], [1], [0], [0], [0, 0, 1, 0], [], []>} : vector<8x32xbf16>, vector<8x32xbf16>, vector<8x8xf32> -> vector<8x8xf32>
    %47 = vector.extract_strided_slice %26 {offsets = [8, 0], sizes = [8, 32], strides = [1, 1]} : vector<16x64xf32> to vector<8x32xf32>
    %48 = vector.extract_strided_slice %30 {offsets = [8, 0], sizes = [8, 32], strides = [1, 1]} : vector<16x64xf32> to vector<8x32xf32>
    %49 = arith.truncf %47 : vector<8x32xf32> to vector<8x32xbf16>
    %50 = arith.truncf %48 : vector<8x32xf32> to vector<8x32xbf16>
    %cst_21 = arith.constant dense<0.000000e+00> : vector<8x8xf32>
    %51 = tpu.matmul %49, %50, %cst_21 {dimension_numbers = #tpu.dot_dimension_numbers<[1], [1], [0], [0], [0, 0, 1, 0], [], []>} : vector<8x32xbf16>, vector<8x32xbf16>, vector<8x8xf32> -> vector<8x8xf32>
    %52 = vector.extract_strided_slice %26 {offsets = [8, 32], sizes = [8, 32], strides = [1, 1]} : vector<16x64xf32> to vector<8x32xf32>
    %53 = vector.extract_strided_slice %30 {offsets = [8, 32], sizes = [8, 32], strides = [1, 1]} : vector<16x64xf32> to vector<8x32xf32>
    %54 = arith.truncf %52 : vector<8x32xf32> to vector<8x32xbf16>
    %55 = arith.truncf %53 : vector<8x32xf32> to vector<8x32xbf16>
    %cst_22 = arith.constant dense<0.000000e+00> : vector<8x8xf32>
    %56 = tpu.matmul %54, %55, %cst_22 {dimension_numbers = #tpu.dot_dimension_numbers<[1], [1], [0], [0], [0, 0, 1, 0], [], []>} : vector<8x32xbf16>, vector<8x32xbf16>, vector<8x8xf32> -> vector<8x8xf32>
    %57 = tpu.concatenate %41, %46, %51, %56 in 0 : vector<8x8xf32>, vector<8x8xf32>, vector<8x8xf32>, vector<8x8xf32> -> vector<32x8xf32>
    %cst_23 = arith.constant 0.176776692 : f32
    %58 = vector.broadcast %cst_23 : f32 to vector<32x8xf32>
    %59 = arith.mulf %57, %58 : vector<32x8xf32>
    %cst_24 = arith.constant dense<0xFF800000> : vector<32xf32>
    %60 = vector.multi_reduction <maximumf>, %59, %cst_24 [1] : vector<32x8xf32> to vector<32xf32>
    %61 = vector.shape_cast %60 : vector<32xf32> to vector<32x1xf32>
    %62 = vector.broadcast %61 : vector<32x1xf32> to vector<32x8xf32>
    %63 = arith.subf %59, %62 : vector<32x8xf32>
    %64 = math.exp %63 : vector<32x8xf32>
    %cst_25 = arith.constant dense<0.000000e+00> : vector<32xf32>
    %65 = vector.multi_reduction <add>, %64, %cst_25 [1] : vector<32x8xf32> to vector<32xf32>
    %66 = vector.shape_cast %65 : vector<32xf32> to vector<32x1xf32>
    %67 = tpu.reciprocal %66 {approx = true} : vector<32x1xf32> -> vector<32x1xf32>
    %68 = vector.broadcast %67 : vector<32x1xf32> to vector<32x8xf32>
    %69 = arith.mulf %64, %68 : vector<32x8xf32>
    %70 = vector.extract_strided_slice %69 {offsets = [0, 0], sizes = [8, 8], strides = [1, 1]} : vector<32x8xf32> to vector<8x8xf32>
    %71 = vector.extract_strided_slice %34 {offsets = [0, 0], sizes = [8, 32], strides = [1, 1]} : vector<16x64xf32> to vector<8x32xf32>
    %72 = arith.truncf %70 : vector<8x8xf32> to vector<8x8xbf16>
    %73 = arith.truncf %71 : vector<8x32xf32> to vector<8x32xbf16>
    %cst_26 = arith.constant dense<0.000000e+00> : vector<8x32xf32>
    %74 = tpu.matmul %72, %73, %cst_26 {dimension_numbers = #tpu.dot_dimension_numbers<[1], [0], [0], [1], [0, 0, 1, 1], [], []>} : vector<8x8xbf16>, vector<8x32xbf16>, vector<8x32xf32> -> vector<8x32xf32>
    %75 = vector.extract_strided_slice %35 {offsets = [0, 0], sizes = [32, 64], strides = [1, 1]} : vector<64x64xbf16> to vector<32x64xbf16>
    %76 = arith.truncf %74 : vector<8x32xf32> to vector<8x32xbf16>
    %cst_27 = arith.constant dense<0.000000e+00> : vector<8x64xf32>
    %77 = tpu.matmul %76, %75, %cst_27 {dimension_numbers = #tpu.dot_dimension_numbers<[1], [0], [0], [1], [0, 0, 1, 1], [], []>} : vector<8x32xbf16>, vector<32x64xbf16>, vector<8x64xf32> -> vector<8x64xf32>
    %78 = vector.extract_strided_slice %69 {offsets = [8, 0], sizes = [8, 8], strides = [1, 1]} : vector<32x8xf32> to vector<8x8xf32>
    %79 = vector.extract_strided_slice %34 {offsets = [0, 32], sizes = [8, 32], strides = [1, 1]} : vector<16x64xf32> to vector<8x32xf32>
    %80 = arith.truncf %78 : vector<8x8xf32> to vector<8x8xbf16>
    %81 = arith.truncf %79 : vector<8x32xf32> to vector<8x32xbf16>
    %cst_28 = arith.constant dense<0.000000e+00> : vector<8x32xf32>
    %82 = tpu.matmul %80, %81, %cst_28 {dimension_numbers = #tpu.dot_dimension_numbers<[1], [0], [0], [1], [0, 0, 1, 1], [], []>} : vector<8x8xbf16>, vector<8x32xbf16>, vector<8x32xf32> -> vector<8x32xf32>
    %83 = vector.extract_strided_slice %35 {offsets = [32, 0], sizes = [32, 64], strides = [1, 1]} : vector<64x64xbf16> to vector<32x64xbf16>
    %84 = arith.truncf %82 : vector<8x32xf32> to vector<8x32xbf16>
    %cst_29 = arith.constant dense<0.000000e+00> : vector<8x64xf32>
    %85 = tpu.matmul %84, %83, %cst_29 {dimension_numbers = #tpu.dot_dimension_numbers<[1], [0], [0], [1], [0, 0, 1, 1], [], []>} : vector<8x32xbf16>, vector<32x64xbf16>, vector<8x64xf32> -> vector<8x64xf32>
    %86 = arith.addf %77, %85 : vector<8x64xf32>
    %87 = vector.extract_strided_slice %69 {offsets = [16, 0], sizes = [8, 8], strides = [1, 1]} : vector<32x8xf32> to vector<8x8xf32>
    %88 = vector.extract_strided_slice %34 {offsets = [8, 0], sizes = [8, 32], strides = [1, 1]} : vector<16x64xf32> to vector<8x32xf32>
    %89 = arith.truncf %87 : vector<8x8xf32> to vector<8x8xbf16>
    %90 = arith.truncf %88 : vector<8x32xf32> to vector<8x32xbf16>
    %cst_30 = arith.constant dense<0.000000e+00> : vector<8x32xf32>
    %91 = tpu.matmul %89, %90, %cst_30 {dimension_numbers = #tpu.dot_dimension_numbers<[1], [0], [0], [1], [0, 0, 1, 1], [], []>} : vector<8x8xbf16>, vector<8x32xbf16>, vector<8x32xf32> -> vector<8x32xf32>
    %92 = vector.extract_strided_slice %35 {offsets = [0, 0], sizes = [32, 64], strides = [1, 1]} : vector<64x64xbf16> to vector<32x64xbf16>
    %93 = arith.truncf %91 : vector<8x32xf32> to vector<8x32xbf16>
    %cst_31 = arith.constant dense<0.000000e+00> : vector<8x64xf32>
    %94 = tpu.matmul %93, %92, %cst_31 {dimension_numbers = #tpu.dot_dimension_numbers<[1], [0], [0], [1], [0, 0, 1, 1], [], []>} : vector<8x32xbf16>, vector<32x64xbf16>, vector<8x64xf32> -> vector<8x64xf32>
    %95 = vector.extract_strided_slice %69 {offsets = [24, 0], sizes = [8, 8], strides = [1, 1]} : vector<32x8xf32> to vector<8x8xf32>
    %96 = vector.extract_strided_slice %34 {offsets = [8, 32], sizes = [8, 32], strides = [1, 1]} : vector<16x64xf32> to vector<8x32xf32>
    %97 = arith.truncf %95 : vector<8x8xf32> to vector<8x8xbf16>
    %98 = arith.truncf %96 : vector<8x32xf32> to vector<8x32xbf16>
    %cst_32 = arith.constant dense<0.000000e+00> : vector<8x32xf32>
    %99 = tpu.matmul %97, %98, %cst_32 {dimension_numbers = #tpu.dot_dimension_numbers<[1], [0], [0], [1], [0, 0, 1, 1], [], []>} : vector<8x8xbf16>, vector<8x32xbf16>, vector<8x32xf32> -> vector<8x32xf32>
    %100 = vector.extract_strided_slice %35 {offsets = [32, 0], sizes = [32, 64], strides = [1, 1]} : vector<64x64xbf16> to vector<32x64xbf16>
    %101 = arith.truncf %99 : vector<8x32xf32> to vector<8x32xbf16>
    %cst_33 = arith.constant dense<0.000000e+00> : vector<8x64xf32>
    %102 = tpu.matmul %101, %100, %cst_33 {dimension_numbers = #tpu.dot_dimension_numbers<[1], [0], [0], [1], [0, 0, 1, 1], [], []>} : vector<8x32xbf16>, vector<32x64xbf16>, vector<8x64xf32> -> vector<8x64xf32>
    %103 = arith.addf %94, %102 : vector<8x64xf32>
    %104 = tpu.concatenate %86, %103 in 0 : vector<8x64xf32>, vector<8x64xf32> -> vector<16x64xf32>
    %105 = vector.broadcast %36 : vector<1x64xf32> to vector<16x64xf32>
    %106 = arith.addf %104, %105 : vector<16x64xf32>
    %107 = arith.addf %17, %106 : vector<16x64xf32>
    %cst_34 = arith.constant dense<0.000000e+00> : vector<16xf32>
    %108 = vector.multi_reduction <add>, %107, %cst_34 [1] : vector<16x64xf32> to vector<16xf32>
    %109 = vector.shape_cast %108 : vector<16xf32> to vector<16x1xf32>
    %cst_35 = arith.constant 6.400000e+01 : f32
    %110 = vector.broadcast %cst_35 : f32 to vector<16x1xf32>
    %111 = arith.divf %109, %110 : vector<16x1xf32>
    %112 = vector.broadcast %111 : vector<16x1xf32> to vector<16x64xf32>
    %113 = arith.subf %107, %112 : vector<16x64xf32>
    %114 = arith.mulf %113, %113 : vector<16x64xf32>
    %cst_36 = arith.constant dense<0.000000e+00> : vector<16xf32>
    %115 = vector.multi_reduction <add>, %114, %cst_36 [1] : vector<16x64xf32> to vector<16xf32>
    %116 = vector.shape_cast %115 : vector<16xf32> to vector<16x1xf32>
    %cst_37 = arith.constant 6.400000e+01 : f32
    %117 = vector.broadcast %cst_37 : f32 to vector<16x1xf32>
    %118 = arith.divf %116, %117 : vector<16x1xf32>
    %cst_38 = arith.constant 9.99999974E-6 : f32
    %119 = vector.broadcast %cst_38 : f32 to vector<16x1xf32>
    %120 = arith.addf %118, %119 : vector<16x1xf32>
    %121 = math.rsqrt %120 : vector<16x1xf32>
    %122 = vector.broadcast %121 : vector<16x1xf32> to vector<16x64xf32>
    %123 = arith.mulf %113, %122 : vector<16x64xf32>
    %c4 = arith.constant 4 : index
    %c0_39 = arith.constant 0 : index
    %124 = vector.load %arg3[%c4, %c0_39] : memref<31x128xf32, #tpu.memory_space<vmem>>, vector<1x64xf32>
    %125 = vector.broadcast %124 : vector<1x64xf32> to vector<16x64xf32>
    %126 = arith.mulf %123, %125 : vector<16x64xf32>
    %c5 = arith.constant 5 : index
    %c0_40 = arith.constant 0 : index
    %127 = vector.load %arg3[%c5, %c0_40] : memref<31x128xf32, #tpu.memory_space<vmem>>, vector<1x64xf32>
    %128 = vector.broadcast %127 : vector<1x64xf32> to vector<16x64xf32>
    %129 = arith.addf %126, %128 : vector<16x64xf32>
    %c0_41 = arith.constant 0 : index
    %c384 = arith.constant 384 : index
    %130 = vector.load %arg4[%c0_41, %c384] : memref<64x1536xbf16, #tpu.memory_space<vmem>>, vector<64x128xbf16>
    %c6 = arith.constant 6 : index
    %c0_42 = arith.constant 0 : index
    %131 = vector.load %arg3[%c6, %c0_42] : memref<31x128xf32, #tpu.memory_space<vmem>>, vector<1x128xf32>
    %c0_43 = arith.constant 0 : index
    %c0_44 = arith.constant 0 : index
    %132 = vector.load %arg5[%c0_43, %c0_44] : memref<128x256xbf16, #tpu.memory_space<vmem>>, vector<128x64xbf16>
    %c7 = arith.constant 7 : index
    %c0_45 = arith.constant 0 : index
    %133 = vector.load %arg3[%c7, %c0_45] : memref<31x128xf32, #tpu.memory_space<vmem>>, vector<1x64xf32>
    %134 = arith.truncf %129 : vector<16x64xf32> to vector<16x64xbf16>
    %cst_46 = arith.constant dense<0.000000e+00> : vector<16x128xf32>
    %135 = tpu.matmul %134, %130, %cst_46 {dimension_numbers = #tpu.dot_dimension_numbers<[1], [0], [0], [1], [0, 0, 1, 1], [], []>} : vector<16x64xbf16>, vector<64x128xbf16>, vector<16x128xf32> -> vector<16x128xf32>
    %136 = vector.broadcast %131 : vector<1x128xf32> to vector<16x128xf32>
    %137 = arith.addf %135, %136 : vector<16x128xf32>
    %cst_47 = arith.constant 0.000000e+00 : f32
    %138 = vector.broadcast %cst_47 : f32 to vector<16x128xf32>
    %139 = arith.maximumf %137, %138 : vector<16x128xf32>
    %140 = arith.truncf %139 : vector<16x128xf32> to vector<16x128xbf16>
    %cst_48 = arith.constant dense<0.000000e+00> : vector<16x64xf32>
    %141 = tpu.matmul %140, %132, %cst_48 {dimension_numbers = #tpu.dot_dimension_numbers<[1], [0], [0], [1], [0, 0, 1, 1], [], []>} : vector<16x128xbf16>, vector<128x64xbf16>, vector<16x64xf32> -> vector<16x64xf32>
    %142 = vector.broadcast %133 : vector<1x64xf32> to vector<16x64xf32>
    %143 = arith.addf %141, %142 : vector<16x64xf32>
    %144 = arith.addf %129, %143 : vector<16x64xf32>
    %cst_49 = arith.constant dense<0.000000e+00> : vector<16xf32>
    %145 = vector.multi_reduction <add>, %144, %cst_49 [1] : vector<16x64xf32> to vector<16xf32>
    %146 = vector.shape_cast %145 : vector<16xf32> to vector<16x1xf32>
    %cst_50 = arith.constant 6.400000e+01 : f32
    %147 = vector.broadcast %cst_50 : f32 to vector<16x1xf32>
    %148 = arith.divf %146, %147 : vector<16x1xf32>
    %149 = vector.broadcast %148 : vector<16x1xf32> to vector<16x64xf32>
    %150 = arith.subf %144, %149 : vector<16x64xf32>
    %151 = arith.mulf %150, %150 : vector<16x64xf32>
    %cst_51 = arith.constant dense<0.000000e+00> : vector<16xf32>
    %152 = vector.multi_reduction <add>, %151, %cst_51 [1] : vector<16x64xf32> to vector<16xf32>
    %153 = vector.shape_cast %152 : vector<16xf32> to vector<16x1xf32>
    %cst_52 = arith.constant 6.400000e+01 : f32
    %154 = vector.broadcast %cst_52 : f32 to vector<16x1xf32>
    %155 = arith.divf %153, %154 : vector<16x1xf32>
    %cst_53 = arith.constant 9.99999974E-6 : f32
    %156 = vector.broadcast %cst_53 : f32 to vector<16x1xf32>
    %157 = arith.addf %155, %156 : vector<16x1xf32>
    %158 = math.rsqrt %157 : vector<16x1xf32>
    %159 = vector.broadcast %158 : vector<16x1xf32> to vector<16x64xf32>
    %160 = arith.mulf %150, %159 : vector<16x64xf32>
    %c8 = arith.constant 8 : index
    %c0_54 = arith.constant 0 : index
    %161 = vector.load %arg3[%c8, %c0_54] : memref<31x128xf32, #tpu.memory_space<vmem>>, vector<1x64xf32>
    %162 = vector.broadcast %161 : vector<1x64xf32> to vector<16x64xf32>
    %163 = arith.mulf %160, %162 : vector<16x64xf32>
    %c9 = arith.constant 9 : index
    %c0_55 = arith.constant 0 : index
    %164 = vector.load %arg3[%c9, %c0_55] : memref<31x128xf32, #tpu.memory_space<vmem>>, vector<1x64xf32>
    %165 = vector.broadcast %164 : vector<1x64xf32> to vector<16x64xf32>
    %166 = arith.addf %163, %165 : vector<16x64xf32>
    %cst_56 = arith.constant dense<0.000000e+00> : vector<16xf32>
    %167 = vector.multi_reduction <add>, %166, %cst_56 [1] : vector<16x64xf32> to vector<16xf32>
    %168 = vector.shape_cast %167 : vector<16xf32> to vector<16x1xf32>
    %cst_57 = arith.constant 6.400000e+01 : f32
    %169 = vector.broadcast %cst_57 : f32 to vector<16x1xf32>
    %170 = arith.divf %168, %169 : vector<16x1xf32>
    %171 = vector.broadcast %170 : vector<16x1xf32> to vector<16x64xf32>
    %172 = arith.subf %166, %171 : vector<16x64xf32>
    %173 = arith.mulf %172, %172 : vector<16x64xf32>
    %cst_58 = arith.constant dense<0.000000e+00> : vector<16xf32>
    %174 = vector.multi_reduction <add>, %173, %cst_58 [1] : vector<16x64xf32> to vector<16xf32>
    %175 = vector.shape_cast %174 : vector<16xf32> to vector<16x1xf32>
    %cst_59 = arith.constant 6.400000e+01 : f32
    %176 = vector.broadcast %cst_59 : f32 to vector<16x1xf32>
    %177 = arith.divf %175, %176 : vector<16x1xf32>
    %cst_60 = arith.constant 9.99999974E-6 : f32
    %178 = vector.broadcast %cst_60 : f32 to vector<16x1xf32>
    %179 = arith.addf %177, %178 : vector<16x1xf32>
    %180 = math.rsqrt %179 : vector<16x1xf32>
    %181 = vector.broadcast %180 : vector<16x1xf32> to vector<16x64xf32>
    %182 = arith.mulf %172, %181 : vector<16x64xf32>
    %c10 = arith.constant 10 : index
    %c0_61 = arith.constant 0 : index
    %183 = vector.load %arg3[%c10, %c0_61] : memref<31x128xf32, #tpu.memory_space<vmem>>, vector<1x64xf32>
    %184 = vector.broadcast %183 : vector<1x64xf32> to vector<16x64xf32>
    %185 = arith.mulf %182, %184 : vector<16x64xf32>
    %c11 = arith.constant 11 : index
    %c0_62 = arith.constant 0 : index
    %186 = vector.load %arg3[%c11, %c0_62] : memref<31x128xf32, #tpu.memory_space<vmem>>, vector<1x64xf32>
    %187 = vector.broadcast %186 : vector<1x64xf32> to vector<16x64xf32>
    %188 = arith.addf %185, %187 : vector<16x64xf32>
    %c0_63 = arith.constant 0 : index
    %c512 = arith.constant 512 : index
    %189 = vector.load %arg4[%c0_63, %c512] : memref<64x1536xbf16, #tpu.memory_space<vmem>>, vector<64x192xbf16>
    %190 = arith.truncf %19 : vector<16x64xf32> to vector<16x64xbf16>
    %cst_64 = arith.constant dense<0.000000e+00> : vector<16x192xf32>
    %191 = tpu.matmul %190, %189, %cst_64 {dimension_numbers = #tpu.dot_dimension_numbers<[1], [0], [0], [1], [0, 0, 1, 1], [], []>} : vector<16x64xbf16>, vector<64x192xbf16>, vector<16x192xf32> -> vector<16x192xf32>
    %192 = vector.extract_strided_slice %191 {offsets = [0, 0], sizes = [16, 64], strides = [1, 1]} : vector<16x192xf32> to vector<16x64xf32>
    %c12 = arith.constant 12 : index
    %c0_65 = arith.constant 0 : index
    %193 = vector.load %arg3[%c12, %c0_65] : memref<31x128xf32, #tpu.memory_space<vmem>>, vector<1x64xf32>
    %194 = vector.broadcast %193 : vector<1x64xf32> to vector<16x64xf32>
    %195 = arith.addf %192, %194 : vector<16x64xf32>
    %196 = vector.extract_strided_slice %191 {offsets = [0, 64], sizes = [16, 64], strides = [1, 1]} : vector<16x192xf32> to vector<16x64xf32>
    %c13 = arith.constant 13 : index
    %c0_66 = arith.constant 0 : index
    %197 = vector.load %arg3[%c13, %c0_66] : memref<31x128xf32, #tpu.memory_space<vmem>>, vector<1x64xf32>
    %198 = vector.broadcast %197 : vector<1x64xf32> to vector<16x64xf32>
    %199 = arith.addf %196, %198 : vector<16x64xf32>
    %200 = vector.extract_strided_slice %191 {offsets = [0, 128], sizes = [16, 64], strides = [1, 1]} : vector<16x192xf32> to vector<16x64xf32>
    %c14 = arith.constant 14 : index
    %c0_67 = arith.constant 0 : index
    %201 = vector.load %arg3[%c14, %c0_67] : memref<31x128xf32, #tpu.memory_space<vmem>>, vector<1x64xf32>
    %202 = vector.broadcast %201 : vector<1x64xf32> to vector<16x64xf32>
    %203 = arith.addf %200, %202 : vector<16x64xf32>
    %c0_68 = arith.constant 0 : index
    %c768 = arith.constant 768 : index
    %204 = vector.load %arg4[%c0_68, %c768] : memref<64x1536xbf16, #tpu.memory_space<vmem>>, vector<64x64xbf16>
    %c15 = arith.constant 15 : index
    %c0_69 = arith.constant 0 : index
    %205 = vector.load %arg3[%c15, %c0_69] : memref<31x128xf32, #tpu.memory_space<vmem>>, vector<1x64xf32>
    %206 = vector.extract_strided_slice %195 {offsets = [0, 0], sizes = [8, 32], strides = [1, 1]} : vector<16x64xf32> to vector<8x32xf32>
    %207 = vector.extract_strided_slice %199 {offsets = [0, 0], sizes = [8, 32], strides = [1, 1]} : vector<16x64xf32> to vector<8x32xf32>
    %208 = arith.truncf %206 : vector<8x32xf32> to vector<8x32xbf16>
    %209 = arith.truncf %207 : vector<8x32xf32> to vector<8x32xbf16>
    %cst_70 = arith.constant dense<0.000000e+00> : vector<8x8xf32>
    %210 = tpu.matmul %208, %209, %cst_70 {dimension_numbers = #tpu.dot_dimension_numbers<[1], [1], [0], [0], [0, 0, 1, 0], [], []>} : vector<8x32xbf16>, vector<8x32xbf16>, vector<8x8xf32> -> vector<8x8xf32>
    %211 = vector.extract_strided_slice %195 {offsets = [0, 32], sizes = [8, 32], strides = [1, 1]} : vector<16x64xf32> to vector<8x32xf32>
    %212 = vector.extract_strided_slice %199 {offsets = [0, 32], sizes = [8, 32], strides = [1, 1]} : vector<16x64xf32> to vector<8x32xf32>
    %213 = arith.truncf %211 : vector<8x32xf32> to vector<8x32xbf16>
    %214 = arith.truncf %212 : vector<8x32xf32> to vector<8x32xbf16>
    %cst_71 = arith.constant dense<0.000000e+00> : vector<8x8xf32>
    %215 = tpu.matmul %213, %214, %cst_71 {dimension_numbers = #tpu.dot_dimension_numbers<[1], [1], [0], [0], [0, 0, 1, 0], [], []>} : vector<8x32xbf16>, vector<8x32xbf16>, vector<8x8xf32> -> vector<8x8xf32>
    %216 = vector.extract_strided_slice %195 {offsets = [8, 0], sizes = [8, 32], strides = [1, 1]} : vector<16x64xf32> to vector<8x32xf32>
    %217 = vector.extract_strided_slice %199 {offsets = [8, 0], sizes = [8, 32], strides = [1, 1]} : vector<16x64xf32> to vector<8x32xf32>
    %218 = arith.truncf %216 : vector<8x32xf32> to vector<8x32xbf16>
    %219 = arith.truncf %217 : vector<8x32xf32> to vector<8x32xbf16>
    %cst_72 = arith.constant dense<0.000000e+00> : vector<8x8xf32>
    %220 = tpu.matmul %218, %219, %cst_72 {dimension_numbers = #tpu.dot_dimension_numbers<[1], [1], [0], [0], [0, 0, 1, 0], [], []>} : vector<8x32xbf16>, vector<8x32xbf16>, vector<8x8xf32> -> vector<8x8xf32>
    %221 = vector.extract_strided_slice %195 {offsets = [8, 32], sizes = [8, 32], strides = [1, 1]} : vector<16x64xf32> to vector<8x32xf32>
    %222 = vector.extract_strided_slice %199 {offsets = [8, 32], sizes = [8, 32], strides = [1, 1]} : vector<16x64xf32> to vector<8x32xf32>
    %223 = arith.truncf %221 : vector<8x32xf32> to vector<8x32xbf16>
    %224 = arith.truncf %222 : vector<8x32xf32> to vector<8x32xbf16>
    %cst_73 = arith.constant dense<0.000000e+00> : vector<8x8xf32>
    %225 = tpu.matmul %223, %224, %cst_73 {dimension_numbers = #tpu.dot_dimension_numbers<[1], [1], [0], [0], [0, 0, 1, 0], [], []>} : vector<8x32xbf16>, vector<8x32xbf16>, vector<8x8xf32> -> vector<8x8xf32>
    %226 = tpu.concatenate %210, %215, %220, %225 in 0 : vector<8x8xf32>, vector<8x8xf32>, vector<8x8xf32>, vector<8x8xf32> -> vector<32x8xf32>
    %cst_74 = arith.constant 0.176776692 : f32
    %227 = vector.broadcast %cst_74 : f32 to vector<32x8xf32>
    %228 = arith.mulf %226, %227 : vector<32x8xf32>
    %cst_75 = arith.constant dense<0xFF800000> : vector<32xf32>
    %229 = vector.multi_reduction <maximumf>, %228, %cst_75 [1] : vector<32x8xf32> to vector<32xf32>
    %230 = vector.shape_cast %229 : vector<32xf32> to vector<32x1xf32>
    %231 = vector.broadcast %230 : vector<32x1xf32> to vector<32x8xf32>
    %232 = arith.subf %228, %231 : vector<32x8xf32>
    %233 = math.exp %232 : vector<32x8xf32>
    %cst_76 = arith.constant dense<0.000000e+00> : vector<32xf32>
    %234 = vector.multi_reduction <add>, %233, %cst_76 [1] : vector<32x8xf32> to vector<32xf32>
    %235 = vector.shape_cast %234 : vector<32xf32> to vector<32x1xf32>
    %236 = tpu.reciprocal %235 {approx = true} : vector<32x1xf32> -> vector<32x1xf32>
    %237 = vector.broadcast %236 : vector<32x1xf32> to vector<32x8xf32>
    %238 = arith.mulf %233, %237 : vector<32x8xf32>
    %239 = vector.extract_strided_slice %238 {offsets = [0, 0], sizes = [8, 8], strides = [1, 1]} : vector<32x8xf32> to vector<8x8xf32>
    %240 = vector.extract_strided_slice %203 {offsets = [0, 0], sizes = [8, 32], strides = [1, 1]} : vector<16x64xf32> to vector<8x32xf32>
    %241 = arith.truncf %239 : vector<8x8xf32> to vector<8x8xbf16>
    %242 = arith.truncf %240 : vector<8x32xf32> to vector<8x32xbf16>
    %cst_77 = arith.constant dense<0.000000e+00> : vector<8x32xf32>
    %243 = tpu.matmul %241, %242, %cst_77 {dimension_numbers = #tpu.dot_dimension_numbers<[1], [0], [0], [1], [0, 0, 1, 1], [], []>} : vector<8x8xbf16>, vector<8x32xbf16>, vector<8x32xf32> -> vector<8x32xf32>
    %244 = vector.extract_strided_slice %204 {offsets = [0, 0], sizes = [32, 64], strides = [1, 1]} : vector<64x64xbf16> to vector<32x64xbf16>
    %245 = arith.truncf %243 : vector<8x32xf32> to vector<8x32xbf16>
    %cst_78 = arith.constant dense<0.000000e+00> : vector<8x64xf32>
    %246 = tpu.matmul %245, %244, %cst_78 {dimension_numbers = #tpu.dot_dimension_numbers<[1], [0], [0], [1], [0, 0, 1, 1], [], []>} : vector<8x32xbf16>, vector<32x64xbf16>, vector<8x64xf32> -> vector<8x64xf32>
    %247 = vector.extract_strided_slice %238 {offsets = [8, 0], sizes = [8, 8], strides = [1, 1]} : vector<32x8xf32> to vector<8x8xf32>
    %248 = vector.extract_strided_slice %203 {offsets = [0, 32], sizes = [8, 32], strides = [1, 1]} : vector<16x64xf32> to vector<8x32xf32>
    %249 = arith.truncf %247 : vector<8x8xf32> to vector<8x8xbf16>
    %250 = arith.truncf %248 : vector<8x32xf32> to vector<8x32xbf16>
    %cst_79 = arith.constant dense<0.000000e+00> : vector<8x32xf32>
    %251 = tpu.matmul %249, %250, %cst_79 {dimension_numbers = #tpu.dot_dimension_numbers<[1], [0], [0], [1], [0, 0, 1, 1], [], []>} : vector<8x8xbf16>, vector<8x32xbf16>, vector<8x32xf32> -> vector<8x32xf32>
    %252 = vector.extract_strided_slice %204 {offsets = [32, 0], sizes = [32, 64], strides = [1, 1]} : vector<64x64xbf16> to vector<32x64xbf16>
    %253 = arith.truncf %251 : vector<8x32xf32> to vector<8x32xbf16>
    %cst_80 = arith.constant dense<0.000000e+00> : vector<8x64xf32>
    %254 = tpu.matmul %253, %252, %cst_80 {dimension_numbers = #tpu.dot_dimension_numbers<[1], [0], [0], [1], [0, 0, 1, 1], [], []>} : vector<8x32xbf16>, vector<32x64xbf16>, vector<8x64xf32> -> vector<8x64xf32>
    %255 = arith.addf %246, %254 : vector<8x64xf32>
    %256 = vector.extract_strided_slice %238 {offsets = [16, 0], sizes = [8, 8], strides = [1, 1]} : vector<32x8xf32> to vector<8x8xf32>
    %257 = vector.extract_strided_slice %203 {offsets = [8, 0], sizes = [8, 32], strides = [1, 1]} : vector<16x64xf32> to vector<8x32xf32>
    %258 = arith.truncf %256 : vector<8x8xf32> to vector<8x8xbf16>
    %259 = arith.truncf %257 : vector<8x32xf32> to vector<8x32xbf16>
    %cst_81 = arith.constant dense<0.000000e+00> : vector<8x32xf32>
    %260 = tpu.matmul %258, %259, %cst_81 {dimension_numbers = #tpu.dot_dimension_numbers<[1], [0], [0], [1], [0, 0, 1, 1], [], []>} : vector<8x8xbf16>, vector<8x32xbf16>, vector<8x32xf32> -> vector<8x32xf32>
    %261 = vector.extract_strided_slice %204 {offsets = [0, 0], sizes = [32, 64], strides = [1, 1]} : vector<64x64xbf16> to vector<32x64xbf16>
    %262 = arith.truncf %260 : vector<8x32xf32> to vector<8x32xbf16>
    %cst_82 = arith.constant dense<0.000000e+00> : vector<8x64xf32>
    %263 = tpu.matmul %262, %261, %cst_82 {dimension_numbers = #tpu.dot_dimension_numbers<[1], [0], [0], [1], [0, 0, 1, 1], [], []>} : vector<8x32xbf16>, vector<32x64xbf16>, vector<8x64xf32> -> vector<8x64xf32>
    %264 = vector.extract_strided_slice %238 {offsets = [24, 0], sizes = [8, 8], strides = [1, 1]} : vector<32x8xf32> to vector<8x8xf32>
    %265 = vector.extract_strided_slice %203 {offsets = [8, 32], sizes = [8, 32], strides = [1, 1]} : vector<16x64xf32> to vector<8x32xf32>
    %266 = arith.truncf %264 : vector<8x8xf32> to vector<8x8xbf16>
    %267 = arith.truncf %265 : vector<8x32xf32> to vector<8x32xbf16>
    %cst_83 = arith.constant dense<0.000000e+00> : vector<8x32xf32>
    %268 = tpu.matmul %266, %267, %cst_83 {dimension_numbers = #tpu.dot_dimension_numbers<[1], [0], [0], [1], [0, 0, 1, 1], [], []>} : vector<8x8xbf16>, vector<8x32xbf16>, vector<8x32xf32> -> vector<8x32xf32>
    %269 = vector.extract_strided_slice %204 {offsets = [32, 0], sizes = [32, 64], strides = [1, 1]} : vector<64x64xbf16> to vector<32x64xbf16>
    %270 = arith.truncf %268 : vector<8x32xf32> to vector<8x32xbf16>
    %cst_84 = arith.constant dense<0.000000e+00> : vector<8x64xf32>
    %271 = tpu.matmul %270, %269, %cst_84 {dimension_numbers = #tpu.dot_dimension_numbers<[1], [0], [0], [1], [0, 0, 1, 1], [], []>} : vector<8x32xbf16>, vector<32x64xbf16>, vector<8x64xf32> -> vector<8x64xf32>
    %272 = arith.addf %263, %271 : vector<8x64xf32>
    %273 = tpu.concatenate %255, %272 in 0 : vector<8x64xf32>, vector<8x64xf32> -> vector<16x64xf32>
    %274 = vector.broadcast %205 : vector<1x64xf32> to vector<16x64xf32>
    %275 = arith.addf %273, %274 : vector<16x64xf32>
    %276 = arith.addf %19, %275 : vector<16x64xf32>
    %cst_85 = arith.constant dense<0.000000e+00> : vector<16xf32>
    %277 = vector.multi_reduction <add>, %276, %cst_85 [1] : vector<16x64xf32> to vector<16xf32>
    %278 = vector.shape_cast %277 : vector<16xf32> to vector<16x1xf32>
    %cst_86 = arith.constant 6.400000e+01 : f32
    %279 = vector.broadcast %cst_86 : f32 to vector<16x1xf32>
    %280 = arith.divf %278, %279 : vector<16x1xf32>
    %281 = vector.broadcast %280 : vector<16x1xf32> to vector<16x64xf32>
    %282 = arith.subf %276, %281 : vector<16x64xf32>
    %283 = arith.mulf %282, %282 : vector<16x64xf32>
    %cst_87 = arith.constant dense<0.000000e+00> : vector<16xf32>
    %284 = vector.multi_reduction <add>, %283, %cst_87 [1] : vector<16x64xf32> to vector<16xf32>
    %285 = vector.shape_cast %284 : vector<16xf32> to vector<16x1xf32>
    %cst_88 = arith.constant 6.400000e+01 : f32
    %286 = vector.broadcast %cst_88 : f32 to vector<16x1xf32>
    %287 = arith.divf %285, %286 : vector<16x1xf32>
    %cst_89 = arith.constant 9.99999974E-6 : f32
    %288 = vector.broadcast %cst_89 : f32 to vector<16x1xf32>
    %289 = arith.addf %287, %288 : vector<16x1xf32>
    %290 = math.rsqrt %289 : vector<16x1xf32>
    %291 = vector.broadcast %290 : vector<16x1xf32> to vector<16x64xf32>
    %292 = arith.mulf %282, %291 : vector<16x64xf32>
    %c16 = arith.constant 16 : index
    %c0_90 = arith.constant 0 : index
    %293 = vector.load %arg3[%c16, %c0_90] : memref<31x128xf32, #tpu.memory_space<vmem>>, vector<1x64xf32>
    %294 = vector.broadcast %293 : vector<1x64xf32> to vector<16x64xf32>
    %295 = arith.mulf %292, %294 : vector<16x64xf32>
    %c17 = arith.constant 17 : index
    %c0_91 = arith.constant 0 : index
    %296 = vector.load %arg3[%c17, %c0_91] : memref<31x128xf32, #tpu.memory_space<vmem>>, vector<1x64xf32>
    %297 = vector.broadcast %296 : vector<1x64xf32> to vector<16x64xf32>
    %298 = arith.addf %295, %297 : vector<16x64xf32>
    %c0_92 = arith.constant 0 : index
    %c896 = arith.constant 896 : index
    %299 = vector.load %arg4[%c0_92, %c896] : memref<64x1536xbf16, #tpu.memory_space<vmem>>, vector<64x64xbf16>
    %300 = arith.truncf %298 : vector<16x64xf32> to vector<16x64xbf16>
    %cst_93 = arith.constant dense<0.000000e+00> : vector<16x64xf32>
    %301 = tpu.matmul %300, %299, %cst_93 {dimension_numbers = #tpu.dot_dimension_numbers<[1], [0], [0], [1], [0, 0, 1, 1], [], []>} : vector<16x64xbf16>, vector<64x64xbf16>, vector<16x64xf32> -> vector<16x64xf32>
    %c18 = arith.constant 18 : index
    %c0_94 = arith.constant 0 : index
    %302 = vector.load %arg3[%c18, %c0_94] : memref<31x128xf32, #tpu.memory_space<vmem>>, vector<1x64xf32>
    %303 = vector.broadcast %302 : vector<1x64xf32> to vector<16x64xf32>
    %304 = arith.addf %301, %303 : vector<16x64xf32>
    %c0_95 = arith.constant 0 : index
    %c1024 = arith.constant 1024 : index
    %305 = vector.load %arg4[%c0_95, %c1024] : memref<64x1536xbf16, #tpu.memory_space<vmem>>, vector<64x128xbf16>
    %306 = arith.truncf %188 : vector<16x64xf32> to vector<16x64xbf16>
    %cst_96 = arith.constant dense<0.000000e+00> : vector<16x128xf32>
    %307 = tpu.matmul %306, %305, %cst_96 {dimension_numbers = #tpu.dot_dimension_numbers<[1], [0], [0], [1], [0, 0, 1, 1], [], []>} : vector<16x64xbf16>, vector<64x128xbf16>, vector<16x128xf32> -> vector<16x128xf32>
    %308 = vector.extract_strided_slice %307 {offsets = [0, 0], sizes = [16, 64], strides = [1, 1]} : vector<16x128xf32> to vector<16x64xf32>
    %c19 = arith.constant 19 : index
    %c0_97 = arith.constant 0 : index
    %309 = vector.load %arg3[%c19, %c0_97] : memref<31x128xf32, #tpu.memory_space<vmem>>, vector<1x64xf32>
    %310 = vector.broadcast %309 : vector<1x64xf32> to vector<16x64xf32>
    %311 = arith.addf %308, %310 : vector<16x64xf32>
    %312 = vector.extract_strided_slice %307 {offsets = [0, 64], sizes = [16, 64], strides = [1, 1]} : vector<16x128xf32> to vector<16x64xf32>
    %c20 = arith.constant 20 : index
    %c0_98 = arith.constant 0 : index
    %313 = vector.load %arg3[%c20, %c0_98] : memref<31x128xf32, #tpu.memory_space<vmem>>, vector<1x64xf32>
    %314 = vector.broadcast %313 : vector<1x64xf32> to vector<16x64xf32>
    %315 = arith.addf %312, %314 : vector<16x64xf32>
    %c0_99 = arith.constant 0 : index
    %c1152 = arith.constant 1152 : index
    %316 = vector.load %arg4[%c0_99, %c1152] : memref<64x1536xbf16, #tpu.memory_space<vmem>>, vector<64x64xbf16>
    %c21 = arith.constant 21 : index
    %c0_100 = arith.constant 0 : index
    %317 = vector.load %arg3[%c21, %c0_100] : memref<31x128xf32, #tpu.memory_space<vmem>>, vector<1x64xf32>
    %318 = vector.extract_strided_slice %304 {offsets = [0, 0], sizes = [8, 32], strides = [1, 1]} : vector<16x64xf32> to vector<8x32xf32>
    %319 = vector.extract_strided_slice %311 {offsets = [0, 0], sizes = [8, 32], strides = [1, 1]} : vector<16x64xf32> to vector<8x32xf32>
    %320 = arith.truncf %318 : vector<8x32xf32> to vector<8x32xbf16>
    %321 = arith.truncf %319 : vector<8x32xf32> to vector<8x32xbf16>
    %cst_101 = arith.constant dense<0.000000e+00> : vector<8x8xf32>
    %322 = tpu.matmul %320, %321, %cst_101 {dimension_numbers = #tpu.dot_dimension_numbers<[1], [1], [0], [0], [0, 0, 1, 0], [], []>} : vector<8x32xbf16>, vector<8x32xbf16>, vector<8x8xf32> -> vector<8x8xf32>
    %323 = vector.extract_strided_slice %304 {offsets = [0, 32], sizes = [8, 32], strides = [1, 1]} : vector<16x64xf32> to vector<8x32xf32>
    %324 = vector.extract_strided_slice %311 {offsets = [0, 32], sizes = [8, 32], strides = [1, 1]} : vector<16x64xf32> to vector<8x32xf32>
    %325 = arith.truncf %323 : vector<8x32xf32> to vector<8x32xbf16>
    %326 = arith.truncf %324 : vector<8x32xf32> to vector<8x32xbf16>
    %cst_102 = arith.constant dense<0.000000e+00> : vector<8x8xf32>
    %327 = tpu.matmul %325, %326, %cst_102 {dimension_numbers = #tpu.dot_dimension_numbers<[1], [1], [0], [0], [0, 0, 1, 0], [], []>} : vector<8x32xbf16>, vector<8x32xbf16>, vector<8x8xf32> -> vector<8x8xf32>
    %328 = vector.extract_strided_slice %304 {offsets = [8, 0], sizes = [8, 32], strides = [1, 1]} : vector<16x64xf32> to vector<8x32xf32>
    %329 = vector.extract_strided_slice %311 {offsets = [8, 0], sizes = [8, 32], strides = [1, 1]} : vector<16x64xf32> to vector<8x32xf32>
    %330 = arith.truncf %328 : vector<8x32xf32> to vector<8x32xbf16>
    %331 = arith.truncf %329 : vector<8x32xf32> to vector<8x32xbf16>
    %cst_103 = arith.constant dense<0.000000e+00> : vector<8x8xf32>
    %332 = tpu.matmul %330, %331, %cst_103 {dimension_numbers = #tpu.dot_dimension_numbers<[1], [1], [0], [0], [0, 0, 1, 0], [], []>} : vector<8x32xbf16>, vector<8x32xbf16>, vector<8x8xf32> -> vector<8x8xf32>
    %333 = vector.extract_strided_slice %304 {offsets = [8, 32], sizes = [8, 32], strides = [1, 1]} : vector<16x64xf32> to vector<8x32xf32>
    %334 = vector.extract_strided_slice %311 {offsets = [8, 32], sizes = [8, 32], strides = [1, 1]} : vector<16x64xf32> to vector<8x32xf32>
    %335 = arith.truncf %333 : vector<8x32xf32> to vector<8x32xbf16>
    %336 = arith.truncf %334 : vector<8x32xf32> to vector<8x32xbf16>
    %cst_104 = arith.constant dense<0.000000e+00> : vector<8x8xf32>
    %337 = tpu.matmul %335, %336, %cst_104 {dimension_numbers = #tpu.dot_dimension_numbers<[1], [1], [0], [0], [0, 0, 1, 0], [], []>} : vector<8x32xbf16>, vector<8x32xbf16>, vector<8x8xf32> -> vector<8x8xf32>
    %338 = tpu.concatenate %322, %327, %332, %337 in 0 : vector<8x8xf32>, vector<8x8xf32>, vector<8x8xf32>, vector<8x8xf32> -> vector<32x8xf32>
    %cst_105 = arith.constant 0.176776692 : f32
    %339 = vector.broadcast %cst_105 : f32 to vector<32x8xf32>
    %340 = arith.mulf %338, %339 : vector<32x8xf32>
    %cst_106 = arith.constant dense<0xFF800000> : vector<32xf32>
    %341 = vector.multi_reduction <maximumf>, %340, %cst_106 [1] : vector<32x8xf32> to vector<32xf32>
    %342 = vector.shape_cast %341 : vector<32xf32> to vector<32x1xf32>
    %343 = vector.broadcast %342 : vector<32x1xf32> to vector<32x8xf32>
    %344 = arith.subf %340, %343 : vector<32x8xf32>
    %345 = math.exp %344 : vector<32x8xf32>
    %cst_107 = arith.constant dense<0.000000e+00> : vector<32xf32>
    %346 = vector.multi_reduction <add>, %345, %cst_107 [1] : vector<32x8xf32> to vector<32xf32>
    %347 = vector.shape_cast %346 : vector<32xf32> to vector<32x1xf32>
    %348 = tpu.reciprocal %347 {approx = true} : vector<32x1xf32> -> vector<32x1xf32>
    %349 = vector.broadcast %348 : vector<32x1xf32> to vector<32x8xf32>
    %350 = arith.mulf %345, %349 : vector<32x8xf32>
    %351 = vector.extract_strided_slice %350 {offsets = [0, 0], sizes = [8, 8], strides = [1, 1]} : vector<32x8xf32> to vector<8x8xf32>
    %352 = vector.extract_strided_slice %315 {offsets = [0, 0], sizes = [8, 32], strides = [1, 1]} : vector<16x64xf32> to vector<8x32xf32>
    %353 = arith.truncf %351 : vector<8x8xf32> to vector<8x8xbf16>
    %354 = arith.truncf %352 : vector<8x32xf32> to vector<8x32xbf16>
    %cst_108 = arith.constant dense<0.000000e+00> : vector<8x32xf32>
    %355 = tpu.matmul %353, %354, %cst_108 {dimension_numbers = #tpu.dot_dimension_numbers<[1], [0], [0], [1], [0, 0, 1, 1], [], []>} : vector<8x8xbf16>, vector<8x32xbf16>, vector<8x32xf32> -> vector<8x32xf32>
    %356 = vector.extract_strided_slice %316 {offsets = [0, 0], sizes = [32, 64], strides = [1, 1]} : vector<64x64xbf16> to vector<32x64xbf16>
    %357 = arith.truncf %355 : vector<8x32xf32> to vector<8x32xbf16>
    %cst_109 = arith.constant dense<0.000000e+00> : vector<8x64xf32>
    %358 = tpu.matmul %357, %356, %cst_109 {dimension_numbers = #tpu.dot_dimension_numbers<[1], [0], [0], [1], [0, 0, 1, 1], [], []>} : vector<8x32xbf16>, vector<32x64xbf16>, vector<8x64xf32> -> vector<8x64xf32>
    %359 = vector.extract_strided_slice %350 {offsets = [8, 0], sizes = [8, 8], strides = [1, 1]} : vector<32x8xf32> to vector<8x8xf32>
    %360 = vector.extract_strided_slice %315 {offsets = [0, 32], sizes = [8, 32], strides = [1, 1]} : vector<16x64xf32> to vector<8x32xf32>
    %361 = arith.truncf %359 : vector<8x8xf32> to vector<8x8xbf16>
    %362 = arith.truncf %360 : vector<8x32xf32> to vector<8x32xbf16>
    %cst_110 = arith.constant dense<0.000000e+00> : vector<8x32xf32>
    %363 = tpu.matmul %361, %362, %cst_110 {dimension_numbers = #tpu.dot_dimension_numbers<[1], [0], [0], [1], [0, 0, 1, 1], [], []>} : vector<8x8xbf16>, vector<8x32xbf16>, vector<8x32xf32> -> vector<8x32xf32>
    %364 = vector.extract_strided_slice %316 {offsets = [32, 0], sizes = [32, 64], strides = [1, 1]} : vector<64x64xbf16> to vector<32x64xbf16>
    %365 = arith.truncf %363 : vector<8x32xf32> to vector<8x32xbf16>
    %cst_111 = arith.constant dense<0.000000e+00> : vector<8x64xf32>
    %366 = tpu.matmul %365, %364, %cst_111 {dimension_numbers = #tpu.dot_dimension_numbers<[1], [0], [0], [1], [0, 0, 1, 1], [], []>} : vector<8x32xbf16>, vector<32x64xbf16>, vector<8x64xf32> -> vector<8x64xf32>
    %367 = arith.addf %358, %366 : vector<8x64xf32>
    %368 = vector.extract_strided_slice %350 {offsets = [16, 0], sizes = [8, 8], strides = [1, 1]} : vector<32x8xf32> to vector<8x8xf32>
    %369 = vector.extract_strided_slice %315 {offsets = [8, 0], sizes = [8, 32], strides = [1, 1]} : vector<16x64xf32> to vector<8x32xf32>
    %370 = arith.truncf %368 : vector<8x8xf32> to vector<8x8xbf16>
    %371 = arith.truncf %369 : vector<8x32xf32> to vector<8x32xbf16>
    %cst_112 = arith.constant dense<0.000000e+00> : vector<8x32xf32>
    %372 = tpu.matmul %370, %371, %cst_112 {dimension_numbers = #tpu.dot_dimension_numbers<[1], [0], [0], [1], [0, 0, 1, 1], [], []>} : vector<8x8xbf16>, vector<8x32xbf16>, vector<8x32xf32> -> vector<8x32xf32>
    %373 = vector.extract_strided_slice %316 {offsets = [0, 0], sizes = [32, 64], strides = [1, 1]} : vector<64x64xbf16> to vector<32x64xbf16>
    %374 = arith.truncf %372 : vector<8x32xf32> to vector<8x32xbf16>
    %cst_113 = arith.constant dense<0.000000e+00> : vector<8x64xf32>
    %375 = tpu.matmul %374, %373, %cst_113 {dimension_numbers = #tpu.dot_dimension_numbers<[1], [0], [0], [1], [0, 0, 1, 1], [], []>} : vector<8x32xbf16>, vector<32x64xbf16>, vector<8x64xf32> -> vector<8x64xf32>
    %376 = vector.extract_strided_slice %350 {offsets = [24, 0], sizes = [8, 8], strides = [1, 1]} : vector<32x8xf32> to vector<8x8xf32>
    %377 = vector.extract_strided_slice %315 {offsets = [8, 32], sizes = [8, 32], strides = [1, 1]} : vector<16x64xf32> to vector<8x32xf32>
    %378 = arith.truncf %376 : vector<8x8xf32> to vector<8x8xbf16>
    %379 = arith.truncf %377 : vector<8x32xf32> to vector<8x32xbf16>
    %cst_114 = arith.constant dense<0.000000e+00> : vector<8x32xf32>
    %380 = tpu.matmul %378, %379, %cst_114 {dimension_numbers = #tpu.dot_dimension_numbers<[1], [0], [0], [1], [0, 0, 1, 1], [], []>} : vector<8x8xbf16>, vector<8x32xbf16>, vector<8x32xf32> -> vector<8x32xf32>
    %381 = vector.extract_strided_slice %316 {offsets = [32, 0], sizes = [32, 64], strides = [1, 1]} : vector<64x64xbf16> to vector<32x64xbf16>
    %382 = arith.truncf %380 : vector<8x32xf32> to vector<8x32xbf16>
    %cst_115 = arith.constant dense<0.000000e+00> : vector<8x64xf32>
    %383 = tpu.matmul %382, %381, %cst_115 {dimension_numbers = #tpu.dot_dimension_numbers<[1], [0], [0], [1], [0, 0, 1, 1], [], []>} : vector<8x32xbf16>, vector<32x64xbf16>, vector<8x64xf32> -> vector<8x64xf32>
    %384 = arith.addf %375, %383 : vector<8x64xf32>
    %385 = tpu.concatenate %367, %384 in 0 : vector<8x64xf32>, vector<8x64xf32> -> vector<16x64xf32>
    %386 = vector.broadcast %317 : vector<1x64xf32> to vector<16x64xf32>
    %387 = arith.addf %385, %386 : vector<16x64xf32>
    %388 = arith.addf %298, %387 : vector<16x64xf32>
    %cst_116 = arith.constant dense<0.000000e+00> : vector<16xf32>
    %389 = vector.multi_reduction <add>, %388, %cst_116 [1] : vector<16x64xf32> to vector<16xf32>
    %390 = vector.shape_cast %389 : vector<16xf32> to vector<16x1xf32>
    %cst_117 = arith.constant 6.400000e+01 : f32
    %391 = vector.broadcast %cst_117 : f32 to vector<16x1xf32>
    %392 = arith.divf %390, %391 : vector<16x1xf32>
    %393 = vector.broadcast %392 : vector<16x1xf32> to vector<16x64xf32>
    %394 = arith.subf %388, %393 : vector<16x64xf32>
    %395 = arith.mulf %394, %394 : vector<16x64xf32>
    %cst_118 = arith.constant dense<0.000000e+00> : vector<16xf32>
    %396 = vector.multi_reduction <add>, %395, %cst_118 [1] : vector<16x64xf32> to vector<16xf32>
    %397 = vector.shape_cast %396 : vector<16xf32> to vector<16x1xf32>
    %cst_119 = arith.constant 6.400000e+01 : f32
    %398 = vector.broadcast %cst_119 : f32 to vector<16x1xf32>
    %399 = arith.divf %397, %398 : vector<16x1xf32>
    %cst_120 = arith.constant 9.99999974E-6 : f32
    %400 = vector.broadcast %cst_120 : f32 to vector<16x1xf32>
    %401 = arith.addf %399, %400 : vector<16x1xf32>
    %402 = math.rsqrt %401 : vector<16x1xf32>
    %403 = vector.broadcast %402 : vector<16x1xf32> to vector<16x64xf32>
    %404 = arith.mulf %394, %403 : vector<16x64xf32>
    %c22 = arith.constant 22 : index
    %c0_121 = arith.constant 0 : index
    %405 = vector.load %arg3[%c22, %c0_121] : memref<31x128xf32, #tpu.memory_space<vmem>>, vector<1x64xf32>
    %406 = vector.broadcast %405 : vector<1x64xf32> to vector<16x64xf32>
    %407 = arith.mulf %404, %406 : vector<16x64xf32>
    %c23 = arith.constant 23 : index
    %c0_122 = arith.constant 0 : index
    %408 = vector.load %arg3[%c23, %c0_122] : memref<31x128xf32, #tpu.memory_space<vmem>>, vector<1x64xf32>
    %409 = vector.broadcast %408 : vector<1x64xf32> to vector<16x64xf32>
    %410 = arith.addf %407, %409 : vector<16x64xf32>
    %c0_123 = arith.constant 0 : index
    %c1280 = arith.constant 1280 : index
    %411 = vector.load %arg4[%c0_123, %c1280] : memref<64x1536xbf16, #tpu.memory_space<vmem>>, vector<64x128xbf16>
    %c24 = arith.constant 24 : index
    %c0_124 = arith.constant 0 : index
    %412 = vector.load %arg3[%c24, %c0_124] : memref<31x128xf32, #tpu.memory_space<vmem>>, vector<1x128xf32>
    %c0_125 = arith.constant 0 : index
    %c128 = arith.constant 128 : index
    %413 = vector.load %arg5[%c0_125, %c128] : memref<128x256xbf16, #tpu.memory_space<vmem>>, vector<128x64xbf16>
    %c25 = arith.constant 25 : index
    %c0_126 = arith.constant 0 : index
    %414 = vector.load %arg3[%c25, %c0_126] : memref<31x128xf32, #tpu.memory_space<vmem>>, vector<1x64xf32>
    %415 = arith.truncf %410 : vector<16x64xf32> to vector<16x64xbf16>
    %cst_127 = arith.constant dense<0.000000e+00> : vector<16x128xf32>
    %416 = tpu.matmul %415, %411, %cst_127 {dimension_numbers = #tpu.dot_dimension_numbers<[1], [0], [0], [1], [0, 0, 1, 1], [], []>} : vector<16x64xbf16>, vector<64x128xbf16>, vector<16x128xf32> -> vector<16x128xf32>
    %417 = vector.broadcast %412 : vector<1x128xf32> to vector<16x128xf32>
    %418 = arith.addf %416, %417 : vector<16x128xf32>
    %cst_128 = arith.constant 0.000000e+00 : f32
    %419 = vector.broadcast %cst_128 : f32 to vector<16x128xf32>
    %420 = arith.maximumf %418, %419 : vector<16x128xf32>
    %421 = arith.truncf %420 : vector<16x128xf32> to vector<16x128xbf16>
    %cst_129 = arith.constant dense<0.000000e+00> : vector<16x64xf32>
    %422 = tpu.matmul %421, %413, %cst_129 {dimension_numbers = #tpu.dot_dimension_numbers<[1], [0], [0], [1], [0, 0, 1, 1], [], []>} : vector<16x128xbf16>, vector<128x64xbf16>, vector<16x64xf32> -> vector<16x64xf32>
    %423 = vector.broadcast %414 : vector<1x64xf32> to vector<16x64xf32>
    %424 = arith.addf %422, %423 : vector<16x64xf32>
    %425 = arith.addf %410, %424 : vector<16x64xf32>
    %cst_130 = arith.constant dense<0.000000e+00> : vector<16xf32>
    %426 = vector.multi_reduction <add>, %425, %cst_130 [1] : vector<16x64xf32> to vector<16xf32>
    %427 = vector.shape_cast %426 : vector<16xf32> to vector<16x1xf32>
    %cst_131 = arith.constant 6.400000e+01 : f32
    %428 = vector.broadcast %cst_131 : f32 to vector<16x1xf32>
    %429 = arith.divf %427, %428 : vector<16x1xf32>
    %430 = vector.broadcast %429 : vector<16x1xf32> to vector<16x64xf32>
    %431 = arith.subf %425, %430 : vector<16x64xf32>
    %432 = arith.mulf %431, %431 : vector<16x64xf32>
    %cst_132 = arith.constant dense<0.000000e+00> : vector<16xf32>
    %433 = vector.multi_reduction <add>, %432, %cst_132 [1] : vector<16x64xf32> to vector<16xf32>
    %434 = vector.shape_cast %433 : vector<16xf32> to vector<16x1xf32>
    %cst_133 = arith.constant 6.400000e+01 : f32
    %435 = vector.broadcast %cst_133 : f32 to vector<16x1xf32>
    %436 = arith.divf %434, %435 : vector<16x1xf32>
    %cst_134 = arith.constant 9.99999974E-6 : f32
    %437 = vector.broadcast %cst_134 : f32 to vector<16x1xf32>
    %438 = arith.addf %436, %437 : vector<16x1xf32>
    %439 = math.rsqrt %438 : vector<16x1xf32>
    %440 = vector.broadcast %439 : vector<16x1xf32> to vector<16x64xf32>
    %441 = arith.mulf %431, %440 : vector<16x64xf32>
    %c26 = arith.constant 26 : index
    %c0_135 = arith.constant 0 : index
    %442 = vector.load %arg3[%c26, %c0_135] : memref<31x128xf32, #tpu.memory_space<vmem>>, vector<1x64xf32>
    %443 = vector.broadcast %442 : vector<1x64xf32> to vector<16x64xf32>
    %444 = arith.mulf %441, %443 : vector<16x64xf32>
    %c27 = arith.constant 27 : index
    %c0_136 = arith.constant 0 : index
    %445 = vector.load %arg3[%c27, %c0_136] : memref<31x128xf32, #tpu.memory_space<vmem>>, vector<1x64xf32>
    %446 = vector.broadcast %445 : vector<1x64xf32> to vector<16x64xf32>
    %447 = arith.addf %444, %446 : vector<16x64xf32>
    %cst_137 = arith.constant dense<0.000000e+00> : vector<16xf32>
    %448 = vector.multi_reduction <add>, %447, %cst_137 [1] : vector<16x64xf32> to vector<16xf32>
    %449 = vector.shape_cast %448 : vector<16xf32> to vector<16x1xf32>
    %cst_138 = arith.constant 6.400000e+01 : f32
    %450 = vector.broadcast %cst_138 : f32 to vector<16x1xf32>
    %451 = arith.divf %449, %450 : vector<16x1xf32>
    %452 = vector.broadcast %451 : vector<16x1xf32> to vector<16x64xf32>
    %453 = arith.subf %447, %452 : vector<16x64xf32>
    %454 = arith.mulf %453, %453 : vector<16x64xf32>
    %cst_139 = arith.constant dense<0.000000e+00> : vector<16xf32>
    %455 = vector.multi_reduction <add>, %454, %cst_139 [1] : vector<16x64xf32> to vector<16xf32>
    %456 = vector.shape_cast %455 : vector<16xf32> to vector<16x1xf32>
    %cst_140 = arith.constant 6.400000e+01 : f32
    %457 = vector.broadcast %cst_140 : f32 to vector<16x1xf32>
    %458 = arith.divf %456, %457 : vector<16x1xf32>
    %cst_141 = arith.constant 9.99999974E-6 : f32
    %459 = vector.broadcast %cst_141 : f32 to vector<16x1xf32>
    %460 = arith.addf %458, %459 : vector<16x1xf32>
    %461 = math.rsqrt %460 : vector<16x1xf32>
    %462 = vector.broadcast %461 : vector<16x1xf32> to vector<16x64xf32>
    %463 = arith.mulf %453, %462 : vector<16x64xf32>
    %c28 = arith.constant 28 : index
    %c0_142 = arith.constant 0 : index
    %464 = vector.load %arg3[%c28, %c0_142] : memref<31x128xf32, #tpu.memory_space<vmem>>, vector<1x64xf32>
    %465 = vector.broadcast %464 : vector<1x64xf32> to vector<16x64xf32>
    %466 = arith.mulf %463, %465 : vector<16x64xf32>
    %c29 = arith.constant 29 : index
    %c0_143 = arith.constant 0 : index
    %467 = vector.load %arg3[%c29, %c0_143] : memref<31x128xf32, #tpu.memory_space<vmem>>, vector<1x64xf32>
    %468 = vector.broadcast %467 : vector<1x64xf32> to vector<16x64xf32>
    %469 = arith.addf %466, %468 : vector<16x64xf32>
    %c0_144 = arith.constant 0 : index
    %c1408 = arith.constant 1408 : index
    %470 = vector.load %arg4[%c0_144, %c1408] : memref<64x1536xbf16, #tpu.memory_space<vmem>>, vector<64x128xbf16>
    %471 = arith.truncf %469 : vector<16x64xf32> to vector<16x64xbf16>
    %cst_145 = arith.constant dense<0.000000e+00> : vector<16x128xf32>
    %472 = tpu.matmul %471, %470, %cst_145 {dimension_numbers = #tpu.dot_dimension_numbers<[1], [0], [0], [1], [0, 0, 1, 1], [], []>} : vector<16x64xbf16>, vector<64x128xbf16>, vector<16x128xf32> -> vector<16x128xf32>
    %c30 = arith.constant 30 : index
    %c0_146 = arith.constant 0 : index
    %473 = vector.load %arg3[%c30, %c0_146] : memref<31x128xf32, #tpu.memory_space<vmem>>, vector<1x128xf32>
    %474 = vector.broadcast %473 : vector<1x128xf32> to vector<16x128xf32>
    %475 = arith.addf %472, %474 : vector<16x128xf32>
    %c0_147 = arith.constant 0 : index
    %c0_148 = arith.constant 0 : index
    %476 = vector.load %arg6[%c0_147, %c0_148] : memref<16x128xf32, #tpu.memory_space<vmem>>, vector<16x128xf32>
    tpu.vector_store %arg6[%c0_147, %c0_148], %475 {strides = array<i32>} : memref<16x128xf32, #tpu.memory_space<vmem>>, vector<16x128xf32>,
    return
  }
}

</mosaic_0001>

<llo_original>
// kernel: transformer_forward.1
$region0: #{transformer_forward.1}
  #allocation0 [shape = 'u32[]', space=smem, size = 0x4, offset = 0x4, fixed_abs, tag = 'smem constant byte address 0x4 - core index']
  #allocation1 [shape = 'u32[144,128]{1,0:T(1,128)}', space=vmem, size = 0x12000, scoped, tag = 'internal scratch']
  %s0 = inlined_call_operand.vmem [shape: s32[32,1], index: 0, kind: input, shape index: {}]
  %s1 = inlined_call_operand.hbm [shape: bf16[64,64], index: 1, kind: input, shape index: {}]
  %s2 = inlined_call_operand.vmem [shape: f32[8,64], index: 2, kind: input, shape index: {}]
  %s3 = inlined_call_operand.hbm [shape: f32[31,128], index: 3, kind: input, shape index: {}]
  %s4 = inlined_call_operand.hbm [shape: bf16[64,1536], index: 4, kind: input, shape index: {}]
  %s5 = inlined_call_operand.hbm [shape: bf16[128,256], index: 5, kind: input, shape index: {}]
  %s6 = inlined_call_operand.vmem [shape: f32[16,128], index: 6, kind: output, shape index: {}]
  %s7 = sld [smem:[#allocation0]]
  $region50: #{transformer_forward.1} parent=0
    _
  %s9 = ssub.s32 1, %s7
  %s10 = scalar_select 0, %s9, %s7
  $region1: #{transformer_forward.1} parent=0
    #allocation2 [shape = 'u8[16384]{0}', space=vmem, size = 0x4000, scoped, tag = 'input window, operand 1, single buffered']
    #allocation3 [shape = 's32[1]{0}', space=sflag, size = 0x4, scoped, tag = 'scoped memory for transformer_forward.1']
    #allocation4 [shape = 'u8[16384]{0}', space=vmem, size = 0x4000, scoped, tag = 'input window, operand 3, single buffered']
    #allocation5 [shape = 's32[1]{0}', space=sflag, size = 0x4, scoped, tag = 'scoped memory for transformer_forward.1']
    #allocation6 [shape = 'u8[196608]{0}', space=vmem, size = 0x30000, scoped, tag = 'input window, operand 4, single buffered']
    #allocation7 [shape = 'u8[65536]{0}', space=vmem, size = 0x10000, scoped, tag = 'input window, operand 5, single buffered']
    #allocation8 [shape = 's32[1]{0}', space=sflag, size = 0x4, scoped, tag = 'scoped memory for transformer_forward.1']
    %11 = vsyncpa [#allocation3], 0
    %12 = vsyncpa [#allocation5], 0
    %13 = vsyncpa [#allocation8], 0
    // Predicated region
    $region2: #{transformer_forward.1} parent=1 // pred_check
      _
    $region3: #{transformer_forward.1} parent=1 // pred_check_branch
      %15 = sbr.rel (0) target = $region5
    $region4: #{transformer_forward.1} parent=1 // pred_region
      _
    $region5: #{transformer_forward.1} parent=1 // pred_fallthru
      _
    // Predicated region
    $region6: #{transformer_forward.1} parent=1 // pred_check
      _
    $region7: #{transformer_forward.1} parent=1 // pred_check_branch
      %17 = sbr.rel (0) target = $region9
    $region8: #{transformer_forward.1} parent=1 // pred_region
      %s19 = ssub.s32 512, 512
      %20 = vsyncadd [#allocation3], %s19
      %s21 = sshll.u32 [#allocation2], 4
      %s22 = int_to_ptr.vmem [resolvable:$true] %s21
      %27 = dma.hbm_to_vmem [thread:$0]  %s1, 512, %s22, [#allocation3], 64, 64, 4
    $region9: #{transformer_forward.1} parent=1 // pred_fallthru
      _
    // Predicated region
    $region10: #{transformer_forward.1} parent=1 // pred_check
      _
    $region11: #{transformer_forward.1} parent=1 // pred_check_branch
      %29 = sbr.rel (0) target = $region13
    $region12: #{transformer_forward.1} parent=1 // pred_region
      _
    $region13: #{transformer_forward.1} parent=1 // pred_fallthru
      _
    // Predicated region
    $region14: #{transformer_forward.1} parent=1 // pred_check
      _
    $region15: #{transformer_forward.1} parent=1 // pred_check_branch
      %31 = sbr.rel (0) target = $region17
    $region16: #{transformer_forward.1} parent=1 // pred_region
      %s33 = ssub.s32 512, 512
      %34 = vsyncadd [#allocation5], %s33
      %s35 = sshll.u32 [#allocation4], 4
      %s36 = int_to_ptr.vmem [resolvable:$true] %s35
      %41 = dma.hbm_to_vmem [thread:$0]  %s3, 512, %s36, [#allocation5], 128, 128, 8
    $region17: #{transformer_forward.1} parent=1 // pred_fallthru
      _
    // Predicated region
    $region18: #{transformer_forward.1} parent=1 // pred_check
      _
    $region19: #{transformer_forward.1} parent=1 // pred_check_branch
      %43 = sbr.rel (0) target = $region21
    $region20: #{transformer_forward.1} parent=1 // pred_region
      %s45 = ssub.s32 6144, 6144
      %46 = vsyncadd [#allocation5], %s45
      %s47 = sshll.u32 [#allocation6], 4
      %s48 = int_to_ptr.vmem [resolvable:$true] %s47
      %53 = dma.hbm_to_vmem [thread:$0]  %s4, 6144, %s48, [#allocation5], 768, 768, 48
    $region21: #{transformer_forward.1} parent=1 // pred_fallthru
      _
    // Predicated region
    $region22: #{transformer_forward.1} parent=1 // pred_check
      _
    $region23: #{transformer_forward.1} parent=1 // pred_check_branch
      %55 = sbr.rel (0) target = $region25
    $region24: #{transformer_forward.1} parent=1 // pred_region
      %s57 = ssub.s32 2048, 2048
      %58 = vsyncadd [#allocation8], %s57
      %s59 = sshll.u32 [#allocation7], 4
      %s60 = int_to_ptr.vmem [resolvable:$true] %s59
      %65 = dma.hbm_to_vmem [thread:$0]  %s5, 2048, %s60, [#allocation8], 128, 128, 8
    $region25: #{transformer_forward.1} parent=1 // pred_fallthru
      _
    // Predicated region
    $region26: #{transformer_forward.1} parent=1 // pred_check
      _
    $region27: #{transformer_forward.1} parent=1 // pred_check_branch
      %67 = sbr.rel (0) target = $region29
    $region28: #{transformer_forward.1} parent=1 // pred_region
      %68 = dma.done [#allocation3], 512
    $region29: #{transformer_forward.1} parent=1 // pred_fallthru
      _
    // Predicated region
    $region30: #{transformer_forward.1} parent=1 // pred_check
      _
    $region31: #{transformer_forward.1} parent=1 // pred_check_branch
      %70 = sbr.rel (0) target = $region33
    $region32: #{transformer_forward.1} parent=1 // pred_region
      %71 = dma.done [#allocation5], 512
    $region33: #{transformer_forward.1} parent=1 // pred_fallthru
      _
    // Predicated region
    $region34: #{transformer_forward.1} parent=1 // pred_check
      _
    $region35: #{transformer_forward.1} parent=1 // pred_check_branch
      %73 = sbr.rel (0) target = $region37
    $region36: #{transformer_forward.1} parent=1 // pred_region
      %74 = dma.done [#allocation5], 6144
    $region37: #{transformer_forward.1} parent=1 // pred_fallthru
      _
    // Predicated region
    $region38: #{transformer_forward.1} parent=1 // pred_check
      _
    $region39: #{transformer_forward.1} parent=1 // pred_check_branch
      %76 = sbr.rel (0) target = $region41
    $region40: #{transformer_forward.1} parent=1 // pred_region
      %77 = dma.done [#allocation8], 2048
    $region41: #{transformer_forward.1} parent=1 // pred_fallthru
      _
    %v79 = vld [vmem:[%s0] sm:$0xff]
    %v80 = vld [vmem:[%s0 + $0x8] sm:$0xff]
    %v81 = vld [vmem:[%s0 + $0x10] sm:$0xff]
    %v82 = vld [vmem:[%s0 + $0x18] sm:$0xff]
    %v83 = vlaneseq
    %v84 = vand.u32 %v83, 127
    %85 = vset.pattern.permute.xlu0 0
    %86 = vperm.xlu0 %85, %v79
    %v87 = vpop.permute.xlu0 %86
    %88 = vset.pattern.permute.xlu0 0
    %89 = vperm.xlu0 %88, %v80
    %v90 = vpop.permute.xlu0 %89
    %91 = vset.pattern.permute.xlu0 0
    %92 = vperm.xlu0 %91, %v81
    %v93 = vpop.permute.xlu0 %92
    %94 = vset.pattern.permute.xlu0 0
    %95 = vperm.xlu0 %94, %v82
    %v96 = vpop.permute.xlu0 %95
    %vm97 = vcmp.eq.s32.totalorder %v84, %v87
    %vm98 = vcmp.eq.s32.totalorder %v84, %v90
    %vm99 = vcmp.eq.s32.totalorder %v84, %v93
    %vm100 = vcmp.eq.s32.totalorder %v84, %v96
    %v101 = vsel %vm97, 1.0, 0.0
    %v102 = vsel %vm98, 1.0, 0.0
    %v103 = vsel %vm99, 1.0, 0.0
    %v104 = vsel %vm100, 1.0, 0.0
    %v105 = vld [vmem:[#allocation2] sm:$0xf]
    %v106 = vld [vmem:[#allocation2 + $0x4] sm:$0xf]
    %v107 = vld [vmem:[#allocation2 + $0x8] sm:$0xf]
    %v108 = vld [vmem:[#allocation2 + $0xc] sm:$0xf]
    %v109 = vld [vmem:[#allocation2 + $0x10] sm:$0xf]
    %v110 = vld [vmem:[#allocation2 + $0x14] sm:$0xf]
    %v111 = vld [vmem:[#allocation2 + $0x18] sm:$0xf]
    %v112 = vld [vmem:[#allocation2 + $0x1c] sm:$0xf]
    %v113 = vpack.c.bf16 %v102, %v101
    %v114 = vpack.c.bf16 %v104, %v103
    %v123 = vunpack.c.l.b16 %v105
    %v124 = vunpack.c.l.b16 %v106
    %v125 = vunpack.c.l.b16 %v107
    %v126 = vunpack.c.l.b16 %v108
    %v127 = vunpack.c.l.b16 %v109
    %v128 = vunpack.c.l.b16 %v110
    %v129 = vunpack.c.l.b16 %v111
    %v130 = vunpack.c.l.b16 %v112
    %v131 = vpack.c.b16 %v124, %v123
    %v132 = vpack.c.b16 %v126, %v125
    %v133 = vpack.c.b16 %v128, %v127
    %v134 = vpack.c.b16 %v130, %v129
    %vm139 = vcmask 523264
    %v141 = vsel %vm139, %v113, 0
    %v144 = vsel %vm139, %v114, 0
    %146 = vmatprep.subr.bf16.mxu0 0
    %147 = vmatpush1.bf16.msra.mxu0 %v131
    %148 = vmatprep.subr.bf16.mxu0 0
    %149 = vmatpush1.bf16.msra.mxu0 %v132
    %150 = vmatprep.subr.bf16.mxu0 0
    %151 = vmatpush1.bf16.msra.mxu0 %v133
    %152 = vmatprep.subr.bf16.mxu0 0
    %153 = vmatpush1.bf16.msra.mxu0 %v134
    %154 = vmatprep.subr.bf16.mxu0 0
    %155 = vmatpush1.bf16.msra.mxu0 0
    %156 = vmatprep.subr.bf16.mxu0 0
    %157 = vmatpush1.bf16.msra.mxu0 0
    %158 = vmatprep.subr.bf16.mxu0 0
    %159 = vmatpush1.bf16.msra.mxu0 0
    %160 = vmatprep.subr.bf16.mxu0 0
    %161 = vmatpush1.bf16.msra.mxu0 0
    %162 = vmatprep.subr.bf16.mxu0 0
    %163 = vmatpush1.bf16.msra.mxu0 0
    %164 = vmatprep.subr.bf16.mxu0 0
    %165 = vmatpush1.bf16.msra.mxu0 0
    %166 = vmatprep.subr.bf16.mxu0 0
    %167 = vmatpush1.bf16.msra.mxu0 0
    %168 = vmatprep.subr.bf16.mxu0 0
    %169 = vmatpush1.bf16.msra.mxu0 0
    %170 = vmatprep.subr.bf16.mxu0 0
    %171 = vmatpush1.bf16.msra.mxu0 0
    %172 = vmatprep.subr.bf16.mxu0 0
    %173 = vmatpush1.bf16.msra.mxu0 0
    %174 = vmatprep.subr.bf16.mxu0 0
    %175 = vmatpush1.bf16.msra.mxu0 0
    %176 = vmatprep.subr.bf16.mxu0 0
    %177 = vmatpush1.bf16.msra.mxu0 0
    %178 = vmatprep.mubr.bf16.mxu0 0
    %179 = vmatmul.mubr.bf16.gmra.mrb[0].mxu0 %v141
    %v180 = vpop.f32.mrb[0].mxu0
    %v181 = vadd.f32 0.0, %v180
    %v182 = vpop.f32.mrb[0].mxu0
    %v183 = vpop.f32.mrb[0].mxu0
    %v184 = vadd.f32 0.0, %v183
    %v185 = vpop.f32.mrb[0].mxu0
    %186 = vmatprep.mubr.bf16.mxu0 0
    %187 = vmatmul.mubr.bf16.gmra.mrb[0].mxu0 %v144
    %v188 = vpop.f32.mrb[0].mxu0
    %v189 = vadd.f32 0.0, %v188
    %v190 = vpop.f32.mrb[0].mxu0
    %v191 = vpop.f32.mrb[0].mxu0
    %v192 = vadd.f32 0.0, %v191
    %v193 = vpop.f32.mrb[0].mxu0
    %194 = vdwg.mxu0
    %v195 = vmul.f32 %v181, 8.0
    %v196 = vmul.f32 %v184, 8.0
    %v197 = vmul.f32 %v189, 8.0
    %v198 = vmul.f32 %v192, 8.0
    %v199 = vld [vmem:[%s2] sm:$0xff]
    %v200 = vadd.f32 %v195, %v199
    %v201 = vadd.f32 %v196, %v199
    %v202 = vadd.f32 %v197, %v199
    %v203 = vadd.f32 %v198, %v199
    %v204 = vld [vmem:[#allocation6] sm:$0xff]
    %v205 = vld [vmem:[#allocation6 + $0x30] sm:$0xff]
    %v206 = vld [vmem:[#allocation6 + $0x60] sm:$0xff]
    %v207 = vld [vmem:[#allocation6 + $0x90] sm:$0xff]
    %v208 = vld [vmem:[#allocation6 + $0xc0] sm:$0xff]
    %v209 = vld [vmem:[#allocation6 + $0xf0] sm:$0xff]
    %v210 = vld [vmem:[#allocation6 + $0x120] sm:$0xff]
    %v211 = vld [vmem:[#allocation6 + $0x150] sm:$0xff]
    %v212 = vpack.c.bf16 %v201, %v200
    %v221 = vunpack.c.l.b16 %v204
    %v222 = vunpack.c.h.b16 %v204
    %v223 = vunpack.c.l.b16 %v205
    %v224 = vunpack.c.h.b16 %v205
    %v225 = vunpack.c.l.b16 %v206
    %v226 = vunpack.c.h.b16 %v206
    %v227 = vunpack.c.l.b16 %v207
    %v228 = vunpack.c.h.b16 %v207
    %v229 = vunpack.c.l.b16 %v208
    %v230 = vunpack.c.h.b16 %v208
    %v231 = vunpack.c.l.b16 %v209
    %v232 = vunpack.c.h.b16 %v209
    %v233 = vunpack.c.l.b16 %v210
    %v234 = vunpack.c.h.b16 %v210
    %v235 = vunpack.c.l.b16 %v211
    %v236 = vunpack.c.h.b16 %v211
    %v237 = vpack.c.b16 %v223, %v221
    %v238 = vpack.c.b16 %v224, %v222
    %v239 = vpack.c.b16 %v227, %v225
    %v240 = vpack.c.b16 %v228, %v226
    %v241 = vpack.c.b16 %v231, %v229
    %v242 = vpack.c.b16 %v232, %v230
    %v243 = vpack.c.b16 %v235, %v233
    %v244 = vpack.c.b16 %v236, %v234
    %v254 = vsel %vm139, %v212, 0
    %256 = vmatprep.subr.bf16.mxu0 %v238
    %257 = vmatpush1.bf16.msra.mxu0 %v237
    %258 = vmatprep.subr.bf16.mxu0 %v240
    %259 = vmatpush1.bf16.msra.mxu0 %v239
    %260 = vmatprep.subr.bf16.mxu0 %v242
    %261 = vmatpush1.bf16.msra.mxu0 %v241
    %262 = vmatprep.subr.bf16.mxu0 %v244
    %263 = vmatpush1.bf16.msra.mxu0 %v243
    %264 = vmatprep.subr.bf16.mxu0 0
    %265 = vmatpush1.bf16.msra.mxu0 0
    %266 = vmatprep.subr.bf16.mxu0 0
    %267 = vmatpush1.bf16.msra.mxu0 0
    %268 = vmatprep.subr.bf16.mxu0 0
    %269 = vmatpush1.bf16.msra.mxu0 0
    %270 = vmatprep.subr.bf16.mxu0 0
    %271 = vmatpush1.bf16.msra.mxu0 0
    %272 = vmatprep.subr.bf16.mxu0 0
    %273 = vmatpush1.bf16.msra.mxu0 0
    %274 = vmatprep.subr.bf16.mxu0 0
    %275 = vmatpush1.bf16.msra.mxu0 0
    %276 = vmatprep.subr.bf16.mxu0 0
    %277 = vmatpush1.bf16.msra.mxu0 0
    %278 = vmatprep.subr.bf16.mxu0 0
    %279 = vmatpush1.bf16.msra.mxu0 0
    %280 = vmatprep.subr.bf16.mxu0 0
    %281 = vmatpush1.bf16.msra.mxu0 0
    %282 = vmatprep.subr.bf16.mxu0 0
    %283 = vmatpush1.bf16.msra.mxu0 0
    %284 = vmatprep.subr.bf16.mxu0 0
    %285 = vmatpush1.bf16.msra.mxu0 0
    %286 = vmatprep.subr.bf16.mxu0 0
    %287 = vmatpush1.bf16.msra.mxu0 0
    %288 = vmatprep.mubr.bf16.mxu0 0
    %289 = vmatmul.mubr.bf16.gmra.mrb[0].mxu0 %v254
    %v290 = vpop.f32.mrb[0].mxu0
    %v291 = vadd.f32 0.0, %v290
    %v292 = vpop.f32.mrb[0].mxu0
    %v293 = vadd.f32 0.0, %v292
    %v294 = vpop.f32.mrb[0].mxu0
    %v295 = vadd.f32 0.0, %v294
    %v296 = vpop.f32.mrb[0].mxu0
    %v297 = vadd.f32 0.0, %v296
    %298 = vdwg.mxu0
    %v299 = vld [vmem:[#allocation4] sm:$0x1]
    %v300 = vlaneseq
    %v301 = vshrl.u32 %v300, 7
    %v302 = vsub.s32 0, %v301
    %v303 = vrot.slane %v299, %v302
    %v304 = vadd.f32 %v291, %v303
    %v305 = vadd.f32 %v295, %v303
    %v306 = vld [vmem:[#allocation4 + $0x1] sm:$0x1]
    %v307 = vlaneseq
    %v308 = vshrl.u32 %v307, 7
    %v309 = vsub.s32 0, %v308
    %v310 = vrot.slane %v306, %v309
    %312 = vrot.lane.b32.xlu0 %v310, 64
    %v313 = vpop.permute.xlu0 %312
    %v315 = vadd.f32 %v291, %v313
    %v316 = vadd.f32 %v295, %v313
    %v317 = vld [vmem:[#allocation4 + $0x2] sm:$0x1]
    %v318 = vlaneseq
    %v319 = vshrl.u32 %v318, 7
    %v320 = vsub.s32 0, %v319
    %v321 = vrot.slane %v317, %v320
    %v322 = vadd.f32 %v293, %v321
    %v323 = vadd.f32 %v297, %v321
    %v324 = vld [vmem:[#allocation6 + $0x8] sm:$0xf]
    %v325 = vld [vmem:[#allocation6 + $0x38] sm:$0xf]
    %v326 = vld [vmem:[#allocation6 + $0x68] sm:$0xf]
    %v327 = vld [vmem:[#allocation6 + $0x98] sm:$0xf]
    %v328 = vld [vmem:[#allocation6 + $0xc8] sm:$0xf]
    %v329 = vld [vmem:[#allocation6 + $0xf8] sm:$0xf]
    %v330 = vld [vmem:[#allocation6 + $0x128] sm:$0xf]
    %v331 = vld [vmem:[#allocation6 + $0x158] sm:$0xf]
    %v332 = vld [vmem:[#allocation4 + $0x3] sm:$0x1]
    %v333 = vpack.c.bf16 %v304, %v304
    %v334 = vpack.c.bf16 %v315, %v315
    %336 = vrot.lane.b32.xlu0 %v334, 64
    %v337 = vpop.permute.xlu0 %336
    %vm338 = vcmask 261120
    %v340 = vsel %vm338, %v333, 0
    %v343 = vsel %vm338, %v337, 0
    %345 = vmatprep.subr.bf16.mxu0 0
    %346 = vmatpush1.bf16.xpose.msra.mxu0 %v343
    %347 = vmatprep.subr.bf16.mxu0 0
    %348 = vmatpush1.bf16.xpose.msra.mxu0 0
    %349 = vmatprep.subr.bf16.mxu0 0
    %350 = vmatpush1.bf16.xpose.msra.mxu0 0
    %351 = vmatprep.subr.bf16.mxu0 0
    %352 = vmatpush1.bf16.xpose.msra.mxu0 0
    %353 = vmatprep.subr.bf16.mxu0 0
    %354 = vmatpush1.bf16.xpose.msra.mxu0 0
    %355 = vmatprep.subr.bf16.mxu0 0
    %356 = vmatpush1.bf16.xpose.msra.mxu0 0
    %357 = vmatprep.subr.bf16.mxu0 0
    %358 = vmatpush1.bf16.xpose.msra.mxu0 0
    %359 = vmatprep.subr.bf16.mxu0 0
    %360 = vmatpush1.bf16.xpose.msra.mxu0 0
    %361 = vmatprep.subr.bf16.mxu0 0
    %362 = vmatpush1.bf16.xpose.msra.mxu0 0
    %363 = vmatprep.subr.bf16.mxu0 0
    %364 = vmatpush1.bf16.xpose.msra.mxu0 0
    %365 = vmatprep.subr.bf16.mxu0 0
    %366 = vmatpush1.bf16.xpose.msra.mxu0 0
    %367 = vmatprep.subr.bf16.mxu0 0
    %368 = vmatpush1.bf16.xpose.msra.mxu0 0
    %369 = vmatprep.subr.bf16.mxu0 0
    %370 = vmatpush1.bf16.xpose.msra.mxu0 0
    %371 = vmatprep.subr.bf16.mxu0 0
    %372 = vmatpush1.bf16.xpose.msra.mxu0 0
    %373 = vmatprep.subr.bf16.mxu0 0
    %374 = vmatpush1.bf16.xpose.msra.mxu0 0
    %375 = vmatprep.subr.bf16.mxu0 0
    %376 = vmatpush1.bf16.xpose.msra.mxu0 0
    %377 = vmatprep.mubr.bf16.mxu0 0
    %378 = vmatmul.mubr.bf16.gmra.mrb[0].mxu0 %v340
    %v379 = vpop.f32.mrb[0].mxu0
    %v380 = vadd.f32 0.0, %v379
    %v381 = vpop.f32.mrb[0].mxu0
    %v382 = vpop.f32.mrb[0].mxu0
    %v383 = vpop.f32.mrb[0].mxu0
    %384 = vdwg.mxu0
    %386 = vrot.lane.b32.xlu0 %v333, 96
    %v387 = vpop.permute.xlu0 %386
    %388 = vrot.lane.b32.xlu0 %v334, 32
    %v389 = vpop.permute.xlu0 %388
    %v391 = vsel %vm338, %v387, 0
    %v394 = vsel %vm338, %v389, 0
    %396 = vmatprep.subr.bf16.mxu0 0
    %397 = vmatpush1.bf16.xpose.msra.mxu0 %v394
    %398 = vmatprep.subr.bf16.mxu0 0
    %399 = vmatpush1.bf16.xpose.msra.mxu0 0
    %400 = vmatprep.subr.bf16.mxu0 0
    %401 = vmatpush1.bf16.xpose.msra.mxu0 0
    %402 = vmatprep.subr.bf16.mxu0 0
    %403 = vmatpush1.bf16.xpose.msra.mxu0 0
    %404 = vmatprep.subr.bf16.mxu0 0
    %405 = vmatpush1.bf16.xpose.msra.mxu0 0
    %406 = vmatprep.subr.bf16.mxu0 0
    %407 = vmatpush1.bf16.xpose.msra.mxu0 0
    %408 = vmatprep.subr.bf16.mxu0 0
    %409 = vmatpush1.bf16.xpose.msra.mxu0 0
    %410 = vmatprep.subr.bf16.mxu0 0
    %411 = vmatpush1.bf16.xpose.msra.mxu0 0
    %412 = vmatprep.subr.bf16.mxu0 0
    %413 = vmatpush1.bf16.xpose.msra.mxu0 0
    %414 = vmatprep.subr.bf16.mxu0 0
    %415 = vmatpush1.bf16.xpose.msra.mxu0 0
    %416 = vmatprep.subr.bf16.mxu0 0
    %417 = vmatpush1.bf16.xpose.msra.mxu0 0
    %418 = vmatprep.subr.bf16.mxu0 0
    %419 = vmatpush1.bf16.xpose.msra.mxu0 0
    %420 = vmatprep.subr.bf16.mxu0 0
    %421 = vmatpush1.bf16.xpose.msra.mxu0 0
    %422 = vmatprep.subr.bf16.mxu0 0
    %423 = vmatpush1.bf16.xpose.msra.mxu0 0
    %424 = vmatprep.subr.bf16.mxu0 0
    %425 = vmatpush1.bf16.xpose.msra.mxu0 0
    %426 = vmatprep.subr.bf16.mxu0 0
    %427 = vmatpush1.bf16.xpose.msra.mxu0 0
    %428 = vmatprep.mubr.bf16.mxu0 0
    %429 = vmatmul.mubr.bf16.gmra.mrb[0].mxu0 %v391
    %v430 = vpop.f32.mrb[0].mxu0
    %v431 = vadd.f32 0.0, %v430
    %v432 = vpop.f32.mrb[0].mxu0
    %v433 = vpop.f32.mrb[0].mxu0
    %v434 = vpop.f32.mrb[0].mxu0
    %435 = vdwg.mxu0
    %v436 = vpack.c.bf16 %v305, %v305
    %v437 = vpack.c.bf16 %v316, %v316
    %439 = vrot.lane.b32.xlu0 %v437, 64
    %v440 = vpop.permute.xlu0 %439
    %v442 = vsel %vm338, %v436, 0
    %v445 = vsel %vm338, %v440, 0
    %447 = vmatprep.subr.bf16.mxu0 0
    %448 = vmatpush1.bf16.xpose.msra.mxu0 %v445
    %449 = vmatprep.subr.bf16.mxu0 0
    %450 = vmatpush1.bf16.xpose.msra.mxu0 0
    %451 = vmatprep.subr.bf16.mxu0 0
    %452 = vmatpush1.bf16.xpose.msra.mxu0 0
    %453 = vmatprep.subr.bf16.mxu0 0
    %454 = vmatpush1.bf16.xpose.msra.mxu0 0
    %455 = vmatprep.subr.bf16.mxu0 0
    %456 = vmatpush1.bf16.xpose.msra.mxu0 0
    %457 = vmatprep.subr.bf16.mxu0 0
    %458 = vmatpush1.bf16.xpose.msra.mxu0 0
    %459 = vmatprep.subr.bf16.mxu0 0
    %460 = vmatpush1.bf16.xpose.msra.mxu0 0
    %461 = vmatprep.subr.bf16.mxu0 0
    %462 = vmatpush1.bf16.xpose.msra.mxu0 0
    %463 = vmatprep.subr.bf16.mxu0 0
    %464 = vmatpush1.bf16.xpose.msra.mxu0 0
    %465 = vmatprep.subr.bf16.mxu0 0
    %466 = vmatpush1.bf16.xpose.msra.mxu0 0
    %467 = vmatprep.subr.bf16.mxu0 0
    %468 = vmatpush1.bf16.xpose.msra.mxu0 0
    %469 = vmatprep.subr.bf16.mxu0 0
    %470 = vmatpush1.bf16.xpose.msra.mxu0 0
    %471 = vmatprep.subr.bf16.mxu0 0
    %472 = vmatpush1.bf16.xpose.msra.mxu0 0
    %473 = vmatprep.subr.bf16.mxu0 0
    %474 = vmatpush1.bf16.xpose.msra.mxu0 0
    %475 = vmatprep.subr.bf16.mxu0 0
    %476 = vmatpush1.bf16.xpose.msra.mxu0 0
    %477 = vmatprep.subr.bf16.mxu0 0
    %478 = vmatpush1.bf16.xpose.msra.mxu0 0
    %479 = vmatprep.mubr.bf16.mxu0 0
    %480 = vmatmul.mubr.bf16.gmra.mrb[0].mxu0 %v442
    %v481 = vpop.f32.mrb[0].mxu0
    %v482 = vadd.f32 0.0, %v481
    %v483 = vpop.f32.mrb[0].mxu0
    %v484 = vpop.f32.mrb[0].mxu0
    %v485 = vpop.f32.mrb[0].mxu0
    %486 = vdwg.mxu0
    %488 = vrot.lane.b32.xlu0 %v436, 96
    %v489 = vpop.permute.xlu0 %488
    %490 = vrot.lane.b32.xlu0 %v437, 32
    %v491 = vpop.permute.xlu0 %490
    %v493 = vsel %vm338, %v489, 0
    %v496 = vsel %vm338, %v491, 0
    %498 = vmatprep.subr.bf16.mxu0 0
    %499 = vmatpush1.bf16.xpose.msra.mxu0 %v496
    %500 = vmatprep.subr.bf16.mxu0 0
    %501 = vmatpush1.bf16.xpose.msra.mxu0 0
    %502 = vmatprep.subr.bf16.mxu0 0
    %503 = vmatpush1.bf16.xpose.msra.mxu0 0
    %504 = vmatprep.subr.bf16.mxu0 0
    %505 = vmatpush1.bf16.xpose.msra.mxu0 0
    %506 = vmatprep.subr.bf16.mxu0 0
    %507 = vmatpush1.bf16.xpose.msra.mxu0 0
    %508 = vmatprep.subr.bf16.mxu0 0
    %509 = vmatpush1.bf16.xpose.msra.mxu0 0
    %510 = vmatprep.subr.bf16.mxu0 0
    %511 = vmatpush1.bf16.xpose.msra.mxu0 0
    %512 = vmatprep.subr.bf16.mxu0 0
    %513 = vmatpush1.bf16.xpose.msra.mxu0 0
    %514 = vmatprep.subr.bf16.mxu0 0
    %515 = vmatpush1.bf16.xpose.msra.mxu0 0
    %516 = vmatprep.subr.bf16.mxu0 0
    %517 = vmatpush1.bf16.xpose.msra.mxu0 0
    %518 = vmatprep.subr.bf16.mxu0 0
    %519 = vmatpush1.bf16.xpose.msra.mxu0 0
    %520 = vmatprep.subr.bf16.mxu0 0
    %521 = vmatpush1.bf16.xpose.msra.mxu0 0
    %522 = vmatprep.subr.bf16.mxu0 0
    %523 = vmatpush1.bf16.xpose.msra.mxu0 0
    %524 = vmatprep.subr.bf16.mxu0 0
    %525 = vmatpush1.bf16.xpose.msra.mxu0 0
    %526 = vmatprep.subr.bf16.mxu0 0
    %527 = vmatpush1.bf16.xpose.msra.mxu0 0
    %528 = vmatprep.subr.bf16.mxu0 0
    %529 = vmatpush1.bf16.xpose.msra.mxu0 0
    %530 = vmatprep.mubr.bf16.mxu0 0
    %531 = vmatmul.mubr.bf16.gmra.mrb[0].mxu0 %v493
    %v532 = vpop.f32.mrb[0].mxu0
    %v533 = vadd.f32 0.0, %v532
    %v534 = vpop.f32.mrb[0].mxu0
    %v535 = vpop.f32.mrb[0].mxu0
    %v536 = vpop.f32.mrb[0].mxu0
    %537 = vdwg.mxu0
    %v538 = vmul.f32 %v380, 0.17677669
    %v539 = vmul.f32 %v431, 0.17677669
    %v540 = vmul.f32 %v482, 0.17677669
    %v541 = vmul.f32 %v533, 0.17677669
    %vm542 = vcmask 64512
    %v543 = vsel %vm542, %v538, -inf
    %544 = vmax.xlane.f32.xlu0 %v543
    %v545 = vpop.xlane.xlu0 %544
    %v546 = vsel %vm542, %v539, -inf
    %547 = vmax.xlane.f32.xlu0 %v546
    %v548 = vpop.xlane.xlu0 %547
    %v549 = vsel %vm542, %v540, -inf
    %550 = vmax.xlane.f32.xlu0 %v549
    %v551 = vpop.xlane.xlu0 %550
    %v552 = vsel %vm542, %v541, -inf
    %553 = vmax.xlane.f32.xlu0 %v552
    %v554 = vpop.xlane.xlu0 %553
    %v555 = vsub.f32 %v538, %v545
    %v556 = vsub.f32 %v539, %v548
    %v557 = vsub.f32 %v540, %v551
    %v558 = vsub.f32 %v541, %v554
    %v559 = vmul.f32 %v555, 1.442695
    %v560 = vpow.pop %v559
    %v561 = vmul.f32 %v556, 1.442695
    %v562 = vpow.pop %v561
    %v563 = vmul.f32 %v557, 1.442695
    %v564 = vpow.pop %v563
    %v565 = vmul.f32 %v558, 1.442695
    %v566 = vpow.pop %v565
    %v567 = vsel %vm542, %v560, 0.0
    %568 = vadd.xlane.f32.xlu0 %v567
    %v569 = vpop.xlane.xlu0 %568
    %v570 = vsel %vm542, %v562, 0.0
    %571 = vadd.xlane.f32.xlu0 %v570
    %v572 = vpop.xlane.xlu0 %571
    %v573 = vsel %vm542, %v564, 0.0
    %574 = vadd.xlane.f32.xlu0 %v573
    %v575 = vpop.xlane.xlu0 %574
    %v576 = vsel %vm542, %v566, 0.0
    %577 = vadd.xlane.f32.xlu0 %v576
    %v578 = vpop.xlane.xlu0 %577
    %v579 = vrcp.pop %v569
    %v580 = vrcp.pop %v572
    %v581 = vrcp.pop %v575
    %v582 = vrcp.pop %v578
    %v583 = vmul.f32 %v560, %v579
    %v584 = vmul.f32 %v562, %v580
    %v585 = vmul.f32 %v564, %v581
    %v586 = vmul.f32 %v566, %v582
    %v587 = vpack.c.bf16 %v583, %v583
    %v588 = vpack.c.bf16 %v322, %v322
    %v590 = vsel %vm542, %v587, 0
    %vm592 = vcmask 1043456
    %v594 = vsel %vm592, %v588, 0
    %596 = vmatprep.subr.bf16.mxu0 0
    %597 = vmatpush1.bf16.msra.mxu0 %v594
    %598 = vmatprep.subr.bf16.mxu0 0
    %599 = vmatpush1.bf16.msra.mxu0 0
    %600 = vmatprep.subr.bf16.mxu0 0
    %601 = vmatpush1.bf16.msra.mxu0 0
    %602 = vmatprep.subr.bf16.mxu0 0
    %603 = vmatpush1.bf16.msra.mxu0 0
    %604 = vmatprep.subr.bf16.mxu0 0
    %605 = vmatpush1.bf16.msra.mxu0 0
    %606 = vmatprep.subr.bf16.mxu0 0
    %607 = vmatpush1.bf16.msra.mxu0 0
    %608 = vmatprep.subr.bf16.mxu0 0
    %609 = vmatpush1.bf16.msra.mxu0 0
    %610 = vmatprep.subr.bf16.mxu0 0
    %611 = vmatpush1.bf16.msra.mxu0 0
    %612 = vmatprep.subr.bf16.mxu0 0
    %613 = vmatpush1.bf16.msra.mxu0 0
    %614 = vmatprep.subr.bf16.mxu0 0
    %615 = vmatpush1.bf16.msra.mxu0 0
    %616 = vmatprep.subr.bf16.mxu0 0
    %617 = vmatpush1.bf16.msra.mxu0 0
    %618 = vmatprep.subr.bf16.mxu0 0
    %619 = vmatpush1.bf16.msra.mxu0 0
    %620 = vmatprep.subr.bf16.mxu0 0
    %621 = vmatpush1.bf16.msra.mxu0 0
    %622 = vmatprep.subr.bf16.mxu0 0
    %623 = vmatpush1.bf16.msra.mxu0 0
    %624 = vmatprep.subr.bf16.mxu0 0
    %625 = vmatpush1.bf16.msra.mxu0 0
    %626 = vmatprep.subr.bf16.mxu0 0
    %627 = vmatpush1.bf16.msra.mxu0 0
    %628 = vmatprep.mubr.bf16.mxu0 0
    %629 = vmatmul.mubr.bf16.gmra.mrb[0].mxu0 %v590
    %v630 = vpop.f32.mrb[0].mxu0
    %v631 = vadd.f32 0.0, %v630
    %v632 = vpop.f32.mrb[0].mxu0
    %v633 = vpop.f32.mrb[0].mxu0
    %v634 = vpop.f32.mrb[0].mxu0
    %635 = vdwg.mxu0
    %v636 = vpack.c.bf16 %v631, %v631
    %v637 = vpack.c.bf16 %v584, %v584
    %639 = vrot.lane.b32.xlu0 %v588, 96
    %v640 = vpop.permute.xlu0 %639
    %v642 = vsel %vm542, %v637, 0
    %v645 = vsel %vm592, %v640, 0
    %647 = vmatprep.subr.bf16.mxu0 0
    %648 = vmatpush1.bf16.msra.mxu0 %v645
    %649 = vmatprep.subr.bf16.mxu0 0
    %650 = vmatpush1.bf16.msra.mxu0 0
    %651 = vmatprep.subr.bf16.mxu0 0
    %652 = vmatpush1.bf16.msra.mxu0 0
    %653 = vmatprep.subr.bf16.mxu0 0
    %654 = vmatpush1.bf16.msra.mxu0 0
    %655 = vmatprep.subr.bf16.mxu0 0
    %656 = vmatpush1.bf16.msra.mxu0 0
    %657 = vmatprep.subr.bf16.mxu0 0
    %658 = vmatpush1.bf16.msra.mxu0 0
    %659 = vmatprep.subr.bf16.mxu0 0
    %660 = vmatpush1.bf16.msra.mxu0 0
    %661 = vmatprep.subr.bf16.mxu0 0
    %662 = vmatpush1.bf16.msra.mxu0 0
    %663 = vmatprep.subr.bf16.mxu0 0
    %664 = vmatpush1.bf16.msra.mxu0 0
    %665 = vmatprep.subr.bf16.mxu0 0
    %666 = vmatpush1.bf16.msra.mxu0 0
    %667 = vmatprep.subr.bf16.mxu0 0
    %668 = vmatpush1.bf16.msra.mxu0 0
    %669 = vmatprep.subr.bf16.mxu0 0
    %670 = vmatpush1.bf16.msra.mxu0 0
    %671 = vmatprep.subr.bf16.mxu0 0
    %672 = vmatpush1.bf16.msra.mxu0 0
    %673 = vmatprep.subr.bf16.mxu0 0
    %674 = vmatpush1.bf16.msra.mxu0 0
    %675 = vmatprep.subr.bf16.mxu0 0
    %676 = vmatpush1.bf16.msra.mxu0 0
    %677 = vmatprep.subr.bf16.mxu0 0
    %678 = vmatpush1.bf16.msra.mxu0 0
    %679 = vmatprep.mubr.bf16.mxu0 0
    %680 = vmatmul.mubr.bf16.gmra.mrb[0].mxu0 %v642
    %v681 = vpop.f32.mrb[0].mxu0
    %v682 = vadd.f32 0.0, %v681
    %v683 = vpop.f32.mrb[0].mxu0
    %v684 = vpop.f32.mrb[0].mxu0
    %v685 = vpop.f32.mrb[0].mxu0
    %686 = vdwg.mxu0
    %v687 = vpack.c.bf16 %v682, %v682
    %v692 = vunpack.c.l.b16 %v328
    %v693 = vunpack.c.l.b16 %v329
    %v694 = vunpack.c.l.b16 %v330
    %v695 = vunpack.c.l.b16 %v331
    %v696 = vpack.c.b16 %v693, %v692
    %v697 = vpack.c.b16 %v695, %v694
    %v701 = vsel %vm338, %v687, 0
    %703 = vmatprep.subr.bf16.mxu0 0
    %704 = vmatpush1.bf16.msra.mxu0 %v696
    %705 = vmatprep.subr.bf16.mxu0 0
    %706 = vmatpush1.bf16.msra.mxu0 %v697
    %707 = vmatprep.subr.bf16.mxu0 0
    %708 = vmatpush1.bf16.msra.mxu0 0
    %709 = vmatprep.subr.bf16.mxu0 0
    %710 = vmatpush1.bf16.msra.mxu0 0
    %711 = vmatprep.subr.bf16.mxu0 0
    %712 = vmatpush1.bf16.msra.mxu0 0
    %713 = vmatprep.subr.bf16.mxu0 0
    %714 = vmatpush1.bf16.msra.mxu0 0
    %715 = vmatprep.subr.bf16.mxu0 0
    %716 = vmatpush1.bf16.msra.mxu0 0
    %717 = vmatprep.subr.bf16.mxu0 0
    %718 = vmatpush1.bf16.msra.mxu0 0
    %719 = vmatprep.subr.bf16.mxu0 0
    %720 = vmatpush1.bf16.msra.mxu0 0
    %721 = vmatprep.subr.bf16.mxu0 0
    %722 = vmatpush1.bf16.msra.mxu0 0
    %723 = vmatprep.subr.bf16.mxu0 0
    %724 = vmatpush1.bf16.msra.mxu0 0
    %725 = vmatprep.subr.bf16.mxu0 0
    %726 = vmatpush1.bf16.msra.mxu0 0
    %727 = vmatprep.subr.bf16.mxu0 0
    %728 = vmatpush1.bf16.msra.mxu0 0
    %729 = vmatprep.subr.bf16.mxu0 0
    %730 = vmatpush1.bf16.msra.mxu0 0
    %731 = vmatprep.subr.bf16.mxu0 0
    %732 = vmatpush1.bf16.msra.mxu0 0
    %733 = vmatprep.subr.bf16.mxu0 0
    %734 = vmatpush1.bf16.msra.mxu0 0
    %735 = vmatprep.mubr.bf16.mxu0 0
    %736 = vmatmul.mubr.bf16.gmra.mrb[0].mxu0 %v701
    %v737 = vpop.f32.mrb[0].mxu0
    %v738 = vadd.f32 0.0, %v737
    %v739 = vpop.f32.mrb[0].mxu0
    %v740 = vpop.f32.mrb[0].mxu0
    %v741 = vpop.f32.mrb[0].mxu0
    %742 = vdwg.mxu0
    %v747 = vunpack.c.l.b16 %v324
    %v748 = vunpack.c.l.b16 %v325
    %v749 = vunpack.c.l.b16 %v326
    %v750 = vunpack.c.l.b16 %v327
    %v751 = vpack.c.b16 %v748, %v747
    %v752 = vpack.c.b16 %v750, %v749
    %v756 = vsel %vm338, %v636, 0
    %758 = vmatprep.subr.bf16.mxu0 0
    %759 = vmatpush1.bf16.msra.mxu0 %v751
    %760 = vmatprep.subr.bf16.mxu0 0
    %761 = vmatpush1.bf16.msra.mxu0 %v752
    %762 = vmatprep.subr.bf16.mxu0 0
    %763 = vmatpush1.bf16.msra.mxu0 0
    %764 = vmatprep.subr.bf16.mxu0 0
    %765 = vmatpush1.bf16.msra.mxu0 0
    %766 = vmatprep.subr.bf16.mxu0 0
    %767 = vmatpush1.bf16.msra.mxu0 0
    %768 = vmatprep.subr.bf16.mxu0 0
    %769 = vmatpush1.bf16.msra.mxu0 0
    %770 = vmatprep.subr.bf16.mxu0 0
    %771 = vmatpush1.bf16.msra.mxu0 0
    %772 = vmatprep.subr.bf16.mxu0 0
    %773 = vmatpush1.bf16.msra.mxu0 0
    %774 = vmatprep.subr.bf16.mxu0 0
    %775 = vmatpush1.bf16.msra.mxu0 0
    %776 = vmatprep.subr.bf16.mxu0 0
    %777 = vmatpush1.bf16.msra.mxu0 0
    %778 = vmatprep.subr.bf16.mxu0 0
    %779 = vmatpush1.bf16.msra.mxu0 0
    %780 = vmatprep.subr.bf16.mxu0 0
    %781 = vmatpush1.bf16.msra.mxu0 0
    %782 = vmatprep.subr.bf16.mxu0 0
    %783 = vmatpush1.bf16.msra.mxu0 0
    %784 = vmatprep.subr.bf16.mxu0 0
    %785 = vmatpush1.bf16.msra.mxu0 0
    %786 = vmatprep.subr.bf16.mxu0 0
    %787 = vmatpush1.bf16.msra.mxu0 0
    %788 = vmatprep.subr.bf16.mxu0 0
    %789 = vmatpush1.bf16.msra.mxu0 0
    %790 = vmatprep.mubr.bf16.mxu0 0
    %791 = vmatmul.mubr.bf16.gmra.mrb[0].mxu0 %v756
    %v792 = vpop.f32.mrb[0].mxu0
    %v793 = vadd.f32 %v738, %v792
    %v794 = vpop.f32.mrb[0].mxu0
    %v795 = vpop.f32.mrb[0].mxu0
    %v796 = vpop.f32.mrb[0].mxu0
    %797 = vdwg.mxu0
    %v798 = vpack.c.bf16 %v585, %v585
    %v799 = vpack.c.bf16 %v323, %v323
    %v801 = vsel %vm542, %v798, 0
    %v804 = vsel %vm592, %v799, 0
    %806 = vmatprep.subr.bf16.mxu0 0
    %807 = vmatpush1.bf16.msra.mxu0 %v804
    %808 = vmatprep.subr.bf16.mxu0 0
    %809 = vmatpush1.bf16.msra.mxu0 0
    %810 = vmatprep.subr.bf16.mxu0 0
    %811 = vmatpush1.bf16.msra.mxu0 0
    %812 = vmatprep.subr.bf16.mxu0 0
    %813 = vmatpush1.bf16.msra.mxu0 0
    %814 = vmatprep.subr.bf16.mxu0 0
    %815 = vmatpush1.bf16.msra.mxu0 0
    %816 = vmatprep.subr.bf16.mxu0 0
    %817 = vmatpush1.bf16.msra.mxu0 0
    %818 = vmatprep.subr.bf16.mxu0 0
    %819 = vmatpush1.bf16.msra.mxu0 0
    %820 = vmatprep.subr.bf16.mxu0 0
    %821 = vmatpush1.bf16.msra.mxu0 0
    %822 = vmatprep.subr.bf16.mxu0 0
    %823 = vmatpush1.bf16.msra.mxu0 0
    %824 = vmatprep.subr.bf16.mxu0 0
    %825 = vmatpush1.bf16.msra.mxu0 0
    %826 = vmatprep.subr.bf16.mxu0 0
    %827 = vmatpush1.bf16.msra.mxu0 0
    %828 = vmatprep.subr.bf16.mxu0 0
    %829 = vmatpush1.bf16.msra.mxu0 0
    %830 = vmatprep.subr.bf16.mxu0 0
    %831 = vmatpush1.bf16.msra.mxu0 0
    %832 = vmatprep.subr.bf16.mxu0 0
    %833 = vmatpush1.bf16.msra.mxu0 0
    %834 = vmatprep.subr.bf16.mxu0 0
    %835 = vmatpush1.bf16.msra.mxu0 0
    %836 = vmatprep.subr.bf16.mxu0 0
    %837 = vmatpush1.bf16.msra.mxu0 0
    %838 = vmatprep.mubr.bf16.mxu0 0
    %839 = vmatmul.mubr.bf16.gmra.mrb[0].mxu0 %v801
    %v840 = vpop.f32.mrb[0].mxu0
    %v841 = vadd.f32 0.0, %v840
    %v842 = vpop.f32.mrb[0].mxu0
    %v843 = vpop.f32.mrb[0].mxu0
    %v844 = vpop.f32.mrb[0].mxu0
    %845 = vdwg.mxu0
    %v846 = vpack.c.bf16 %v841, %v841
    %v847 = vpack.c.bf16 %v586, %v586
    %849 = vrot.lane.b32.xlu0 %v799, 96
    %v850 = vpop.permute.xlu0 %849
    %v852 = vsel %vm542, %v847, 0
    %v855 = vsel %vm592, %v850, 0
    %857 = vmatprep.subr.bf16.mxu0 0
    %858 = vmatpush1.bf16.msra.mxu0 %v855
    %859 = vmatprep.subr.bf16.mxu0 0
    %860 = vmatpush1.bf16.msra.mxu0 0
    %861 = vmatprep.subr.bf16.mxu0 0
    %862 = vmatpush1.bf16.msra.mxu0 0
    %863 = vmatprep.subr.bf16.mxu0 0
    %864 = vmatpush1.bf16.msra.mxu0 0
    %865 = vmatprep.subr.bf16.mxu0 0
    %866 = vmatpush1.bf16.msra.mxu0 0
    %867 = vmatprep.subr.bf16.mxu0 0
    %868 = vmatpush1.bf16.msra.mxu0 0
    %869 = vmatprep.subr.bf16.mxu0 0
    %870 = vmatpush1.bf16.msra.mxu0 0
    %871 = vmatprep.subr.bf16.mxu0 0
    %872 = vmatpush1.bf16.msra.mxu0 0
    %873 = vmatprep.subr.bf16.mxu0 0
    %874 = vmatpush1.bf16.msra.mxu0 0
    %875 = vmatprep.subr.bf16.mxu0 0
    %876 = vmatpush1.bf16.msra.mxu0 0
    %877 = vmatprep.subr.bf16.mxu0 0
    %878 = vmatpush1.bf16.msra.mxu0 0
    %879 = vmatprep.subr.bf16.mxu0 0
    %880 = vmatpush1.bf16.msra.mxu0 0
    %881 = vmatprep.subr.bf16.mxu0 0
    %882 = vmatpush1.bf16.msra.mxu0 0
    %883 = vmatprep.subr.bf16.mxu0 0
    %884 = vmatpush1.bf16.msra.mxu0 0
    %885 = vmatprep.subr.bf16.mxu0 0
    %886 = vmatpush1.bf16.msra.mxu0 0
    %887 = vmatprep.subr.bf16.mxu0 0
    %888 = vmatpush1.bf16.msra.mxu0 0
    %889 = vmatprep.mubr.bf16.mxu0 0
    %890 = vmatmul.mubr.bf16.gmra.mrb[0].mxu0 %v852
    %v891 = vpop.f32.mrb[0].mxu0
    %v892 = vadd.f32 0.0, %v891
    %v893 = vpop.f32.mrb[0].mxu0
    %v894 = vpop.f32.mrb[0].mxu0
    %v895 = vpop.f32.mrb[0].mxu0
    %896 = vdwg.mxu0
    %v897 = vpack.c.bf16 %v892, %v892
    %v899 = vsel %vm338, %v897, 0
    %901 = vmatprep.subr.bf16.mxu0 0
    %902 = vmatpush1.bf16.msra.mxu0 %v696
    %903 = vmatprep.subr.bf16.mxu0 0
    %904 = vmatpush1.bf16.msra.mxu0 %v697
    %905 = vmatprep.subr.bf16.mxu0 0
    %906 = vmatpush1.bf16.msra.mxu0 0
    %907 = vmatprep.subr.bf16.mxu0 0
    %908 = vmatpush1.bf16.msra.mxu0 0
    %909 = vmatprep.subr.bf16.mxu0 0
    %910 = vmatpush1.bf16.msra.mxu0 0
    %911 = vmatprep.subr.bf16.mxu0 0
    %912 = vmatpush1.bf16.msra.mxu0 0
    %913 = vmatprep.subr.bf16.mxu0 0
    %914 = vmatpush1.bf16.msra.mxu0 0
    %915 = vmatprep.subr.bf16.mxu0 0
    %916 = vmatpush1.bf16.msra.mxu0 0
    %917 = vmatprep.subr.bf16.mxu0 0
    %918 = vmatpush1.bf16.msra.mxu0 0
    %919 = vmatprep.subr.bf16.mxu0 0
    %920 = vmatpush1.bf16.msra.mxu0 0
    %921 = vmatprep.subr.bf16.mxu0 0
    %922 = vmatpush1.bf16.msra.mxu0 0
    %923 = vmatprep.subr.bf16.mxu0 0
    %924 = vmatpush1.bf16.msra.mxu0 0
    %925 = vmatprep.subr.bf16.mxu0 0
    %926 = vmatpush1.bf16.msra.mxu0 0
    %927 = vmatprep.subr.bf16.mxu0 0
    %928 = vmatpush1.bf16.msra.mxu0 0
    %929 = vmatprep.subr.bf16.mxu0 0
    %930 = vmatpush1.bf16.msra.mxu0 0
    %931 = vmatprep.subr.bf16.mxu0 0
    %932 = vmatpush1.bf16.msra.mxu0 0
    %933 = vmatprep.mubr.bf16.mxu0 0
    %934 = vmatmul.mubr.bf16.gmra.mrb[0].mxu0 %v899
    %v935 = vpop.f32.mrb[0].mxu0
    %v936 = vadd.f32 0.0, %v935
    %v937 = vpop.f32.mrb[0].mxu0
    %v938 = vpop.f32.mrb[0].mxu0
    %v939 = vpop.f32.mrb[0].mxu0
    %940 = vdwg.mxu0
    %v942 = vsel %vm338, %v846, 0
    %944 = vmatprep.subr.bf16.mxu0 0
    %945 = vmatpush1.bf16.msra.mxu0 %v751
    %946 = vmatprep.subr.bf16.mxu0 0
    %947 = vmatpush1.bf16.msra.mxu0 %v752
    %948 = vmatprep.subr.bf16.mxu0 0
    %949 = vmatpush1.bf16.msra.mxu0 0
    %950 = vmatprep.subr.bf16.mxu0 0
    %951 = vmatpush1.bf16.msra.mxu0 0
    %952 = vmatprep.subr.bf16.mxu0 0
    %953 = vmatpush1.bf16.msra.mxu0 0
    %954 = vmatprep.subr.bf16.mxu0 0
    %955 = vmatpush1.bf16.msra.mxu0 0
    %956 = vmatprep.subr.bf16.mxu0 0
    %957 = vmatpush1.bf16.msra.mxu0 0
    %958 = vmatprep.subr.bf16.mxu0 0
    %959 = vmatpush1.bf16.msra.mxu0 0
    %960 = vmatprep.subr.bf16.mxu0 0
    %961 = vmatpush1.bf16.msra.mxu0 0
    %962 = vmatprep.subr.bf16.mxu0 0
    %963 = vmatpush1.bf16.msra.mxu0 0
    %964 = vmatprep.subr.bf16.mxu0 0
    %965 = vmatpush1.bf16.msra.mxu0 0
    %966 = vmatprep.subr.bf16.mxu0 0
    %967 = vmatpush1.bf16.msra.mxu0 0
    %968 = vmatprep.subr.bf16.mxu0 0
    %969 = vmatpush1.bf16.msra.mxu0 0
    %970 = vmatprep.subr.bf16.mxu0 0
    %971 = vmatpush1.bf16.msra.mxu0 0
    %972 = vmatprep.subr.bf16.mxu0 0
    %973 = vmatpush1.bf16.msra.mxu0 0
    %974 = vmatprep.subr.bf16.mxu0 0
    %975 = vmatpush1.bf16.msra.mxu0 0
    %976 = vmatprep.mubr.bf16.mxu0 0
    %977 = vmatmul.mubr.bf16.gmra.mrb[0].mxu0 %v942
    %v978 = vpop.f32.mrb[0].mxu0
    %v979 = vadd.f32 %v936, %v978
    %v980 = vpop.f32.mrb[0].mxu0
    %v981 = vpop.f32.mrb[0].mxu0
    %v982 = vpop.f32.mrb[0].mxu0
    %983 = vdwg.mxu0
    %v984 = vlaneseq
    %v985 = vshrl.u32 %v984, 7
    %v986 = vsub.s32 0, %v985
    %v987 = vrot.slane %v332, %v986
    %v988 = vadd.f32 %v793, %v987
    %v989 = vadd.f32 %v979, %v987
    %v990 = vadd.f32 %v200, %v988
    %v991 = vadd.f32 %v201, %v989
    %v992 = vsel %vm139, %v990, 0.0
    %993 = vadd.xlane.f32.xlu0 %v992
    %v994 = vpop.xlane.xlu0 %993
    %v995 = vsel %vm139, %v991, 0.0
    %996 = vadd.xlane.f32.xlu0 %v995
    %v997 = vpop.xlane.xlu0 %996
    %v998 = vrcp.pop 64.0
    %v999 = vmul.f32 %v994, %v998
    %v1000 = vmul.f32 %v997, %v998
    %v1001 = vsub.f32 %v990, %v999
    %v1002 = vsub.f32 %v991, %v1000
    %v1003 = vmul.f32 %v1001, %v1001
    %v1004 = vmul.f32 %v1002, %v1002
    %v1005 = vsel %vm139, %v1003, 0.0
    %1006 = vadd.xlane.f32.xlu0 %v1005
    %v1007 = vpop.xlane.xlu0 %1006
    %v1008 = vsel %vm139, %v1004, 0.0
    %1009 = vadd.xlane.f32.xlu0 %v1008
    %v1010 = vpop.xlane.xlu0 %1009
    %v1011 = vmul.f32 %v1007, %v998
    %v1012 = vmul.f32 %v1010, %v998
    %v1013 = vadd.f32 %v1011, 1e-05
    %v1014 = vadd.f32 %v1012, 1e-05
    %v1015 = vrsqrt.pop %v1013
    %v1016 = vrsqrt.pop %v1014
    %v1017 = vmul.f32 %v1001, %v1015
    %v1018 = vmul.f32 %v1002, %v1016
    %v1019 = vld [vmem:[#allocation4 + $0x4] sm:$0x1]
    %v1020 = vlaneseq
    %v1021 = vshrl.u32 %v1020, 7
    %v1022 = vsub.s32 0, %v1021
    %v1023 = vrot.slane %v1019, %v1022
    %v1024 = vmul.f32 %v1017, %v1023
    %v1025 = vmul.f32 %v1018, %v1023
    %v1026 = vld [vmem:[#allocation4 + $0x5] sm:$0x1]
    %v1027 = vlaneseq
    %v1028 = vshrl.u32 %v1027, 7
    %v1029 = vsub.s32 0, %v1028
    %v1030 = vrot.slane %v1026, %v1029
    %v1031 = vadd.f32 %v1024, %v1030
    %v1032 = vadd.f32 %v1025, %v1030
    %v1033 = vld [vmem:[#allocation6 + $0xc] sm:$0xf]
    %v1034 = vld [vmem:[#allocation6 + $0x3c] sm:$0xf]
    %v1035 = vld [vmem:[#allocation6 + $0x6c] sm:$0xf]
    %v1036 = vld [vmem:[#allocation6 + $0x9c] sm:$0xf]
    %v1037 = vld [vmem:[#allocation6 + $0xcc] sm:$0xf]
    %v1038 = vld [vmem:[#allocation6 + $0xfc] sm:$0xf]
    %v1039 = vld [vmem:[#allocation6 + $0x12c] sm:$0xf]
    %v1040 = vld [vmem:[#allocation6 + $0x15c] sm:$0xf]
    %v1041 = vld [vmem:[#allocation4 + $0x6] sm:$0x1]
    %v1042 = vld [vmem:[#allocation7] sm:$0xf]
    %v1043 = vld [vmem:[#allocation7 + $0x8] sm:$0xf]
    %v1044 = vld [vmem:[#allocation7 + $0x10] sm:$0xf]
    %v1045 = vld [vmem:[#allocation7 + $0x18] sm:$0xf]
    %v1046 = vld [vmem:[#allocation7 + $0x20] sm:$0xf]
    %v1047 = vld [vmem:[#allocation7 + $0x28] sm:$0xf]
    %v1048 = vld [vmem:[#allocation7 + $0x30] sm:$0xf]
    %v1049 = vld [vmem:[#allocation7 + $0x38] sm:$0xf]
    %v1050 = vld [vmem:[#allocation7 + $0x40] sm:$0xf]
    %v1051 = vld [vmem:[#allocation7 + $0x48] sm:$0xf]
    %v1052 = vld [vmem:[#allocation7 + $0x50] sm:$0xf]
    %v1053 = vld [vmem:[#allocation7 + $0x58] sm:$0xf]
    %v1054 = vld [vmem:[#allocation7 + $0x60] sm:$0xf]
    %v1055 = vld [vmem:[#allocation7 + $0x68] sm:$0xf]
    %v1056 = vld [vmem:[#allocation7 + $0x70] sm:$0xf]
    %v1057 = vld [vmem:[#allocation7 + $0x78] sm:$0xf]
    %v1058 = vld [vmem:[#allocation4 + $0x7] sm:$0x1]
    %v1059 = vpack.c.bf16 %v1032, %v1031
    %v1060 = vlaneseq
    %v1061 = vshrl.u32 %v1060, 7
    %v1062 = vsub.s32 0, %v1061
    %v1063 = vrot.slane %v1041, %v1062
    %v1072 = vunpack.c.l.b16 %v1033
    %v1073 = vunpack.c.l.b16 %v1034
    %v1074 = vunpack.c.l.b16 %v1035
    %v1075 = vunpack.c.l.b16 %v1036
    %v1076 = vunpack.c.l.b16 %v1037
    %v1077 = vunpack.c.l.b16 %v1038
    %v1078 = vunpack.c.l.b16 %v1039
    %v1079 = vunpack.c.l.b16 %v1040
    %v1080 = vpack.c.b16 %v1073, %v1072
    %v1081 = vpack.c.b16 %v1075, %v1074
    %v1082 = vpack.c.b16 %v1077, %v1076
    %v1083 = vpack.c.b16 %v1079, %v1078
    %v1089 = vsel %vm139, %v1059, 0
    %1091 = vmatprep.subr.bf16.mxu0 0
    %1092 = vmatpush1.bf16.msra.mxu0 %v1080
    %1093 = vmatprep.subr.bf16.mxu0 0
    %1094 = vmatpush1.bf16.msra.mxu0 %v1081
    %1095 = vmatprep.subr.bf16.mxu0 0
    %1096 = vmatpush1.bf16.msra.mxu0 %v1082
    %1097 = vmatprep.subr.bf16.mxu0 0
    %1098 = vmatpush1.bf16.msra.mxu0 %v1083
    %1099 = vmatprep.subr.bf16.mxu0 0
    %1100 = vmatpush1.bf16.msra.mxu0 0
    %1101 = vmatprep.subr.bf16.mxu0 0
    %1102 = vmatpush1.bf16.msra.mxu0 0
    %1103 = vmatprep.subr.bf16.mxu0 0
    %1104 = vmatpush1.bf16.msra.mxu0 0
    %1105 = vmatprep.subr.bf16.mxu0 0
    %1106 = vmatpush1.bf16.msra.mxu0 0
    %1107 = vmatprep.subr.bf16.mxu0 0
    %1108 = vmatpush1.bf16.msra.mxu0 0
    %1109 = vmatprep.subr.bf16.mxu0 0
    %1110 = vmatpush1.bf16.msra.mxu0 0
    %1111 = vmatprep.subr.bf16.mxu0 0
    %1112 = vmatpush1.bf16.msra.mxu0 0
    %1113 = vmatprep.subr.bf16.mxu0 0
    %1114 = vmatpush1.bf16.msra.mxu0 0
    %1115 = vmatprep.subr.bf16.mxu0 0
    %1116 = vmatpush1.bf16.msra.mxu0 0
    %1117 = vmatprep.subr.bf16.mxu0 0
    %1118 = vmatpush1.bf16.msra.mxu0 0
    %1119 = vmatprep.subr.bf16.mxu0 0
    %1120 = vmatpush1.bf16.msra.mxu0 0
    %1121 = vmatprep.subr.bf16.mxu0 0
    %1122 = vmatpush1.bf16.msra.mxu0 0
    %1123 = vmatprep.mubr.bf16.mxu0 0
    %1124 = vmatmul.mubr.bf16.gmra.mrb[0].mxu0 %v1089
    %v1125 = vpop.f32.mrb[0].mxu0
    %v1126 = vadd.f32 %v1063, %v1125
    %v1127 = vpop.f32.mrb[0].mxu0
    %v1128 = vpop.f32.mrb[0].mxu0
    %v1129 = vadd.f32 %v1063, %v1128
    %v1130 = vpop.f32.mrb[0].mxu0
    %1131 = vdwg.mxu0
    %v1132 = vmax.f32 %v1126, 0.0
    %v1133 = vmax.f32 %v1129, 0.0
    %v1134 = vpack.c.bf16 %v1133, %v1132
    %v1135 = vlaneseq
    %v1136 = vshrl.u32 %v1135, 7
    %v1137 = vsub.s32 0, %v1136
    %v1138 = vrot.slane %v1058, %v1137
    %v1155 = vunpack.c.l.b16 %v1042
    %v1156 = vunpack.c.l.b16 %v1043
    %v1157 = vunpack.c.l.b16 %v1044
    %v1158 = vunpack.c.l.b16 %v1045
    %v1159 = vunpack.c.l.b16 %v1046
    %v1160 = vunpack.c.l.b16 %v1047
    %v1161 = vunpack.c.l.b16 %v1048
    %v1162 = vunpack.c.l.b16 %v1049
    %v1163 = vunpack.c.l.b16 %v1050
    %v1164 = vunpack.c.l.b16 %v1051
    %v1165 = vunpack.c.l.b16 %v1052
    %v1166 = vunpack.c.l.b16 %v1053
    %v1167 = vunpack.c.l.b16 %v1054
    %v1168 = vunpack.c.l.b16 %v1055
    %v1169 = vunpack.c.l.b16 %v1056
    %v1170 = vunpack.c.l.b16 %v1057
    %v1171 = vpack.c.b16 %v1156, %v1155
    %v1172 = vpack.c.b16 %v1158, %v1157
    %v1173 = vpack.c.b16 %v1160, %v1159
    %v1174 = vpack.c.b16 %v1162, %v1161
    %v1175 = vpack.c.b16 %v1164, %v1163
    %v1176 = vpack.c.b16 %v1166, %v1165
    %v1177 = vpack.c.b16 %v1168, %v1167
    %v1178 = vpack.c.b16 %v1170, %v1169
    %1187 = vmatprep.subr.bf16.mxu0 0
    %1188 = vmatpush1.bf16.msra.mxu0 %v1171
    %1189 = vmatprep.subr.bf16.mxu0 0
    %1190 = vmatpush1.bf16.msra.mxu0 %v1172
    %1191 = vmatprep.subr.bf16.mxu0 0
    %1192 = vmatpush1.bf16.msra.mxu0 %v1173
    %1193 = vmatprep.subr.bf16.mxu0 0
    %1194 = vmatpush1.bf16.msra.mxu0 %v1174
    %1195 = vmatprep.subr.bf16.mxu0 0
    %1196 = vmatpush1.bf16.msra.mxu0 %v1175
    %1197 = vmatprep.subr.bf16.mxu0 0
    %1198 = vmatpush1.bf16.msra.mxu0 %v1176
    %1199 = vmatprep.subr.bf16.mxu0 0
    %1200 = vmatpush1.bf16.msra.mxu0 %v1177
    %1201 = vmatprep.subr.bf16.mxu0 0
    %1202 = vmatpush1.bf16.msra.mxu0 %v1178
    %1203 = vmatprep.subr.bf16.mxu0 0
    %1204 = vmatpush1.bf16.msra.mxu0 0
    %1205 = vmatprep.subr.bf16.mxu0 0
    %1206 = vmatpush1.bf16.msra.mxu0 0
    %1207 = vmatprep.subr.bf16.mxu0 0
    %1208 = vmatpush1.bf16.msra.mxu0 0
    %1209 = vmatprep.subr.bf16.mxu0 0
    %1210 = vmatpush1.bf16.msra.mxu0 0
    %1211 = vmatprep.subr.bf16.mxu0 0
    %1212 = vmatpush1.bf16.msra.mxu0 0
    %1213 = vmatprep.subr.bf16.mxu0 0
    %1214 = vmatpush1.bf16.msra.mxu0 0
    %1215 = vmatprep.subr.bf16.mxu0 0
    %1216 = vmatpush1.bf16.msra.mxu0 0
    %1217 = vmatprep.subr.bf16.mxu0 0
    %1218 = vmatpush1.bf16.msra.mxu0 0
    %1219 = vmatprep.mubr.bf16.mxu0 0
    %1220 = vmatmul.mubr.bf16.gmra.mrb[0].mxu0 %v1134
    %v1221 = vpop.f32.mrb[0].mxu0
    %v1222 = vadd.f32 %v1138, %v1221
    %v1223 = vpop.f32.mrb[0].mxu0
    %v1224 = vpop.f32.mrb[0].mxu0
    %v1225 = vadd.f32 %v1138, %v1224
    %v1226 = vpop.f32.mrb[0].mxu0
    %1227 = vdwg.mxu0
    %v1228 = vadd.f32 %v1031, %v1222
    %v1229 = vadd.f32 %v1032, %v1225
    %v1230 = vsel %vm139, %v1228, 0.0
    %1231 = vadd.xlane.f32.xlu0 %v1230
    %v1232 = vpop.xlane.xlu0 %1231
    %v1233 = vsel %vm139, %v1229, 0.0
    %1234 = vadd.xlane.f32.xlu0 %v1233
    %v1235 = vpop.xlane.xlu0 %1234
    %v1236 = vmul.f32 %v1232, %v998
    %v1237 = vmul.f32 %v1235, %v998
    %v1238 = vsub.f32 %v1228, %v1236
    %v1239 = vsub.f32 %v1229, %v1237
    %v1240 = vmul.f32 %v1238, %v1238
    %v1241 = vmul.f32 %v1239, %v1239
    %v1242 = vsel %vm139, %v1240, 0.0
    %1243 = vadd.xlane.f32.xlu0 %v1242
    %v1244 = vpop.xlane.xlu0 %1243
    %v1245 = vsel %vm139, %v1241, 0.0
    %1246 = vadd.xlane.f32.xlu0 %v1245
    %v1247 = vpop.xlane.xlu0 %1246
    %v1248 = vmul.f32 %v1244, %v998
    %v1249 = vmul.f32 %v1247, %v998
    %v1250 = vadd.f32 %v1248, 1e-05
    %v1251 = vadd.f32 %v1249, 1e-05
    %v1252 = vrsqrt.pop %v1250
    %v1253 = vrsqrt.pop %v1251
    %v1254 = vmul.f32 %v1238, %v1252
    %v1255 = vmul.f32 %v1239, %v1253
    %v1256 = vld [vmem:[#allocation4 + $0x8] sm:$0x1]
    %v1257 = vlaneseq
    %v1258 = vshrl.u32 %v1257, 7
    %v1259 = vsub.s32 0, %v1258
    %v1260 = vrot.slane %v1256, %v1259
    %v1261 = vmul.f32 %v1254, %v1260
    %v1262 = vmul.f32 %v1255, %v1260
    %v1263 = vld [vmem:[#allocation4 + $0x9] sm:$0x1]
    %v1264 = vlaneseq
    %v1265 = vshrl.u32 %v1264, 7
    %v1266 = vsub.s32 0, %v1265
    %v1267 = vrot.slane %v1263, %v1266
    %v1268 = vadd.f32 %v1261, %v1267
    %v1269 = vadd.f32 %v1262, %v1267
    %v1270 = vsel %vm139, %v1268, 0.0
    %1271 = vadd.xlane.f32.xlu0 %v1270
    %v1272 = vpop.xlane.xlu0 %1271
    %v1273 = vsel %vm139, %v1269, 0.0
    %1274 = vadd.xlane.f32.xlu0 %v1273
    %v1275 = vpop.xlane.xlu0 %1274
    %v1276 = vmul.f32 %v1272, %v998
    %v1277 = vmul.f32 %v1275, %v998
    %v1278 = vsub.f32 %v1268, %v1276
    %v1279 = vsub.f32 %v1269, %v1277
    %v1280 = vmul.f32 %v1278, %v1278
    %v1281 = vmul.f32 %v1279, %v1279
    %v1282 = vsel %vm139, %v1280, 0.0
    %1283 = vadd.xlane.f32.xlu0 %v1282
    %v1284 = vpop.xlane.xlu0 %1283
    %v1285 = vsel %vm139, %v1281, 0.0
    %1286 = vadd.xlane.f32.xlu0 %v1285
    %v1287 = vpop.xlane.xlu0 %1286
    %v1288 = vmul.f32 %v1284, %v998
    %v1289 = vmul.f32 %v1287, %v998
    %v1290 = vadd.f32 %v1288, 1e-05
    %v1291 = vadd.f32 %v1289, 1e-05
    %v1292 = vrsqrt.pop %v1290
    %v1293 = vrsqrt.pop %v1291
    %v1294 = vmul.f32 %v1278, %v1292
    %v1295 = vmul.f32 %v1279, %v1293
    %v1296 = vld [vmem:[#allocation4 + $0xa] sm:$0x1]
    %v1297 = vlaneseq
    %v1298 = vshrl.u32 %v1297, 7
    %v1299 = vsub.s32 0, %v1298
    %v1300 = vrot.slane %v1296, %v1299
    %v1301 = vmul.f32 %v1294, %v1300
    %v1302 = vmul.f32 %v1295, %v1300
    %v1303 = vld [vmem:[#allocation4 + $0xb] sm:$0x1]
    %v1304 = vlaneseq
    %v1305 = vshrl.u32 %v1304, 7
    %v1306 = vsub.s32 0, %v1305
    %v1307 = vrot.slane %v1303, %v1306
    %v1308 = vadd.f32 %v1301, %v1307
    %v1309 = vadd.f32 %v1302, %v1307
    %v1310 = vld [vmem:[#allocation6 + $0x10] sm:$0xff]
    %v1311 = vld [vmem:[#allocation6 + $0x40] sm:$0xff]
    %v1312 = vld [vmem:[#allocation6 + $0x70] sm:$0xff]
    %v1313 = vld [vmem:[#allocation6 + $0xa0] sm:$0xff]
    %v1314 = vld [vmem:[#allocation6 + $0xd0] sm:$0xff]
    %v1315 = vld [vmem:[#allocation6 + $0x100] sm:$0xff]
    %v1316 = vld [vmem:[#allocation6 + $0x130] sm:$0xff]
    %v1317 = vld [vmem:[#allocation6 + $0x160] sm:$0xff]
    %v1318 = vpack.c.bf16 %v203, %v202
    %v1327 = vunpack.c.l.b16 %v1310
    %v1328 = vunpack.c.h.b16 %v1310
    %v1329 = vunpack.c.l.b16 %v1311
    %v1330 = vunpack.c.h.b16 %v1311
    %v1331 = vunpack.c.l.b16 %v1312
    %v1332 = vunpack.c.h.b16 %v1312
    %v1333 = vunpack.c.l.b16 %v1313
    %v1334 = vunpack.c.h.b16 %v1313
    %v1335 = vunpack.c.l.b16 %v1314
    %v1336 = vunpack.c.h.b16 %v1314
    %v1337 = vunpack.c.l.b16 %v1315
    %v1338 = vunpack.c.h.b16 %v1315
    %v1339 = vunpack.c.l.b16 %v1316
    %v1340 = vunpack.c.h.b16 %v1316
    %v1341 = vunpack.c.l.b16 %v1317
    %v1342 = vunpack.c.h.b16 %v1317
    %v1343 = vpack.c.b16 %v1329, %v1327
    %v1344 = vpack.c.b16 %v1330, %v1328
    %v1345 = vpack.c.b16 %v1333, %v1331
    %v1346 = vpack.c.b16 %v1334, %v1332
    %v1347 = vpack.c.b16 %v1337, %v1335
    %v1348 = vpack.c.b16 %v1338, %v1336
    %v1349 = vpack.c.b16 %v1341, %v1339
    %v1350 = vpack.c.b16 %v1342, %v1340
    %v1360 = vsel %vm139, %v1318, 0
    %1362 = vmatprep.subr.bf16.mxu0 %v1344
    %1363 = vmatpush1.bf16.msra.mxu0 %v1343
    %1364 = vmatprep.subr.bf16.mxu0 %v1346
    %1365 = vmatpush1.bf16.msra.mxu0 %v1345
    %1366 = vmatprep.subr.bf16.mxu0 %v1348
    %1367 = vmatpush1.bf16.msra.mxu0 %v1347
    %1368 = vmatprep.subr.bf16.mxu0 %v1350
    %1369 = vmatpush1.bf16.msra.mxu0 %v1349
    %1370 = vmatprep.subr.bf16.mxu0 0
    %1371 = vmatpush1.bf16.msra.mxu0 0
    %1372 = vmatprep.subr.bf16.mxu0 0
    %1373 = vmatpush1.bf16.msra.mxu0 0
    %1374 = vmatprep.subr.bf16.mxu0 0
    %1375 = vmatpush1.bf16.msra.mxu0 0
    %1376 = vmatprep.subr.bf16.mxu0 0
    %1377 = vmatpush1.bf16.msra.mxu0 0
    %1378 = vmatprep.subr.bf16.mxu0 0
    %1379 = vmatpush1.bf16.msra.mxu0 0
    %1380 = vmatprep.subr.bf16.mxu0 0
    %1381 = vmatpush1.bf16.msra.mxu0 0
    %1382 = vmatprep.subr.bf16.mxu0 0
    %1383 = vmatpush1.bf16.msra.mxu0 0
    %1384 = vmatprep.subr.bf16.mxu0 0
    %1385 = vmatpush1.bf16.msra.mxu0 0
    %1386 = vmatprep.subr.bf16.mxu0 0
    %1387 = vmatpush1.bf16.msra.mxu0 0
    %1388 = vmatprep.subr.bf16.mxu0 0
    %1389 = vmatpush1.bf16.msra.mxu0 0
    %1390 = vmatprep.subr.bf16.mxu0 0
    %1391 = vmatpush1.bf16.msra.mxu0 0
    %1392 = vmatprep.subr.bf16.mxu0 0
    %1393 = vmatpush1.bf16.msra.mxu0 0
    %1394 = vmatprep.mubr.bf16.mxu0 0
    %1395 = vmatmul.mubr.bf16.gmra.mrb[0].mxu0 %v1360
    %v1396 = vpop.f32.mrb[0].mxu0
    %v1397 = vadd.f32 0.0, %v1396
    %v1398 = vpop.f32.mrb[0].mxu0
    %v1399 = vadd.f32 0.0, %v1398
    %v1400 = vpop.f32.mrb[0].mxu0
    %v1401 = vadd.f32 0.0, %v1400
    %v1402 = vpop.f32.mrb[0].mxu0
    %v1403 = vadd.f32 0.0, %v1402
    %1404 = vdwg.mxu0
    %v1405 = vld [vmem:[#allocation4 + $0xc] sm:$0x1]
    %v1406 = vlaneseq
    %v1407 = vshrl.u32 %v1406, 7
    %v1408 = vsub.s32 0, %v1407
    %v1409 = vrot.slane %v1405, %v1408
    %v1410 = vadd.f32 %v1397, %v1409
    %v1411 = vadd.f32 %v1401, %v1409
    %v1412 = vld [vmem:[#allocation4 + $0xd] sm:$0x1]
    %v1413 = vlaneseq
    %v1414 = vshrl.u32 %v1413, 7
    %v1415 = vsub.s32 0, %v1414
    %v1416 = vrot.slane %v1412, %v1415
    %1418 = vrot.lane.b32.xlu0 %v1416, 64
    %v1419 = vpop.permute.xlu0 %1418
    %v1421 = vadd.f32 %v1397, %v1419
    %v1422 = vadd.f32 %v1401, %v1419
    %v1423 = vld [vmem:[#allocation4 + $0xe] sm:$0x1]
    %v1424 = vlaneseq
    %v1425 = vshrl.u32 %v1424, 7
    %v1426 = vsub.s32 0, %v1425
    %v1427 = vrot.slane %v1423, %v1426
    %v1428 = vadd.f32 %v1399, %v1427
    %v1429 = vadd.f32 %v1403, %v1427
    %v1430 = vld [vmem:[#allocation6 + $0x18] sm:$0xf]
    %v1431 = vld [vmem:[#allocation6 + $0x48] sm:$0xf]
    %v1432 = vld [vmem:[#allocation6 + $0x78] sm:$0xf]
    %v1433 = vld [vmem:[#allocation6 + $0xa8] sm:$0xf]
    %v1434 = vld [vmem:[#allocation6 + $0xd8] sm:$0xf]
    %v1435 = vld [vmem:[#allocation6 + $0x108] sm:$0xf]
    %v1436 = vld [vmem:[#allocation6 + $0x138] sm:$0xf]
    %v1437 = vld [vmem:[#allocation6 + $0x168] sm:$0xf]
    %v1438 = vld [vmem:[#allocation4 + $0xf] sm:$0x1]
    %v1439 = vpack.c.bf16 %v1410, %v1410
    %v1440 = vpack.c.bf16 %v1421, %v1421
    %1442 = vrot.lane.b32.xlu0 %v1440, 64
    %v1443 = vpop.permute.xlu0 %1442
    %v1445 = vsel %vm338, %v1439, 0
    %v1448 = vsel %vm338, %v1443, 0
    %1450 = vmatprep.subr.bf16.mxu0 0
    %1451 = vmatpush1.bf16.xpose.msra.mxu0 %v1448
    %1452 = vmatprep.subr.bf16.mxu0 0
    %1453 = vmatpush1.bf16.xpose.msra.mxu0 0
    %1454 = vmatprep.subr.bf16.mxu0 0
    %1455 = vmatpush1.bf16.xpose.msra.mxu0 0
    %1456 = vmatprep.subr.bf16.mxu0 0
    %1457 = vmatpush1.bf16.xpose.msra.mxu0 0
    %1458 = vmatprep.subr.bf16.mxu0 0
    %1459 = vmatpush1.bf16.xpose.msra.mxu0 0
    %1460 = vmatprep.subr.bf16.mxu0 0
    %1461 = vmatpush1.bf16.xpose.msra.mxu0 0
    %1462 = vmatprep.subr.bf16.mxu0 0
    %1463 = vmatpush1.bf16.xpose.msra.mxu0 0
    %1464 = vmatprep.subr.bf16.mxu0 0
    %1465 = vmatpush1.bf16.xpose.msra.mxu0 0
    %1466 = vmatprep.subr.bf16.mxu0 0
    %1467 = vmatpush1.bf16.xpose.msra.mxu0 0
    %1468 = vmatprep.subr.bf16.mxu0 0
    %1469 = vmatpush1.bf16.xpose.msra.mxu0 0
    %1470 = vmatprep.subr.bf16.mxu0 0
    %1471 = vmatpush1.bf16.xpose.msra.mxu0 0
    %1472 = vmatprep.subr.bf16.mxu0 0
    %1473 = vmatpush1.bf16.xpose.msra.mxu0 0
    %1474 = vmatprep.subr.bf16.mxu0 0
    %1475 = vmatpush1.bf16.xpose.msra.mxu0 0
    %1476 = vmatprep.subr.bf16.mxu0 0
    %1477 = vmatpush1.bf16.xpose.msra.mxu0 0
    %1478 = vmatprep.subr.bf16.mxu0 0
    %1479 = vmatpush1.bf16.xpose.msra.mxu0 0
    %1480 = vmatprep.subr.bf16.mxu0 0
    %1481 = vmatpush1.bf16.xpose.msra.mxu0 0
    %1482 = vmatprep.mubr.bf16.mxu0 0
    %1483 = vmatmul.mubr.bf16.gmra.mrb[0].mxu0 %v1445
    %v1484 = vpop.f32.mrb[0].mxu0
    %v1485 = vadd.f32 0.0, %v1484
    %v1486 = vpop.f32.mrb[0].mxu0
    %v1487 = vpop.f32.mrb[0].mxu0
    %v1488 = vpop.f32.mrb[0].mxu0
    %1489 = vdwg.mxu0
    %1491 = vrot.lane.b32.xlu0 %v1439, 96
    %v1492 = vpop.permute.xlu0 %1491
    %1493 = vrot.lane.b32.xlu0 %v1440, 32
    %v1494 = vpop.permute.xlu0 %1493
    %v1496 = vsel %vm338, %v1492, 0
    %v1499 = vsel %vm338, %v1494, 0
    %1501 = vmatprep.subr.bf16.mxu0 0
    %1502 = vmatpush1.bf16.xpose.msra.mxu0 %v1499
    %1503 = vmatprep.subr.bf16.mxu0 0
    %1504 = vmatpush1.bf16.xpose.msra.mxu0 0
    %1505 = vmatprep.subr.bf16.mxu0 0
    %1506 = vmatpush1.bf16.xpose.msra.mxu0 0
    %1507 = vmatprep.subr.bf16.mxu0 0
    %1508 = vmatpush1.bf16.xpose.msra.mxu0 0
    %1509 = vmatprep.subr.bf16.mxu0 0
    %1510 = vmatpush1.bf16.xpose.msra.mxu0 0
    %1511 = vmatprep.subr.bf16.mxu0 0
    %1512 = vmatpush1.bf16.xpose.msra.mxu0 0
    %1513 = vmatprep.subr.bf16.mxu0 0
    %1514 = vmatpush1.bf16.xpose.msra.mxu0 0
    %1515 = vmatprep.subr.bf16.mxu0 0
    %1516 = vmatpush1.bf16.xpose.msra.mxu0 0
    %1517 = vmatprep.subr.bf16.mxu0 0
    %1518 = vmatpush1.bf16.xpose.msra.mxu0 0
    %1519 = vmatprep.subr.bf16.mxu0 0
    %1520 = vmatpush1.bf16.xpose.msra.mxu0 0
    %1521 = vmatprep.subr.bf16.mxu0 0
    %1522 = vmatpush1.bf16.xpose.msra.mxu0 0
    %1523 = vmatprep.subr.bf16.mxu0 0
    %1524 = vmatpush1.bf16.xpose.msra.mxu0 0
    %1525 = vmatprep.subr.bf16.mxu0 0
    %1526 = vmatpush1.bf16.xpose.msra.mxu0 0
    %1527 = vmatprep.subr.bf16.mxu0 0
    %1528 = vmatpush1.bf16.xpose.msra.mxu0 0
    %1529 = vmatprep.subr.bf16.mxu0 0
    %1530 = vmatpush1.bf16.xpose.msra.mxu0 0
    %1531 = vmatprep.subr.bf16.mxu0 0
    %1532 = vmatpush1.bf16.xpose.msra.mxu0 0
    %1533 = vmatprep.mubr.bf16.mxu0 0
    %1534 = vmatmul.mubr.bf16.gmra.mrb[0].mxu0 %v1496
    %v1535 = vpop.f32.mrb[0].mxu0
    %v1536 = vadd.f32 0.0, %v1535
    %v1537 = vpop.f32.mrb[0].mxu0
    %v1538 = vpop.f32.mrb[0].mxu0
    %v1539 = vpop.f32.mrb[0].mxu0
    %1540 = vdwg.mxu0
    %v1541 = vpack.c.bf16 %v1411, %v1411
    %v1542 = vpack.c.bf16 %v1422, %v1422
    %1544 = vrot.lane.b32.xlu0 %v1542, 64
    %v1545 = vpop.permute.xlu0 %1544
    %v1547 = vsel %vm338, %v1541, 0
    %v1550 = vsel %vm338, %v1545, 0
    %1552 = vmatprep.subr.bf16.mxu0 0
    %1553 = vmatpush1.bf16.xpose.msra.mxu0 %v1550
    %1554 = vmatprep.subr.bf16.mxu0 0
    %1555 = vmatpush1.bf16.xpose.msra.mxu0 0
    %1556 = vmatprep.subr.bf16.mxu0 0
    %1557 = vmatpush1.bf16.xpose.msra.mxu0 0
    %1558 = vmatprep.subr.bf16.mxu0 0
    %1559 = vmatpush1.bf16.xpose.msra.mxu0 0
    %1560 = vmatprep.subr.bf16.mxu0 0
    %1561 = vmatpush1.bf16.xpose.msra.mxu0 0
    %1562 = vmatprep.subr.bf16.mxu0 0
    %1563 = vmatpush1.bf16.xpose.msra.mxu0 0
    %1564 = vmatprep.subr.bf16.mxu0 0
    %1565 = vmatpush1.bf16.xpose.msra.mxu0 0
    %1566 = vmatprep.subr.bf16.mxu0 0
    %1567 = vmatpush1.bf16.xpose.msra.mxu0 0
    %1568 = vmatprep.subr.bf16.mxu0 0
    %1569 = vmatpush1.bf16.xpose.msra.mxu0 0
    %1570 = vmatprep.subr.bf16.mxu0 0
    %1571 = vmatpush1.bf16.xpose.msra.mxu0 0
    %1572 = vmatprep.subr.bf16.mxu0 0
    %1573 = vmatpush1.bf16.xpose.msra.mxu0 0
    %1574 = vmatprep.subr.bf16.mxu0 0
    %1575 = vmatpush1.bf16.xpose.msra.mxu0 0
    %1576 = vmatprep.subr.bf16.mxu0 0
    %1577 = vmatpush1.bf16.xpose.msra.mxu0 0
    %1578 = vmatprep.subr.bf16.mxu0 0
    %1579 = vmatpush1.bf16.xpose.msra.mxu0 0
    %1580 = vmatprep.subr.bf16.mxu0 0
    %1581 = vmatpush1.bf16.xpose.msra.mxu0 0
    %1582 = vmatprep.subr.bf16.mxu0 0
    %1583 = vmatpush1.bf16.xpose.msra.mxu0 0
    %1584 = vmatprep.mubr.bf16.mxu0 0
    %1585 = vmatmul.mubr.bf16.gmra.mrb[0].mxu0 %v1547
    %v1586 = vpop.f32.mrb[0].mxu0
    %v1587 = vadd.f32 0.0, %v1586
    %v1588 = vpop.f32.mrb[0].mxu0
    %v1589 = vpop.f32.mrb[0].mxu0
    %v1590 = vpop.f32.mrb[0].mxu0
    %1591 = vdwg.mxu0
    %1593 = vrot.lane.b32.xlu0 %v1541, 96
    %v1594 = vpop.permute.xlu0 %1593
    %1595 = vrot.lane.b32.xlu0 %v1542, 32
    %v1596 = vpop.permute.xlu0 %1595
    %v1598 = vsel %vm338, %v1594, 0
    %v1601 = vsel %vm338, %v1596, 0
    %1603 = vmatprep.subr.bf16.mxu0 0
    %1604 = vmatpush1.bf16.xpose.msra.mxu0 %v1601
    %1605 = vmatprep.subr.bf16.mxu0 0
    %1606 = vmatpush1.bf16.xpose.msra.mxu0 0
    %1607 = vmatprep.subr.bf16.mxu0 0
    %1608 = vmatpush1.bf16.xpose.msra.mxu0 0
    %1609 = vmatprep.subr.bf16.mxu0 0
    %1610 = vmatpush1.bf16.xpose.msra.mxu0 0
    %1611 = vmatprep.subr.bf16.mxu0 0
    %1612 = vmatpush1.bf16.xpose.msra.mxu0 0
    %1613 = vmatprep.subr.bf16.mxu0 0
    %1614 = vmatpush1.bf16.xpose.msra.mxu0 0
    %1615 = vmatprep.subr.bf16.mxu0 0
    %1616 = vmatpush1.bf16.xpose.msra.mxu0 0
    %1617 = vmatprep.subr.bf16.mxu0 0
    %1618 = vmatpush1.bf16.xpose.msra.mxu0 0
    %1619 = vmatprep.subr.bf16.mxu0 0
    %1620 = vmatpush1.bf16.xpose.msra.mxu0 0
    %1621 = vmatprep.subr.bf16.mxu0 0
    %1622 = vmatpush1.bf16.xpose.msra.mxu0 0
    %1623 = vmatprep.subr.bf16.mxu0 0
    %1624 = vmatpush1.bf16.xpose.msra.mxu0 0
    %1625 = vmatprep.subr.bf16.mxu0 0
    %1626 = vmatpush1.bf16.xpose.msra.mxu0 0
    %1627 = vmatprep.subr.bf16.mxu0 0
    %1628 = vmatpush1.bf16.xpose.msra.mxu0 0
    %1629 = vmatprep.subr.bf16.mxu0 0
    %1630 = vmatpush1.bf16.xpose.msra.mxu0 0
    %1631 = vmatprep.subr.bf16.mxu0 0
    %1632 = vmatpush1.bf16.xpose.msra.mxu0 0
    %1633 = vmatprep.subr.bf16.mxu0 0
    %1634 = vmatpush1.bf16.xpose.msra.mxu0 0
    %1635 = vmatprep.mubr.bf16.mxu0 0
    %1636 = vmatmul.mubr.bf16.gmra.mrb[0].mxu0 %v1598
    %v1637 = vpop.f32.mrb[0].mxu0
    %v1638 = vadd.f32 0.0, %v1637
    %v1639 = vpop.f32.mrb[0].mxu0
    %v1640 = vpop.f32.mrb[0].mxu0
    %v1641 = vpop.f32.mrb[0].mxu0
    %1642 = vdwg.mxu0
    %v1643 = vmul.f32 %v1485, 0.17677669
    %v1644 = vmul.f32 %v1536, 0.17677669
    %v1645 = vmul.f32 %v1587, 0.17677669
    %v1646 = vmul.f32 %v1638, 0.17677669
    %v1647 = vsel %vm542, %v1643, -inf
    %1648 = vmax.xlane.f32.xlu0 %v1647
    %v1649 = vpop.xlane.xlu0 %1648
    %v1650 = vsel %vm542, %v1644, -inf
    %1651 = vmax.xlane.f32.xlu0 %v1650
    %v1652 = vpop.xlane.xlu0 %1651
    %v1653 = vsel %vm542, %v1645, -inf
    %1654 = vmax.xlane.f32.xlu0 %v1653
    %v1655 = vpop.xlane.xlu0 %1654
    %v1656 = vsel %vm542, %v1646, -inf
    %1657 = vmax.xlane.f32.xlu0 %v1656
    %v1658 = vpop.xlane.xlu0 %1657
    %v1659 = vsub.f32 %v1643, %v1649
    %v1660 = vsub.f32 %v1644, %v1652
    %v1661 = vsub.f32 %v1645, %v1655
    %v1662 = vsub.f32 %v1646, %v1658
    %v1663 = vmul.f32 %v1659, 1.442695
    %v1664 = vpow.pop %v1663
    %v1665 = vmul.f32 %v1660, 1.442695
    %v1666 = vpow.pop %v1665
    %v1667 = vmul.f32 %v1661, 1.442695
    %v1668 = vpow.pop %v1667
    %v1669 = vmul.f32 %v1662, 1.442695
    %v1670 = vpow.pop %v1669
    %v1671 = vsel %vm542, %v1664, 0.0
    %1672 = vadd.xlane.f32.xlu0 %v1671
    %v1673 = vpop.xlane.xlu0 %1672
    %v1674 = vsel %vm542, %v1666, 0.0
    %1675 = vadd.xlane.f32.xlu0 %v1674
    %v1676 = vpop.xlane.xlu0 %1675
    %v1677 = vsel %vm542, %v1668, 0.0
    %1678 = vadd.xlane.f32.xlu0 %v1677
    %v1679 = vpop.xlane.xlu0 %1678
    %v1680 = vsel %vm542, %v1670, 0.0
    %1681 = vadd.xlane.f32.xlu0 %v1680
    %v1682 = vpop.xlane.xlu0 %1681
    %v1683 = vrcp.pop %v1673
    %v1684 = vrcp.pop %v1676
    %v1685 = vrcp.pop %v1679
    %v1686 = vrcp.pop %v1682
    %v1687 = vmul.f32 %v1664, %v1683
    %v1688 = vmul.f32 %v1666, %v1684
    %v1689 = vmul.f32 %v1668, %v1685
    %v1690 = vmul.f32 %v1670, %v1686
    %v1691 = vpack.c.bf16 %v1687, %v1687
    %v1692 = vpack.c.bf16 %v1428, %v1428
    %v1694 = vsel %vm542, %v1691, 0
    %v1697 = vsel %vm592, %v1692, 0
    %1699 = vmatprep.subr.bf16.mxu0 0
    %1700 = vmatpush1.bf16.msra.mxu0 %v1697
    %1701 = vmatprep.subr.bf16.mxu0 0
    %1702 = vmatpush1.bf16.msra.mxu0 0
    %1703 = vmatprep.subr.bf16.mxu0 0
    %1704 = vmatpush1.bf16.msra.mxu0 0
    %1705 = vmatprep.subr.bf16.mxu0 0
    %1706 = vmatpush1.bf16.msra.mxu0 0
    %1707 = vmatprep.subr.bf16.mxu0 0
    %1708 = vmatpush1.bf16.msra.mxu0 0
    %1709 = vmatprep.subr.bf16.mxu0 0
    %1710 = vmatpush1.bf16.msra.mxu0 0
    %1711 = vmatprep.subr.bf16.mxu0 0
    %1712 = vmatpush1.bf16.msra.mxu0 0
    %1713 = vmatprep.subr.bf16.mxu0 0
    %1714 = vmatpush1.bf16.msra.mxu0 0
    %1715 = vmatprep.subr.bf16.mxu0 0
    %1716 = vmatpush1.bf16.msra.mxu0 0
    %1717 = vmatprep.subr.bf16.mxu0 0
    %1718 = vmatpush1.bf16.msra.mxu0 0
    %1719 = vmatprep.subr.bf16.mxu0 0
    %1720 = vmatpush1.bf16.msra.mxu0 0
    %1721 = vmatprep.subr.bf16.mxu0 0
    %1722 = vmatpush1.bf16.msra.mxu0 0
    %1723 = vmatprep.subr.bf16.mxu0 0
    %1724 = vmatpush1.bf16.msra.mxu0 0
    %1725 = vmatprep.subr.bf16.mxu0 0
    %1726 = vmatpush1.bf16.msra.mxu0 0
    %1727 = vmatprep.subr.bf16.mxu0 0
    %1728 = vmatpush1.bf16.msra.mxu0 0
    %1729 = vmatprep.subr.bf16.mxu0 0
    %1730 = vmatpush1.bf16.msra.mxu0 0
    %1731 = vmatprep.mubr.bf16.mxu0 0
    %1732 = vmatmul.mubr.bf16.gmra.mrb[0].mxu0 %v1694
    %v1733 = vpop.f32.mrb[0].mxu0
    %v1734 = vadd.f32 0.0, %v1733
    %v1735 = vpop.f32.mrb[0].mxu0
    %v1736 = vpop.f32.mrb[0].mxu0
    %v1737 = vpop.f32.mrb[0].mxu0
    %1738 = vdwg.mxu0
    %v1739 = vpack.c.bf16 %v1734, %v1734
    %v1740 = vpack.c.bf16 %v1688, %v1688
    %1742 = vrot.lane.b32.xlu0 %v1692, 96
    %v1743 = vpop.permute.xlu0 %1742
    %v1745 = vsel %vm542, %v1740, 0
    %v1748 = vsel %vm592, %v1743, 0
    %1750 = vmatprep.subr.bf16.mxu0 0
    %1751 = vmatpush1.bf16.msra.mxu0 %v1748
    %1752 = vmatprep.subr.bf16.mxu0 0
    %1753 = vmatpush1.bf16.msra.mxu0 0
    %1754 = vmatprep.subr.bf16.mxu0 0
    %1755 = vmatpush1.bf16.msra.mxu0 0
    %1756 = vmatprep.subr.bf16.mxu0 0
    %1757 = vmatpush1.bf16.msra.mxu0 0
    %1758 = vmatprep.subr.bf16.mxu0 0
    %1759 = vmatpush1.bf16.msra.mxu0 0
    %1760 = vmatprep.subr.bf16.mxu0 0
    %1761 = vmatpush1.bf16.msra.mxu0 0
    %1762 = vmatprep.subr.bf16.mxu0 0
    %1763 = vmatpush1.bf16.msra.mxu0 0
    %1764 = vmatprep.subr.bf16.mxu0 0
    %1765 = vmatpush1.bf16.msra.mxu0 0
    %1766 = vmatprep.subr.bf16.mxu0 0
    %1767 = vmatpush1.bf16.msra.mxu0 0
    %1768 = vmatprep.subr.bf16.mxu0 0
    %1769 = vmatpush1.bf16.msra.mxu0 0
    %1770 = vmatprep.subr.bf16.mxu0 0
    %1771 = vmatpush1.bf16.msra.mxu0 0
    %1772 = vmatprep.subr.bf16.mxu0 0
    %1773 = vmatpush1.bf16.msra.mxu0 0
    %1774 = vmatprep.subr.bf16.mxu0 0
    %1775 = vmatpush1.bf16.msra.mxu0 0
    %1776 = vmatprep.subr.bf16.mxu0 0
    %1777 = vmatpush1.bf16.msra.mxu0 0
    %1778 = vmatprep.subr.bf16.mxu0 0
    %1779 = vmatpush1.bf16.msra.mxu0 0
    %1780 = vmatprep.subr.bf16.mxu0 0
    %1781 = vmatpush1.bf16.msra.mxu0 0
    %1782 = vmatprep.mubr.bf16.mxu0 0
    %1783 = vmatmul.mubr.bf16.gmra.mrb[0].mxu0 %v1745
    %v1784 = vpop.f32.mrb[0].mxu0
    %v1785 = vadd.f32 0.0, %v1784
    %v1786 = vpop.f32.mrb[0].mxu0
    %v1787 = vpop.f32.mrb[0].mxu0
    %v1788 = vpop.f32.mrb[0].mxu0
    %1789 = vdwg.mxu0
    %v1790 = vpack.c.bf16 %v1785, %v1785
    %v1795 = vunpack.c.l.b16 %v1434
    %v1796 = vunpack.c.l.b16 %v1435
    %v1797 = vunpack.c.l.b16 %v1436
    %v1798 = vunpack.c.l.b16 %v1437
    %v1799 = vpack.c.b16 %v1796, %v1795
    %v1800 = vpack.c.b16 %v1798, %v1797
    %v1804 = vsel %vm338, %v1790, 0
    %1806 = vmatprep.subr.bf16.mxu0 0
    %1807 = vmatpush1.bf16.msra.mxu0 %v1799
    %1808 = vmatprep.subr.bf16.mxu0 0
    %1809 = vmatpush1.bf16.msra.mxu0 %v1800
    %1810 = vmatprep.subr.bf16.mxu0 0
    %1811 = vmatpush1.bf16.msra.mxu0 0
    %1812 = vmatprep.subr.bf16.mxu0 0
    %1813 = vmatpush1.bf16.msra.mxu0 0
    %1814 = vmatprep.subr.bf16.mxu0 0
    %1815 = vmatpush1.bf16.msra.mxu0 0
    %1816 = vmatprep.subr.bf16.mxu0 0
    %1817 = vmatpush1.bf16.msra.mxu0 0
    %1818 = vmatprep.subr.bf16.mxu0 0
    %1819 = vmatpush1.bf16.msra.mxu0 0
    %1820 = vmatprep.subr.bf16.mxu0 0
    %1821 = vmatpush1.bf16.msra.mxu0 0
    %1822 = vmatprep.subr.bf16.mxu0 0
    %1823 = vmatpush1.bf16.msra.mxu0 0
    %1824 = vmatprep.subr.bf16.mxu0 0
    %1825 = vmatpush1.bf16.msra.mxu0 0
    %1826 = vmatprep.subr.bf16.mxu0 0
    %1827 = vmatpush1.bf16.msra.mxu0 0
    %1828 = vmatprep.subr.bf16.mxu0 0
    %1829 = vmatpush1.bf16.msra.mxu0 0
    %1830 = vmatprep.subr.bf16.mxu0 0
    %1831 = vmatpush1.bf16.msra.mxu0 0
    %1832 = vmatprep.subr.bf16.mxu0 0
    %1833 = vmatpush1.bf16.msra.mxu0 0
    %1834 = vmatprep.subr.bf16.mxu0 0
    %1835 = vmatpush1.bf16.msra.mxu0 0
    %1836 = vmatprep.subr.bf16.mxu0 0
    %1837 = vmatpush1.bf16.msra.mxu0 0
    %1838 = vmatprep.mubr.bf16.mxu0 0
    %1839 = vmatmul.mubr.bf16.gmra.mrb[0].mxu0 %v1804
    %v1840 = vpop.f32.mrb[0].mxu0
    %v1841 = vadd.f32 0.0, %v1840
    %v1842 = vpop.f32.mrb[0].mxu0
    %v1843 = vpop.f32.mrb[0].mxu0
    %v1844 = vpop.f32.mrb[0].mxu0
    %1845 = vdwg.mxu0
    %v1850 = vunpack.c.l.b16 %v1430
    %v1851 = vunpack.c.l.b16 %v1431
    %v1852 = vunpack.c.l.b16 %v1432
    %v1853 = vunpack.c.l.b16 %v1433
    %v1854 = vpack.c.b16 %v1851, %v1850
    %v1855 = vpack.c.b16 %v1853, %v1852
    %v1859 = vsel %vm338, %v1739, 0
    %1861 = vmatprep.subr.bf16.mxu0 0
    %1862 = vmatpush1.bf16.msra.mxu0 %v1854
    %1863 = vmatprep.subr.bf16.mxu0 0
    %1864 = vmatpush1.bf16.msra.mxu0 %v1855
    %1865 = vmatprep.subr.bf16.mxu0 0
    %1866 = vmatpush1.bf16.msra.mxu0 0
    %1867 = vmatprep.subr.bf16.mxu0 0
    %1868 = vmatpush1.bf16.msra.mxu0 0
    %1869 = vmatprep.subr.bf16.mxu0 0
    %1870 = vmatpush1.bf16.msra.mxu0 0
    %1871 = vmatprep.subr.bf16.mxu0 0
    %1872 = vmatpush1.bf16.msra.mxu0 0
    %1873 = vmatprep.subr.bf16.mxu0 0
    %1874 = vmatpush1.bf16.msra.mxu0 0
    %1875 = vmatprep.subr.bf16.mxu0 0
    %1876 = vmatpush1.bf16.msra.mxu0 0
    %1877 = vmatprep.subr.bf16.mxu0 0
    %1878 = vmatpush1.bf16.msra.mxu0 0
    %1879 = vmatprep.subr.bf16.mxu0 0
    %1880 = vmatpush1.bf16.msra.mxu0 0
    %1881 = vmatprep.subr.bf16.mxu0 0
    %1882 = vmatpush1.bf16.msra.mxu0 0
    %1883 = vmatprep.subr.bf16.mxu0 0
    %1884 = vmatpush1.bf16.msra.mxu0 0
    %1885 = vmatprep.subr.bf16.mxu0 0
    %1886 = vmatpush1.bf16.msra.mxu0 0
    %1887 = vmatprep.subr.bf16.mxu0 0
    %1888 = vmatpush1.bf16.msra.mxu0 0
    %1889 = vmatprep.subr.bf16.mxu0 0
    %1890 = vmatpush1.bf16.msra.mxu0 0
    %1891 = vmatprep.subr.bf16.mxu0 0
    %1892 = vmatpush1.bf16.msra.mxu0 0
    %1893 = vmatprep.mubr.bf16.mxu0 0
    %1894 = vmatmul.mubr.bf16.gmra.mrb[0].mxu0 %v1859
    %v1895 = vpop.f32.mrb[0].mxu0
    %v1896 = vadd.f32 %v1841, %v1895
    %v1897 = vpop.f32.mrb[0].mxu0
    %v1898 = vpop.f32.mrb[0].mxu0
    %v1899 = vpop.f32.mrb[0].mxu0
    %1900 = vdwg.mxu0
    %v1901 = vpack.c.bf16 %v1689, %v1689
    %v1902 = vpack.c.bf16 %v1429, %v1429
    %v1904 = vsel %vm542, %v1901, 0
    %v1907 = vsel %vm592, %v1902, 0
    %1909 = vmatprep.subr.bf16.mxu0 0
    %1910 = vmatpush1.bf16.msra.mxu0 %v1907
    %1911 = vmatprep.subr.bf16.mxu0 0
    %1912 = vmatpush1.bf16.msra.mxu0 0
    %1913 = vmatprep.subr.bf16.mxu0 0
    %1914 = vmatpush1.bf16.msra.mxu0 0
    %1915 = vmatprep.subr.bf16.mxu0 0
    %1916 = vmatpush1.bf16.msra.mxu0 0
    %1917 = vmatprep.subr.bf16.mxu0 0
    %1918 = vmatpush1.bf16.msra.mxu0 0
    %1919 = vmatprep.subr.bf16.mxu0 0
    %1920 = vmatpush1.bf16.msra.mxu0 0
    %1921 = vmatprep.subr.bf16.mxu0 0
    %1922 = vmatpush1.bf16.msra.mxu0 0
    %1923 = vmatprep.subr.bf16.mxu0 0
    %1924 = vmatpush1.bf16.msra.mxu0 0
    %1925 = vmatprep.subr.bf16.mxu0 0
    %1926 = vmatpush1.bf16.msra.mxu0 0
    %1927 = vmatprep.subr.bf16.mxu0 0
    %1928 = vmatpush1.bf16.msra.mxu0 0
    %1929 = vmatprep.subr.bf16.mxu0 0
    %1930 = vmatpush1.bf16.msra.mxu0 0
    %1931 = vmatprep.subr.bf16.mxu0 0
    %1932 = vmatpush1.bf16.msra.mxu0 0
    %1933 = vmatprep.subr.bf16.mxu0 0
    %1934 = vmatpush1.bf16.msra.mxu0 0
    %1935 = vmatprep.subr.bf16.mxu0 0
    %1936 = vmatpush1.bf16.msra.mxu0 0
    %1937 = vmatprep.subr.bf16.mxu0 0
    %1938 = vmatpush1.bf16.msra.mxu0 0
    %1939 = vmatprep.subr.bf16.mxu0 0
    %1940 = vmatpush1.bf16.msra.mxu0 0
    %1941 = vmatprep.mubr.bf16.mxu0 0
    %1942 = vmatmul.mubr.bf16.gmra.mrb[0].mxu0 %v1904
    %v1943 = vpop.f32.mrb[0].mxu0
    %v1944 = vadd.f32 0.0, %v1943
    %v1945 = vpop.f32.mrb[0].mxu0
    %v1946 = vpop.f32.mrb[0].mxu0
    %v1947 = vpop.f32.mrb[0].mxu0
    %1948 = vdwg.mxu0
    %v1949 = vpack.c.bf16 %v1944, %v1944
    %v1950 = vpack.c.bf16 %v1690, %v1690
    %1952 = vrot.lane.b32.xlu0 %v1902, 96
    %v1953 = vpop.permute.xlu0 %1952
    %v1955 = vsel %vm542, %v1950, 0
    %v1958 = vsel %vm592, %v1953, 0
    %1960 = vmatprep.subr.bf16.mxu0 0
    %1961 = vmatpush1.bf16.msra.mxu0 %v1958
    %1962 = vmatprep.subr.bf16.mxu0 0
    %1963 = vmatpush1.bf16.msra.mxu0 0
    %1964 = vmatprep.subr.bf16.mxu0 0
    %1965 = vmatpush1.bf16.msra.mxu0 0
    %1966 = vmatprep.subr.bf16.mxu0 0
    %1967 = vmatpush1.bf16.msra.mxu0 0
    %1968 = vmatprep.subr.bf16.mxu0 0
    %1969 = vmatpush1.bf16.msra.mxu0 0
    %1970 = vmatprep.subr.bf16.mxu0 0
    %1971 = vmatpush1.bf16.msra.mxu0 0
    %1972 = vmatprep.subr.bf16.mxu0 0
    %1973 = vmatpush1.bf16.msra.mxu0 0
    %1974 = vmatprep.subr.bf16.mxu0 0
    %1975 = vmatpush1.bf16.msra.mxu0 0
    %1976 = vmatprep.subr.bf16.mxu0 0
    %1977 = vmatpush1.bf16.msra.mxu0 0
    %1978 = vmatprep.subr.bf16.mxu0 0
    %1979 = vmatpush1.bf16.msra.mxu0 0
    %1980 = vmatprep.subr.bf16.mxu0 0
    %1981 = vmatpush1.bf16.msra.mxu0 0
    %1982 = vmatprep.subr.bf16.mxu0 0
    %1983 = vmatpush1.bf16.msra.mxu0 0
    %1984 = vmatprep.subr.bf16.mxu0 0
    %1985 = vmatpush1.bf16.msra.mxu0 0
    %1986 = vmatprep.subr.bf16.mxu0 0
    %1987 = vmatpush1.bf16.msra.mxu0 0
    %1988 = vmatprep.subr.bf16.mxu0 0
    %1989 = vmatpush1.bf16.msra.mxu0 0
    %1990 = vmatprep.subr.bf16.mxu0 0
    %1991 = vmatpush1.bf16.msra.mxu0 0
    %1992 = vmatprep.mubr.bf16.mxu0 0
    %1993 = vmatmul.mubr.bf16.gmra.mrb[0].mxu0 %v1955
    %v1994 = vpop.f32.mrb[0].mxu0
    %v1995 = vadd.f32 0.0, %v1994
    %v1996 = vpop.f32.mrb[0].mxu0
    %v1997 = vpop.f32.mrb[0].mxu0
    %v1998 = vpop.f32.mrb[0].mxu0
    %1999 = vdwg.mxu0
    %v2000 = vpack.c.bf16 %v1995, %v1995
    %v2002 = vsel %vm338, %v2000, 0
    %2004 = vmatprep.subr.bf16.mxu0 0
    %2005 = vmatpush1.bf16.msra.mxu0 %v1799
    %2006 = vmatprep.subr.bf16.mxu0 0
    %2007 = vmatpush1.bf16.msra.mxu0 %v1800
    %2008 = vmatprep.subr.bf16.mxu0 0
    %2009 = vmatpush1.bf16.msra.mxu0 0
    %2010 = vmatprep.subr.bf16.mxu0 0
    %2011 = vmatpush1.bf16.msra.mxu0 0
    %2012 = vmatprep.subr.bf16.mxu0 0
    %2013 = vmatpush1.bf16.msra.mxu0 0
    %2014 = vmatprep.subr.bf16.mxu0 0
    %2015 = vmatpush1.bf16.msra.mxu0 0
    %2016 = vmatprep.subr.bf16.mxu0 0
    %2017 = vmatpush1.bf16.msra.mxu0 0
    %2018 = vmatprep.subr.bf16.mxu0 0
    %2019 = vmatpush1.bf16.msra.mxu0 0
    %2020 = vmatprep.subr.bf16.mxu0 0
    %2021 = vmatpush1.bf16.msra.mxu0 0
    %2022 = vmatprep.subr.bf16.mxu0 0
    %2023 = vmatpush1.bf16.msra.mxu0 0
    %2024 = vmatprep.subr.bf16.mxu0 0
    %2025 = vmatpush1.bf16.msra.mxu0 0
    %2026 = vmatprep.subr.bf16.mxu0 0
    %2027 = vmatpush1.bf16.msra.mxu0 0
    %2028 = vmatprep.subr.bf16.mxu0 0
    %2029 = vmatpush1.bf16.msra.mxu0 0
    %2030 = vmatprep.subr.bf16.mxu0 0
    %2031 = vmatpush1.bf16.msra.mxu0 0
    %2032 = vmatprep.subr.bf16.mxu0 0
    %2033 = vmatpush1.bf16.msra.mxu0 0
    %2034 = vmatprep.subr.bf16.mxu0 0
    %2035 = vmatpush1.bf16.msra.mxu0 0
    %2036 = vmatprep.mubr.bf16.mxu0 0
    %2037 = vmatmul.mubr.bf16.gmra.mrb[0].mxu0 %v2002
    %v2038 = vpop.f32.mrb[0].mxu0
    %v2039 = vadd.f32 0.0, %v2038
    %v2040 = vpop.f32.mrb[0].mxu0
    %v2041 = vpop.f32.mrb[0].mxu0
    %v2042 = vpop.f32.mrb[0].mxu0
    %2043 = vdwg.mxu0
    %v2045 = vsel %vm338, %v1949, 0
    %2047 = vmatprep.subr.bf16.mxu0 0
    %2048 = vmatpush1.bf16.msra.mxu0 %v1854
    %2049 = vmatprep.subr.bf16.mxu0 0
    %2050 = vmatpush1.bf16.msra.mxu0 %v1855
    %2051 = vmatprep.subr.bf16.mxu0 0
    %2052 = vmatpush1.bf16.msra.mxu0 0
    %2053 = vmatprep.subr.bf16.mxu0 0
    %2054 = vmatpush1.bf16.msra.mxu0 0
    %2055 = vmatprep.subr.bf16.mxu0 0
    %2056 = vmatpush1.bf16.msra.mxu0 0
    %2057 = vmatprep.subr.bf16.mxu0 0
    %2058 = vmatpush1.bf16.msra.mxu0 0
    %2059 = vmatprep.subr.bf16.mxu0 0
    %2060 = vmatpush1.bf16.msra.mxu0 0
    %2061 = vmatprep.subr.bf16.mxu0 0
    %2062 = vmatpush1.bf16.msra.mxu0 0
    %2063 = vmatprep.subr.bf16.mxu0 0
    %2064 = vmatpush1.bf16.msra.mxu0 0
    %2065 = vmatprep.subr.bf16.mxu0 0
    %2066 = vmatpush1.bf16.msra.mxu0 0
    %2067 = vmatprep.subr.bf16.mxu0 0
    %2068 = vmatpush1.bf16.msra.mxu0 0
    %2069 = vmatprep.subr.bf16.mxu0 0
    %2070 = vmatpush1.bf16.msra.mxu0 0
    %2071 = vmatprep.subr.bf16.mxu0 0
    %2072 = vmatpush1.bf16.msra.mxu0 0
    %2073 = vmatprep.subr.bf16.mxu0 0
    %2074 = vmatpush1.bf16.msra.mxu0 0
    %2075 = vmatprep.subr.bf16.mxu0 0
    %2076 = vmatpush1.bf16.msra.mxu0 0
    %2077 = vmatprep.subr.bf16.mxu0 0
    %2078 = vmatpush1.bf16.msra.mxu0 0
    %2079 = vmatprep.mubr.bf16.mxu0 0
    %2080 = vmatmul.mubr.bf16.gmra.mrb[0].mxu0 %v2045
    %v2081 = vpop.f32.mrb[0].mxu0
    %v2082 = vadd.f32 %v2039, %v2081
    %v2083 = vpop.f32.mrb[0].mxu0
    %v2084 = vpop.f32.mrb[0].mxu0
    %v2085 = vpop.f32.mrb[0].mxu0
    %2086 = vdwg.mxu0
    %v2087 = vlaneseq
    %v2088 = vshrl.u32 %v2087, 7
    %v2089 = vsub.s32 0, %v2088
    %v2090 = vrot.slane %v1438, %v2089
    %v2091 = vadd.f32 %v1896, %v2090
    %v2092 = vadd.f32 %v2082, %v2090
    %v2093 = vadd.f32 %v202, %v2091
    %v2094 = vadd.f32 %v203, %v2092
    %v2095 = vsel %vm139, %v2093, 0.0
    %2096 = vadd.xlane.f32.xlu0 %v2095
    %v2097 = vpop.xlane.xlu0 %2096
    %v2098 = vsel %vm139, %v2094, 0.0
    %2099 = vadd.xlane.f32.xlu0 %v2098
    %v2100 = vpop.xlane.xlu0 %2099
    %v2101 = vmul.f32 %v2097, %v998
    %v2102 = vmul.f32 %v2100, %v998
    %v2103 = vsub.f32 %v2093, %v2101
    %v2104 = vsub.f32 %v2094, %v2102
    %v2105 = vmul.f32 %v2103, %v2103
    %v2106 = vmul.f32 %v2104, %v2104
    %v2107 = vsel %vm139, %v2105, 0.0
    %2108 = vadd.xlane.f32.xlu0 %v2107
    %v2109 = vpop.xlane.xlu0 %2108
    %v2110 = vsel %vm139, %v2106, 0.0
    %2111 = vadd.xlane.f32.xlu0 %v2110
    %v2112 = vpop.xlane.xlu0 %2111
    %v2113 = vmul.f32 %v2109, %v998
    %v2114 = vmul.f32 %v2112, %v998
    %v2115 = vadd.f32 %v2113, 1e-05
    %v2116 = vadd.f32 %v2114, 1e-05
    %v2117 = vrsqrt.pop %v2115
    %v2118 = vrsqrt.pop %v2116
    %v2119 = vmul.f32 %v2103, %v2117
    %v2120 = vmul.f32 %v2104, %v2118
    %v2121 = vld [vmem:[#allocation4 + $0x10] sm:$0x1]
    %v2122 = vlaneseq
    %v2123 = vshrl.u32 %v2122, 7
    %v2124 = vsub.s32 0, %v2123
    %v2125 = vrot.slane %v2121, %v2124
    %v2126 = vmul.f32 %v2119, %v2125
    %v2127 = vmul.f32 %v2120, %v2125
    %v2128 = vld [vmem:[#allocation4 + $0x11] sm:$0x1]
    %v2129 = vlaneseq
    %v2130 = vshrl.u32 %v2129, 7
    %v2131 = vsub.s32 0, %v2130
    %v2132 = vrot.slane %v2128, %v2131
    %v2133 = vadd.f32 %v2126, %v2132
    %v2134 = vadd.f32 %v2127, %v2132
    %v2135 = vld [vmem:[#allocation6 + $0x1c] sm:$0xf]
    %v2136 = vld [vmem:[#allocation6 + $0x4c] sm:$0xf]
    %v2137 = vld [vmem:[#allocation6 + $0x7c] sm:$0xf]
    %v2138 = vld [vmem:[#allocation6 + $0xac] sm:$0xf]
    %v2139 = vld [vmem:[#allocation6 + $0xdc] sm:$0xf]
    %v2140 = vld [vmem:[#allocation6 + $0x10c] sm:$0xf]
    %v2141 = vld [vmem:[#allocation6 + $0x13c] sm:$0xf]
    %v2142 = vld [vmem:[#allocation6 + $0x16c] sm:$0xf]
    %v2143 = vpack.c.bf16 %v2134, %v2133
    %v2144 = vld [vmem:[#allocation4 + $0x12] sm:$0x1]
    %v2145 = vlaneseq
    %v2146 = vshrl.u32 %v2145, 7
    %v2147 = vsub.s32 0, %v2146
    %v2148 = vrot.slane %v2144, %v2147
    %v2157 = vunpack.c.l.b16 %v2135
    %v2158 = vunpack.c.l.b16 %v2136
    %v2159 = vunpack.c.l.b16 %v2137
    %v2160 = vunpack.c.l.b16 %v2138
    %v2161 = vunpack.c.l.b16 %v2139
    %v2162 = vunpack.c.l.b16 %v2140
    %v2163 = vunpack.c.l.b16 %v2141
    %v2164 = vunpack.c.l.b16 %v2142
    %v2165 = vpack.c.b16 %v2158, %v2157
    %v2166 = vpack.c.b16 %v2160, %v2159
    %v2167 = vpack.c.b16 %v2162, %v2161
    %v2168 = vpack.c.b16 %v2164, %v2163
    %v2174 = vsel %vm139, %v2143, 0
    %2176 = vmatprep.subr.bf16.mxu0 0
    %2177 = vmatpush1.bf16.msra.mxu0 %v2165
    %2178 = vmatprep.subr.bf16.mxu0 0
    %2179 = vmatpush1.bf16.msra.mxu0 %v2166
    %2180 = vmatprep.subr.bf16.mxu0 0
    %2181 = vmatpush1.bf16.msra.mxu0 %v2167
    %2182 = vmatprep.subr.bf16.mxu0 0
    %2183 = vmatpush1.bf16.msra.mxu0 %v2168
    %2184 = vmatprep.subr.bf16.mxu0 0
    %2185 = vmatpush1.bf16.msra.mxu0 0
    %2186 = vmatprep.subr.bf16.mxu0 0
    %2187 = vmatpush1.bf16.msra.mxu0 0
    %2188 = vmatprep.subr.bf16.mxu0 0
    %2189 = vmatpush1.bf16.msra.mxu0 0
    %2190 = vmatprep.subr.bf16.mxu0 0
    %2191 = vmatpush1.bf16.msra.mxu0 0
    %2192 = vmatprep.subr.bf16.mxu0 0
    %2193 = vmatpush1.bf16.msra.mxu0 0
    %2194 = vmatprep.subr.bf16.mxu0 0
    %2195 = vmatpush1.bf16.msra.mxu0 0
    %2196 = vmatprep.subr.bf16.mxu0 0
    %2197 = vmatpush1.bf16.msra.mxu0 0
    %2198 = vmatprep.subr.bf16.mxu0 0
    %2199 = vmatpush1.bf16.msra.mxu0 0
    %2200 = vmatprep.subr.bf16.mxu0 0
    %2201 = vmatpush1.bf16.msra.mxu0 0
    %2202 = vmatprep.subr.bf16.mxu0 0
    %2203 = vmatpush1.bf16.msra.mxu0 0
    %2204 = vmatprep.subr.bf16.mxu0 0
    %2205 = vmatpush1.bf16.msra.mxu0 0
    %2206 = vmatprep.subr.bf16.mxu0 0
    %2207 = vmatpush1.bf16.msra.mxu0 0
    %2208 = vmatprep.mubr.bf16.mxu0 0
    %2209 = vmatmul.mubr.bf16.gmra.mrb[0].mxu0 %v2174
    %v2210 = vpop.f32.mrb[0].mxu0
    %v2211 = vadd.f32 %v2148, %v2210
    %v2212 = vpop.f32.mrb[0].mxu0
    %v2213 = vpop.f32.mrb[0].mxu0
    %v2214 = vadd.f32 %v2148, %v2213
    %v2215 = vpop.f32.mrb[0].mxu0
    %2216 = vdwg.mxu0
    %v2217 = vld [vmem:[#allocation6 + $0x20] sm:$0xf]
    %v2218 = vld [vmem:[#allocation6 + $0x50] sm:$0xf]
    %v2219 = vld [vmem:[#allocation6 + $0x80] sm:$0xf]
    %v2220 = vld [vmem:[#allocation6 + $0xb0] sm:$0xf]
    %v2221 = vld [vmem:[#allocation6 + $0xe0] sm:$0xf]
    %v2222 = vld [vmem:[#allocation6 + $0x110] sm:$0xf]
    %v2223 = vld [vmem:[#allocation6 + $0x140] sm:$0xf]
    %v2224 = vld [vmem:[#allocation6 + $0x170] sm:$0xf]
    %v2225 = vpack.c.bf16 %v1309, %v1308
    %v2234 = vunpack.c.l.b16 %v2217
    %v2235 = vunpack.c.l.b16 %v2218
    %v2236 = vunpack.c.l.b16 %v2219
    %v2237 = vunpack.c.l.b16 %v2220
    %v2238 = vunpack.c.l.b16 %v2221
    %v2239 = vunpack.c.l.b16 %v2222
    %v2240 = vunpack.c.l.b16 %v2223
    %v2241 = vunpack.c.l.b16 %v2224
    %v2242 = vpack.c.b16 %v2235, %v2234
    %v2243 = vpack.c.b16 %v2237, %v2236
    %v2244 = vpack.c.b16 %v2239, %v2238
    %v2245 = vpack.c.b16 %v2241, %v2240
    %v2251 = vsel %vm139, %v2225, 0
    %2253 = vmatprep.subr.bf16.mxu0 0
    %2254 = vmatpush1.bf16.msra.mxu0 %v2242
    %2255 = vmatprep.subr.bf16.mxu0 0
    %2256 = vmatpush1.bf16.msra.mxu0 %v2243
    %2257 = vmatprep.subr.bf16.mxu0 0
    %2258 = vmatpush1.bf16.msra.mxu0 %v2244
    %2259 = vmatprep.subr.bf16.mxu0 0
    %2260 = vmatpush1.bf16.msra.mxu0 %v2245
    %2261 = vmatprep.subr.bf16.mxu0 0
    %2262 = vmatpush1.bf16.msra.mxu0 0
    %2263 = vmatprep.subr.bf16.mxu0 0
    %2264 = vmatpush1.bf16.msra.mxu0 0
    %2265 = vmatprep.subr.bf16.mxu0 0
    %2266 = vmatpush1.bf16.msra.mxu0 0
    %2267 = vmatprep.subr.bf16.mxu0 0
    %2268 = vmatpush1.bf16.msra.mxu0 0
    %2269 = vmatprep.subr.bf16.mxu0 0
    %2270 = vmatpush1.bf16.msra.mxu0 0
    %2271 = vmatprep.subr.bf16.mxu0 0
    %2272 = vmatpush1.bf16.msra.mxu0 0
    %2273 = vmatprep.subr.bf16.mxu0 0
    %2274 = vmatpush1.bf16.msra.mxu0 0
    %2275 = vmatprep.subr.bf16.mxu0 0
    %2276 = vmatpush1.bf16.msra.mxu0 0
    %2277 = vmatprep.subr.bf16.mxu0 0
    %2278 = vmatpush1.bf16.msra.mxu0 0
    %2279 = vmatprep.subr.bf16.mxu0 0
    %2280 = vmatpush1.bf16.msra.mxu0 0
    %2281 = vmatprep.subr.bf16.mxu0 0
    %2282 = vmatpush1.bf16.msra.mxu0 0
    %2283 = vmatprep.subr.bf16.mxu0 0
    %2284 = vmatpush1.bf16.msra.mxu0 0
    %2285 = vmatprep.mubr.bf16.mxu0 0
    %2286 = vmatmul.mubr.bf16.gmra.mrb[0].mxu0 %v2251
    %v2287 = vpop.f32.mrb[0].mxu0
    %v2288 = vadd.f32 0.0, %v2287
    %v2289 = vpop.f32.mrb[0].mxu0
    %v2290 = vpop.f32.mrb[0].mxu0
    %v2291 = vadd.f32 0.0, %v2290
    %v2292 = vpop.f32.mrb[0].mxu0
    %2293 = vdwg.mxu0
    %v2294 = vld [vmem:[#allocation4 + $0x13] sm:$0x1]
    %v2295 = vlaneseq
    %v2296 = vshrl.u32 %v2295, 7
    %v2297 = vsub.s32 0, %v2296
    %v2298 = vrot.slane %v2294, %v2297
    %v2299 = vadd.f32 %v2288, %v2298
    %v2300 = vadd.f32 %v2291, %v2298
    %v2301 = vld [vmem:[#allocation4 + $0x14] sm:$0x1]
    %v2302 = vlaneseq
    %v2303 = vshrl.u32 %v2302, 7
    %v2304 = vsub.s32 0, %v2303
    %v2305 = vrot.slane %v2301, %v2304
    %2307 = vrot.lane.b32.xlu0 %v2305, 64
    %v2308 = vpop.permute.xlu0 %2307
    %v2310 = vadd.f32 %v2288, %v2308
    %v2311 = vadd.f32 %v2291, %v2308
    %v2312 = vld [vmem:[#allocation6 + $0x24] sm:$0xf]
    %v2313 = vld [vmem:[#allocation6 + $0x54] sm:$0xf]
    %v2314 = vld [vmem:[#allocation6 + $0x84] sm:$0xf]
    %v2315 = vld [vmem:[#allocation6 + $0xb4] sm:$0xf]
    %v2316 = vld [vmem:[#allocation6 + $0xe4] sm:$0xf]
    %v2317 = vld [vmem:[#allocation6 + $0x114] sm:$0xf]
    %v2318 = vld [vmem:[#allocation6 + $0x144] sm:$0xf]
    %v2319 = vld [vmem:[#allocation6 + $0x174] sm:$0xf]
    %v2320 = vld [vmem:[#allocation4 + $0x15] sm:$0x1]
    %v2321 = vpack.c.bf16 %v2211, %v2211
    %v2322 = vpack.c.bf16 %v2299, %v2299
    %v2324 = vsel %vm338, %v2321, 0
    %v2327 = vsel %vm338, %v2322, 0
    %2329 = vmatprep.subr.bf16.mxu0 0
    %2330 = vmatpush1.bf16.xpose.msra.mxu0 %v2327
    %2331 = vmatprep.subr.bf16.mxu0 0
    %2332 = vmatpush1.bf16.xpose.msra.mxu0 0
    %2333 = vmatprep.subr.bf16.mxu0 0
    %2334 = vmatpush1.bf16.xpose.msra.mxu0 0
    %2335 = vmatprep.subr.bf16.mxu0 0
    %2336 = vmatpush1.bf16.xpose.msra.mxu0 0
    %2337 = vmatprep.subr.bf16.mxu0 0
    %2338 = vmatpush1.bf16.xpose.msra.mxu0 0
    %2339 = vmatprep.subr.bf16.mxu0 0
    %2340 = vmatpush1.bf16.xpose.msra.mxu0 0
    %2341 = vmatprep.subr.bf16.mxu0 0
    %2342 = vmatpush1.bf16.xpose.msra.mxu0 0
    %2343 = vmatprep.subr.bf16.mxu0 0
    %2344 = vmatpush1.bf16.xpose.msra.mxu0 0
    %2345 = vmatprep.subr.bf16.mxu0 0
    %2346 = vmatpush1.bf16.xpose.msra.mxu0 0
    %2347 = vmatprep.subr.bf16.mxu0 0
    %2348 = vmatpush1.bf16.xpose.msra.mxu0 0
    %2349 = vmatprep.subr.bf16.mxu0 0
    %2350 = vmatpush1.bf16.xpose.msra.mxu0 0
    %2351 = vmatprep.subr.bf16.mxu0 0
    %2352 = vmatpush1.bf16.xpose.msra.mxu0 0
    %2353 = vmatprep.subr.bf16.mxu0 0
    %2354 = vmatpush1.bf16.xpose.msra.mxu0 0
    %2355 = vmatprep.subr.bf16.mxu0 0
    %2356 = vmatpush1.bf16.xpose.msra.mxu0 0
    %2357 = vmatprep.subr.bf16.mxu0 0
    %2358 = vmatpush1.bf16.xpose.msra.mxu0 0
    %2359 = vmatprep.subr.bf16.mxu0 0
    %2360 = vmatpush1.bf16.xpose.msra.mxu0 0
    %2361 = vmatprep.mubr.bf16.mxu0 0
    %2362 = vmatmul.mubr.bf16.gmra.mrb[0].mxu0 %v2324
    %v2363 = vpop.f32.mrb[0].mxu0
    %v2364 = vadd.f32 0.0, %v2363
    %v2365 = vpop.f32.mrb[0].mxu0
    %v2366 = vpop.f32.mrb[0].mxu0
    %v2367 = vpop.f32.mrb[0].mxu0
    %2368 = vdwg.mxu0
    %2370 = vrot.lane.b32.xlu0 %v2321, 96
    %v2371 = vpop.permute.xlu0 %2370
    %2373 = vrot.lane.b32.xlu0 %v2322, 96
    %v2374 = vpop.permute.xlu0 %2373
    %v2376 = vsel %vm338, %v2371, 0
    %v2379 = vsel %vm338, %v2374, 0
    %2381 = vmatprep.subr.bf16.mxu0 0
    %2382 = vmatpush1.bf16.xpose.msra.mxu0 %v2379
    %2383 = vmatprep.subr.bf16.mxu0 0
    %2384 = vmatpush1.bf16.xpose.msra.mxu0 0
    %2385 = vmatprep.subr.bf16.mxu0 0
    %2386 = vmatpush1.bf16.xpose.msra.mxu0 0
    %2387 = vmatprep.subr.bf16.mxu0 0
    %2388 = vmatpush1.bf16.xpose.msra.mxu0 0
    %2389 = vmatprep.subr.bf16.mxu0 0
    %2390 = vmatpush1.bf16.xpose.msra.mxu0 0
    %2391 = vmatprep.subr.bf16.mxu0 0
    %2392 = vmatpush1.bf16.xpose.msra.mxu0 0
    %2393 = vmatprep.subr.bf16.mxu0 0
    %2394 = vmatpush1.bf16.xpose.msra.mxu0 0
    %2395 = vmatprep.subr.bf16.mxu0 0
    %2396 = vmatpush1.bf16.xpose.msra.mxu0 0
    %2397 = vmatprep.subr.bf16.mxu0 0
    %2398 = vmatpush1.bf16.xpose.msra.mxu0 0
    %2399 = vmatprep.subr.bf16.mxu0 0
    %2400 = vmatpush1.bf16.xpose.msra.mxu0 0
    %2401 = vmatprep.subr.bf16.mxu0 0
    %2402 = vmatpush1.bf16.xpose.msra.mxu0 0
    %2403 = vmatprep.subr.bf16.mxu0 0
    %2404 = vmatpush1.bf16.xpose.msra.mxu0 0
    %2405 = vmatprep.subr.bf16.mxu0 0
    %2406 = vmatpush1.bf16.xpose.msra.mxu0 0
    %2407 = vmatprep.subr.bf16.mxu0 0
    %2408 = vmatpush1.bf16.xpose.msra.mxu0 0
    %2409 = vmatprep.subr.bf16.mxu0 0
    %2410 = vmatpush1.bf16.xpose.msra.mxu0 0
    %2411 = vmatprep.subr.bf16.mxu0 0
    %2412 = vmatpush1.bf16.xpose.msra.mxu0 0
    %2413 = vmatprep.mubr.bf16.mxu0 0
    %2414 = vmatmul.mubr.bf16.gmra.mrb[0].mxu0 %v2376
    %v2415 = vpop.f32.mrb[0].mxu0
    %v2416 = vadd.f32 0.0, %v2415
    %v2417 = vpop.f32.mrb[0].mxu0
    %v2418 = vpop.f32.mrb[0].mxu0
    %v2419 = vpop.f32.mrb[0].mxu0
    %2420 = vdwg.mxu0
    %v2421 = vpack.c.bf16 %v2214, %v2214
    %v2422 = vpack.c.bf16 %v2300, %v2300
    %v2424 = vsel %vm338, %v2421, 0
    %v2427 = vsel %vm338, %v2422, 0
    %2429 = vmatprep.subr.bf16.mxu0 0
    %2430 = vmatpush1.bf16.xpose.msra.mxu0 %v2427
    %2431 = vmatprep.subr.bf16.mxu0 0
    %2432 = vmatpush1.bf16.xpose.msra.mxu0 0
    %2433 = vmatprep.subr.bf16.mxu0 0
    %2434 = vmatpush1.bf16.xpose.msra.mxu0 0
    %2435 = vmatprep.subr.bf16.mxu0 0
    %2436 = vmatpush1.bf16.xpose.msra.mxu0 0
    %2437 = vmatprep.subr.bf16.mxu0 0
    %2438 = vmatpush1.bf16.xpose.msra.mxu0 0
    %2439 = vmatprep.subr.bf16.mxu0 0
    %2440 = vmatpush1.bf16.xpose.msra.mxu0 0
    %2441 = vmatprep.subr.bf16.mxu0 0
    %2442 = vmatpush1.bf16.xpose.msra.mxu0 0
    %2443 = vmatprep.subr.bf16.mxu0 0
    %2444 = vmatpush1.bf16.xpose.msra.mxu0 0
    %2445 = vmatprep.subr.bf16.mxu0 0
    %2446 = vmatpush1.bf16.xpose.msra.mxu0 0
    %2447 = vmatprep.subr.bf16.mxu0 0
    %2448 = vmatpush1.bf16.xpose.msra.mxu0 0
    %2449 = vmatprep.subr.bf16.mxu0 0
    %2450 = vmatpush1.bf16.xpose.msra.mxu0 0
    %2451 = vmatprep.subr.bf16.mxu0 0
    %2452 = vmatpush1.bf16.xpose.msra.mxu0 0
    %2453 = vmatprep.subr.bf16.mxu0 0
    %2454 = vmatpush1.bf16.xpose.msra.mxu0 0
    %2455 = vmatprep.subr.bf16.mxu0 0
    %2456 = vmatpush1.bf16.xpose.msra.mxu0 0
    %2457 = vmatprep.subr.bf16.mxu0 0
    %2458 = vmatpush1.bf16.xpose.msra.mxu0 0
    %2459 = vmatprep.subr.bf16.mxu0 0
    %2460 = vmatpush1.bf16.xpose.msra.mxu0 0
    %2461 = vmatprep.mubr.bf16.mxu0 0
    %2462 = vmatmul.mubr.bf16.gmra.mrb[0].mxu0 %v2424
    %v2463 = vpop.f32.mrb[0].mxu0
    %v2464 = vadd.f32 0.0, %v2463
    %v2465 = vpop.f32.mrb[0].mxu0
    %v2466 = vpop.f32.mrb[0].mxu0
    %v2467 = vpop.f32.mrb[0].mxu0
    %2468 = vdwg.mxu0
    %2470 = vrot.lane.b32.xlu0 %v2421, 96
    %v2471 = vpop.permute.xlu0 %2470
    %2473 = vrot.lane.b32.xlu0 %v2422, 96
    %v2474 = vpop.permute.xlu0 %2473
    %v2476 = vsel %vm338, %v2471, 0
    %v2479 = vsel %vm338, %v2474, 0
    %2481 = vmatprep.subr.bf16.mxu0 0
    %2482 = vmatpush1.bf16.xpose.msra.mxu0 %v2479
    %2483 = vmatprep.subr.bf16.mxu0 0
    %2484 = vmatpush1.bf16.xpose.msra.mxu0 0
    %2485 = vmatprep.subr.bf16.mxu0 0
    %2486 = vmatpush1.bf16.xpose.msra.mxu0 0
    %2487 = vmatprep.subr.bf16.mxu0 0
    %2488 = vmatpush1.bf16.xpose.msra.mxu0 0
    %2489 = vmatprep.subr.bf16.mxu0 0
    %2490 = vmatpush1.bf16.xpose.msra.mxu0 0
    %2491 = vmatprep.subr.bf16.mxu0 0
    %2492 = vmatpush1.bf16.xpose.msra.mxu0 0
    %2493 = vmatprep.subr.bf16.mxu0 0
    %2494 = vmatpush1.bf16.xpose.msra.mxu0 0
    %2495 = vmatprep.subr.bf16.mxu0 0
    %2496 = vmatpush1.bf16.xpose.msra.mxu0 0
    %2497 = vmatprep.subr.bf16.mxu0 0
    %2498 = vmatpush1.bf16.xpose.msra.mxu0 0
    %2499 = vmatprep.subr.bf16.mxu0 0
    %2500 = vmatpush1.bf16.xpose.msra.mxu0 0
    %2501 = vmatprep.subr.bf16.mxu0 0
    %2502 = vmatpush1.bf16.xpose.msra.mxu0 0
    %2503 = vmatprep.subr.bf16.mxu0 0
    %2504 = vmatpush1.bf16.xpose.msra.mxu0 0
    %2505 = vmatprep.subr.bf16.mxu0 0
    %2506 = vmatpush1.bf16.xpose.msra.mxu0 0
    %2507 = vmatprep.subr.bf16.mxu0 0
    %2508 = vmatpush1.bf16.xpose.msra.mxu0 0
    %2509 = vmatprep.subr.bf16.mxu0 0
    %2510 = vmatpush1.bf16.xpose.msra.mxu0 0
    %2511 = vmatprep.subr.bf16.mxu0 0
    %2512 = vmatpush1.bf16.xpose.msra.mxu0 0
    %2513 = vmatprep.mubr.bf16.mxu0 0
    %2514 = vmatmul.mubr.bf16.gmra.mrb[0].mxu0 %v2476
    %v2515 = vpop.f32.mrb[0].mxu0
    %v2516 = vadd.f32 0.0, %v2515
    %v2517 = vpop.f32.mrb[0].mxu0
    %v2518 = vpop.f32.mrb[0].mxu0
    %v2519 = vpop.f32.mrb[0].mxu0
    %2520 = vdwg.mxu0
    %v2521 = vmul.f32 %v2364, 0.17677669
    %v2522 = vmul.f32 %v2416, 0.17677669
    %v2523 = vmul.f32 %v2464, 0.17677669
    %v2524 = vmul.f32 %v2516, 0.17677669
    %v2525 = vsel %vm542, %v2521, -inf
    %2526 = vmax.xlane.f32.xlu0 %v2525
    %v2527 = vpop.xlane.xlu0 %2526
    %v2528 = vsel %vm542, %v2522, -inf
    %2529 = vmax.xlane.f32.xlu0 %v2528
    %v2530 = vpop.xlane.xlu0 %2529
    %v2531 = vsel %vm542, %v2523, -inf
    %2532 = vmax.xlane.f32.xlu0 %v2531
    %v2533 = vpop.xlane.xlu0 %2532
    %v2534 = vsel %vm542, %v2524, -inf
    %2535 = vmax.xlane.f32.xlu0 %v2534
    %v2536 = vpop.xlane.xlu0 %2535
    %v2537 = vsub.f32 %v2521, %v2527
    %v2538 = vsub.f32 %v2522, %v2530
    %v2539 = vsub.f32 %v2523, %v2533
    %v2540 = vsub.f32 %v2524, %v2536
    %v2541 = vmul.f32 %v2537, 1.442695
    %v2542 = vpow.pop %v2541
    %v2543 = vmul.f32 %v2538, 1.442695
    %v2544 = vpow.pop %v2543
    %v2545 = vmul.f32 %v2539, 1.442695
    %v2546 = vpow.pop %v2545
    %v2547 = vmul.f32 %v2540, 1.442695
    %v2548 = vpow.pop %v2547
    %v2549 = vsel %vm542, %v2542, 0.0
    %2550 = vadd.xlane.f32.xlu0 %v2549
    %v2551 = vpop.xlane.xlu0 %2550
    %v2552 = vsel %vm542, %v2544, 0.0
    %2553 = vadd.xlane.f32.xlu0 %v2552
    %v2554 = vpop.xlane.xlu0 %2553
    %v2555 = vsel %vm542, %v2546, 0.0
    %2556 = vadd.xlane.f32.xlu0 %v2555
    %v2557 = vpop.xlane.xlu0 %2556
    %v2558 = vsel %vm542, %v2548, 0.0
    %2559 = vadd.xlane.f32.xlu0 %v2558
    %v2560 = vpop.xlane.xlu0 %2559
    %v2561 = vrcp.pop %v2551
    %v2562 = vrcp.pop %v2554
    %v2563 = vrcp.pop %v2557
    %v2564 = vrcp.pop %v2560
    %v2565 = vmul.f32 %v2542, %v2561
    %v2566 = vmul.f32 %v2544, %v2562
    %v2567 = vmul.f32 %v2546, %v2563
    %v2568 = vmul.f32 %v2548, %v2564
    %v2569 = vpack.c.bf16 %v2565, %v2565
    %v2570 = vpack.c.bf16 %v2310, %v2310
    %2572 = vrot.lane.b32.xlu0 %v2570, 64
    %v2573 = vpop.permute.xlu0 %2572
    %v2575 = vsel %vm542, %v2569, 0
    %v2578 = vsel %vm592, %v2573, 0
    %2580 = vmatprep.subr.bf16.mxu0 0
    %2581 = vmatpush1.bf16.msra.mxu0 %v2578
    %2582 = vmatprep.subr.bf16.mxu0 0
    %2583 = vmatpush1.bf16.msra.mxu0 0
    %2584 = vmatprep.subr.bf16.mxu0 0
    %2585 = vmatpush1.bf16.msra.mxu0 0
    %2586 = vmatprep.subr.bf16.mxu0 0
    %2587 = vmatpush1.bf16.msra.mxu0 0
    %2588 = vmatprep.subr.bf16.mxu0 0
    %2589 = vmatpush1.bf16.msra.mxu0 0
    %2590 = vmatprep.subr.bf16.mxu0 0
    %2591 = vmatpush1.bf16.msra.mxu0 0
    %2592 = vmatprep.subr.bf16.mxu0 0
    %2593 = vmatpush1.bf16.msra.mxu0 0
    %2594 = vmatprep.subr.bf16.mxu0 0
    %2595 = vmatpush1.bf16.msra.mxu0 0
    %2596 = vmatprep.subr.bf16.mxu0 0
    %2597 = vmatpush1.bf16.msra.mxu0 0
    %2598 = vmatprep.subr.bf16.mxu0 0
    %2599 = vmatpush1.bf16.msra.mxu0 0
    %2600 = vmatprep.subr.bf16.mxu0 0
    %2601 = vmatpush1.bf16.msra.mxu0 0
    %2602 = vmatprep.subr.bf16.mxu0 0
    %2603 = vmatpush1.bf16.msra.mxu0 0
    %2604 = vmatprep.subr.bf16.mxu0 0
    %2605 = vmatpush1.bf16.msra.mxu0 0
    %2606 = vmatprep.subr.bf16.mxu0 0
    %2607 = vmatpush1.bf16.msra.mxu0 0
    %2608 = vmatprep.subr.bf16.mxu0 0
    %2609 = vmatpush1.bf16.msra.mxu0 0
    %2610 = vmatprep.subr.bf16.mxu0 0
    %2611 = vmatpush1.bf16.msra.mxu0 0
    %2612 = vmatprep.mubr.bf16.mxu0 0
    %2613 = vmatmul.mubr.bf16.gmra.mrb[0].mxu0 %v2575
    %v2614 = vpop.f32.mrb[0].mxu0
    %v2615 = vadd.f32 0.0, %v2614
    %v2616 = vpop.f32.mrb[0].mxu0
    %v2617 = vpop.f32.mrb[0].mxu0
    %v2618 = vpop.f32.mrb[0].mxu0
    %2619 = vdwg.mxu0
    %v2620 = vpack.c.bf16 %v2615, %v2615
    %v2621 = vpack.c.bf16 %v2566, %v2566
    %2622 = vrot.lane.b32.xlu0 %v2570, 32
    %v2623 = vpop.permute.xlu0 %2622
    %v2625 = vsel %vm542, %v2621, 0
    %v2628 = vsel %vm592, %v2623, 0
    %2630 = vmatprep.subr.bf16.mxu0 0
    %2631 = vmatpush1.bf16.msra.mxu0 %v2628
    %2632 = vmatprep.subr.bf16.mxu0 0
    %2633 = vmatpush1.bf16.msra.mxu0 0
    %2634 = vmatprep.subr.bf16.mxu0 0
    %2635 = vmatpush1.bf16.msra.mxu0 0
    %2636 = vmatprep.subr.bf16.mxu0 0
    %2637 = vmatpush1.bf16.msra.mxu0 0
    %2638 = vmatprep.subr.bf16.mxu0 0
    %2639 = vmatpush1.bf16.msra.mxu0 0
    %2640 = vmatprep.subr.bf16.mxu0 0
    %2641 = vmatpush1.bf16.msra.mxu0 0
    %2642 = vmatprep.subr.bf16.mxu0 0
    %2643 = vmatpush1.bf16.msra.mxu0 0
    %2644 = vmatprep.subr.bf16.mxu0 0
    %2645 = vmatpush1.bf16.msra.mxu0 0
    %2646 = vmatprep.subr.bf16.mxu0 0
    %2647 = vmatpush1.bf16.msra.mxu0 0
    %2648 = vmatprep.subr.bf16.mxu0 0
    %2649 = vmatpush1.bf16.msra.mxu0 0
    %2650 = vmatprep.subr.bf16.mxu0 0
    %2651 = vmatpush1.bf16.msra.mxu0 0
    %2652 = vmatprep.subr.bf16.mxu0 0
    %2653 = vmatpush1.bf16.msra.mxu0 0
    %2654 = vmatprep.subr.bf16.mxu0 0
    %2655 = vmatpush1.bf16.msra.mxu0 0
    %2656 = vmatprep.subr.bf16.mxu0 0
    %2657 = vmatpush1.bf16.msra.mxu0 0
    %2658 = vmatprep.subr.bf16.mxu0 0
    %2659 = vmatpush1.bf16.msra.mxu0 0
    %2660 = vmatprep.subr.bf16.mxu0 0
    %2661 = vmatpush1.bf16.msra.mxu0 0
    %2662 = vmatprep.mubr.bf16.mxu0 0
    %2663 = vmatmul.mubr.bf16.gmra.mrb[0].mxu0 %v2625
    %v2664 = vpop.f32.mrb[0].mxu0
    %v2665 = vadd.f32 0.0, %v2664
    %v2666 = vpop.f32.mrb[0].mxu0
    %v2667 = vpop.f32.mrb[0].mxu0
    %v2668 = vpop.f32.mrb[0].mxu0
    %2669 = vdwg.mxu0
    %v2670 = vpack.c.bf16 %v2665, %v2665
    %v2675 = vunpack.c.l.b16 %v2316
    %v2676 = vunpack.c.l.b16 %v2317
    %v2677 = vunpack.c.l.b16 %v2318
    %v2678 = vunpack.c.l.b16 %v2319
    %v2679 = vpack.c.b16 %v2676, %v2675
    %v2680 = vpack.c.b16 %v2678, %v2677
    %v2684 = vsel %vm338, %v2670, 0
    %2686 = vmatprep.subr.bf16.mxu0 0
    %2687 = vmatpush1.bf16.msra.mxu0 %v2679
    %2688 = vmatprep.subr.bf16.mxu0 0
    %2689 = vmatpush1.bf16.msra.mxu0 %v2680
    %2690 = vmatprep.subr.bf16.mxu0 0
    %2691 = vmatpush1.bf16.msra.mxu0 0
    %2692 = vmatprep.subr.bf16.mxu0 0
    %2693 = vmatpush1.bf16.msra.mxu0 0
    %2694 = vmatprep.subr.bf16.mxu0 0
    %2695 = vmatpush1.bf16.msra.mxu0 0
    %2696 = vmatprep.subr.bf16.mxu0 0
    %2697 = vmatpush1.bf16.msra.mxu0 0
    %2698 = vmatprep.subr.bf16.mxu0 0
    %2699 = vmatpush1.bf16.msra.mxu0 0
    %2700 = vmatprep.subr.bf16.mxu0 0
    %2701 = vmatpush1.bf16.msra.mxu0 0
    %2702 = vmatprep.subr.bf16.mxu0 0
    %2703 = vmatpush1.bf16.msra.mxu0 0
    %2704 = vmatprep.subr.bf16.mxu0 0
    %2705 = vmatpush1.bf16.msra.mxu0 0
    %2706 = vmatprep.subr.bf16.mxu0 0
    %2707 = vmatpush1.bf16.msra.mxu0 0
    %2708 = vmatprep.subr.bf16.mxu0 0
    %2709 = vmatpush1.bf16.msra.mxu0 0
    %2710 = vmatprep.subr.bf16.mxu0 0
    %2711 = vmatpush1.bf16.msra.mxu0 0
    %2712 = vmatprep.subr.bf16.mxu0 0
    %2713 = vmatpush1.bf16.msra.mxu0 0
    %2714 = vmatprep.subr.bf16.mxu0 0
    %2715 = vmatpush1.bf16.msra.mxu0 0
    %2716 = vmatprep.subr.bf16.mxu0 0
    %2717 = vmatpush1.bf16.msra.mxu0 0
    %2718 = vmatprep.mubr.bf16.mxu0 0
    %2719 = vmatmul.mubr.bf16.gmra.mrb[0].mxu0 %v2684
    %v2720 = vpop.f32.mrb[0].mxu0
    %v2721 = vadd.f32 0.0, %v2720
    %v2722 = vpop.f32.mrb[0].mxu0
    %v2723 = vpop.f32.mrb[0].mxu0
    %v2724 = vpop.f32.mrb[0].mxu0
    %2725 = vdwg.mxu0
    %v2730 = vunpack.c.l.b16 %v2312
    %v2731 = vunpack.c.l.b16 %v2313
    %v2732 = vunpack.c.l.b16 %v2314
    %v2733 = vunpack.c.l.b16 %v2315
    %v2734 = vpack.c.b16 %v2731, %v2730
    %v2735 = vpack.c.b16 %v2733, %v2732
    %v2739 = vsel %vm338, %v2620, 0
    %2741 = vmatprep.subr.bf16.mxu0 0
    %2742 = vmatpush1.bf16.msra.mxu0 %v2734
    %2743 = vmatprep.subr.bf16.mxu0 0
    %2744 = vmatpush1.bf16.msra.mxu0 %v2735
    %2745 = vmatprep.subr.bf16.mxu0 0
    %2746 = vmatpush1.bf16.msra.mxu0 0
    %2747 = vmatprep.subr.bf16.mxu0 0
    %2748 = vmatpush1.bf16.msra.mxu0 0
    %2749 = vmatprep.subr.bf16.mxu0 0
    %2750 = vmatpush1.bf16.msra.mxu0 0
    %2751 = vmatprep.subr.bf16.mxu0 0
    %2752 = vmatpush1.bf16.msra.mxu0 0
    %2753 = vmatprep.subr.bf16.mxu0 0
    %2754 = vmatpush1.bf16.msra.mxu0 0
    %2755 = vmatprep.subr.bf16.mxu0 0
    %2756 = vmatpush1.bf16.msra.mxu0 0
    %2757 = vmatprep.subr.bf16.mxu0 0
    %2758 = vmatpush1.bf16.msra.mxu0 0
    %2759 = vmatprep.subr.bf16.mxu0 0
    %2760 = vmatpush1.bf16.msra.mxu0 0
    %2761 = vmatprep.subr.bf16.mxu0 0
    %2762 = vmatpush1.bf16.msra.mxu0 0
    %2763 = vmatprep.subr.bf16.mxu0 0
    %2764 = vmatpush1.bf16.msra.mxu0 0
    %2765 = vmatprep.subr.bf16.mxu0 0
    %2766 = vmatpush1.bf16.msra.mxu0 0
    %2767 = vmatprep.subr.bf16.mxu0 0
    %2768 = vmatpush1.bf16.msra.mxu0 0
    %2769 = vmatprep.subr.bf16.mxu0 0
    %2770 = vmatpush1.bf16.msra.mxu0 0
    %2771 = vmatprep.subr.bf16.mxu0 0
    %2772 = vmatpush1.bf16.msra.mxu0 0
    %2773 = vmatprep.mubr.bf16.mxu0 0
    %2774 = vmatmul.mubr.bf16.gmra.mrb[0].mxu0 %v2739
    %v2775 = vpop.f32.mrb[0].mxu0
    %v2776 = vadd.f32 %v2721, %v2775
    %v2777 = vpop.f32.mrb[0].mxu0
    %v2778 = vpop.f32.mrb[0].mxu0
    %v2779 = vpop.f32.mrb[0].mxu0
    %2780 = vdwg.mxu0
    %v2781 = vpack.c.bf16 %v2567, %v2567
    %v2782 = vpack.c.bf16 %v2311, %v2311
    %2784 = vrot.lane.b32.xlu0 %v2782, 64
    %v2785 = vpop.permute.xlu0 %2784
    %v2787 = vsel %vm542, %v2781, 0
    %v2790 = vsel %vm592, %v2785, 0
    %2792 = vmatprep.subr.bf16.mxu0 0
    %2793 = vmatpush1.bf16.msra.mxu0 %v2790
    %2794 = vmatprep.subr.bf16.mxu0 0
    %2795 = vmatpush1.bf16.msra.mxu0 0
    %2796 = vmatprep.subr.bf16.mxu0 0
    %2797 = vmatpush1.bf16.msra.mxu0 0
    %2798 = vmatprep.subr.bf16.mxu0 0
    %2799 = vmatpush1.bf16.msra.mxu0 0
    %2800 = vmatprep.subr.bf16.mxu0 0
    %2801 = vmatpush1.bf16.msra.mxu0 0
    %2802 = vmatprep.subr.bf16.mxu0 0
    %2803 = vmatpush1.bf16.msra.mxu0 0
    %2804 = vmatprep.subr.bf16.mxu0 0
    %2805 = vmatpush1.bf16.msra.mxu0 0
    %2806 = vmatprep.subr.bf16.mxu0 0
    %2807 = vmatpush1.bf16.msra.mxu0 0
    %2808 = vmatprep.subr.bf16.mxu0 0
    %2809 = vmatpush1.bf16.msra.mxu0 0
    %2810 = vmatprep.subr.bf16.mxu0 0
    %2811 = vmatpush1.bf16.msra.mxu0 0
    %2812 = vmatprep.subr.bf16.mxu0 0
    %2813 = vmatpush1.bf16.msra.mxu0 0
    %2814 = vmatprep.subr.bf16.mxu0 0
    %2815 = vmatpush1.bf16.msra.mxu0 0
    %2816 = vmatprep.subr.bf16.mxu0 0
    %2817 = vmatpush1.bf16.msra.mxu0 0
    %2818 = vmatprep.subr.bf16.mxu0 0
    %2819 = vmatpush1.bf16.msra.mxu0 0
    %2820 = vmatprep.subr.bf16.mxu0 0
    %2821 = vmatpush1.bf16.msra.mxu0 0
    %2822 = vmatprep.subr.bf16.mxu0 0
    %2823 = vmatpush1.bf16.msra.mxu0 0
    %2824 = vmatprep.mubr.bf16.mxu0 0
    %2825 = vmatmul.mubr.bf16.gmra.mrb[0].mxu0 %v2787
    %v2826 = vpop.f32.mrb[0].mxu0
    %v2827 = vadd.f32 0.0, %v2826
    %v2828 = vpop.f32.mrb[0].mxu0
    %v2829 = vpop.f32.mrb[0].mxu0
    %v2830 = vpop.f32.mrb[0].mxu0
    %2831 = vdwg.mxu0
    %v2832 = vpack.c.bf16 %v2827, %v2827
    %v2833 = vpack.c.bf16 %v2568, %v2568
    %2834 = vrot.lane.b32.xlu0 %v2782, 32
    %v2835 = vpop.permute.xlu0 %2834
    %v2837 = vsel %vm542, %v2833, 0
    %v2840 = vsel %vm592, %v2835, 0
    %2842 = vmatprep.subr.bf16.mxu0 0
    %2843 = vmatpush1.bf16.msra.mxu0 %v2840
    %2844 = vmatprep.subr.bf16.mxu0 0
    %2845 = vmatpush1.bf16.msra.mxu0 0
    %2846 = vmatprep.subr.bf16.mxu0 0
    %2847 = vmatpush1.bf16.msra.mxu0 0
    %2848 = vmatprep.subr.bf16.mxu0 0
    %2849 = vmatpush1.bf16.msra.mxu0 0
    %2850 = vmatprep.subr.bf16.mxu0 0
    %2851 = vmatpush1.bf16.msra.mxu0 0
    %2852 = vmatprep.subr.bf16.mxu0 0
    %2853 = vmatpush1.bf16.msra.mxu0 0
    %2854 = vmatprep.subr.bf16.mxu0 0
    %2855 = vmatpush1.bf16.msra.mxu0 0
    %2856 = vmatprep.subr.bf16.mxu0 0
    %2857 = vmatpush1.bf16.msra.mxu0 0
    %2858 = vmatprep.subr.bf16.mxu0 0
    %2859 = vmatpush1.bf16.msra.mxu0 0
    %2860 = vmatprep.subr.bf16.mxu0 0
    %2861 = vmatpush1.bf16.msra.mxu0 0
    %2862 = vmatprep.subr.bf16.mxu0 0
    %2863 = vmatpush1.bf16.msra.mxu0 0
    %2864 = vmatprep.subr.bf16.mxu0 0
    %2865 = vmatpush1.bf16.msra.mxu0 0
    %2866 = vmatprep.subr.bf16.mxu0 0
    %2867 = vmatpush1.bf16.msra.mxu0 0
    %2868 = vmatprep.subr.bf16.mxu0 0
    %2869 = vmatpush1.bf16.msra.mxu0 0
    %2870 = vmatprep.subr.bf16.mxu0 0
    %2871 = vmatpush1.bf16.msra.mxu0 0
    %2872 = vmatprep.subr.bf16.mxu0 0
    %2873 = vmatpush1.bf16.msra.mxu0 0
    %2874 = vmatprep.mubr.bf16.mxu0 0
    %2875 = vmatmul.mubr.bf16.gmra.mrb[0].mxu0 %v2837
    %v2876 = vpop.f32.mrb[0].mxu0
    %v2877 = vadd.f32 0.0, %v2876
    %v2878 = vpop.f32.mrb[0].mxu0
    %v2879 = vpop.f32.mrb[0].mxu0
    %v2880 = vpop.f32.mrb[0].mxu0
    %2881 = vdwg.mxu0
    %v2882 = vpack.c.bf16 %v2877, %v2877
    %v2884 = vsel %vm338, %v2882, 0
    %2886 = vmatprep.subr.bf16.mxu0 0
    %2887 = vmatpush1.bf16.msra.mxu0 %v2679
    %2888 = vmatprep.subr.bf16.mxu0 0
    %2889 = vmatpush1.bf16.msra.mxu0 %v2680
    %2890 = vmatprep.subr.bf16.mxu0 0
    %2891 = vmatpush1.bf16.msra.mxu0 0
    %2892 = vmatprep.subr.bf16.mxu0 0
    %2893 = vmatpush1.bf16.msra.mxu0 0
    %2894 = vmatprep.subr.bf16.mxu0 0
    %2895 = vmatpush1.bf16.msra.mxu0 0
    %2896 = vmatprep.subr.bf16.mxu0 0
    %2897 = vmatpush1.bf16.msra.mxu0 0
    %2898 = vmatprep.subr.bf16.mxu0 0
    %2899 = vmatpush1.bf16.msra.mxu0 0
    %2900 = vmatprep.subr.bf16.mxu0 0
    %2901 = vmatpush1.bf16.msra.mxu0 0
    %2902 = vmatprep.subr.bf16.mxu0 0
    %2903 = vmatpush1.bf16.msra.mxu0 0
    %2904 = vmatprep.subr.bf16.mxu0 0
    %2905 = vmatpush1.bf16.msra.mxu0 0
    %2906 = vmatprep.subr.bf16.mxu0 0
    %2907 = vmatpush1.bf16.msra.mxu0 0
    %2908 = vmatprep.subr.bf16.mxu0 0
    %2909 = vmatpush1.bf16.msra.mxu0 0
    %2910 = vmatprep.subr.bf16.mxu0 0
    %2911 = vmatpush1.bf16.msra.mxu0 0
    %2912 = vmatprep.subr.bf16.mxu0 0
    %2913 = vmatpush1.bf16.msra.mxu0 0
    %2914 = vmatprep.subr.bf16.mxu0 0
    %2915 = vmatpush1.bf16.msra.mxu0 0
    %2916 = vmatprep.subr.bf16.mxu0 0
    %2917 = vmatpush1.bf16.msra.mxu0 0
    %2918 = vmatprep.mubr.bf16.mxu0 0
    %2919 = vmatmul.mubr.bf16.gmra.mrb[0].mxu0 %v2884
    %v2920 = vpop.f32.mrb[0].mxu0
    %v2921 = vadd.f32 0.0, %v2920
    %v2922 = vpop.f32.mrb[0].mxu0
    %v2923 = vpop.f32.mrb[0].mxu0
    %v2924 = vpop.f32.mrb[0].mxu0
    %2925 = vdwg.mxu0
    %v2927 = vsel %vm338, %v2832, 0
    %2929 = vmatprep.subr.bf16.mxu0 0
    %2930 = vmatpush1.bf16.msra.mxu0 %v2734
    %2931 = vmatprep.subr.bf16.mxu0 0
    %2932 = vmatpush1.bf16.msra.mxu0 %v2735
    %2933 = vmatprep.subr.bf16.mxu0 0
    %2934 = vmatpush1.bf16.msra.mxu0 0
    %2935 = vmatprep.subr.bf16.mxu0 0
    %2936 = vmatpush1.bf16.msra.mxu0 0
    %2937 = vmatprep.subr.bf16.mxu0 0
    %2938 = vmatpush1.bf16.msra.mxu0 0
    %2939 = vmatprep.subr.bf16.mxu0 0
    %2940 = vmatpush1.bf16.msra.mxu0 0
    %2941 = vmatprep.subr.bf16.mxu0 0
    %2942 = vmatpush1.bf16.msra.mxu0 0
    %2943 = vmatprep.subr.bf16.mxu0 0
    %2944 = vmatpush1.bf16.msra.mxu0 0
    %2945 = vmatprep.subr.bf16.mxu0 0
    %2946 = vmatpush1.bf16.msra.mxu0 0
    %2947 = vmatprep.subr.bf16.mxu0 0
    %2948 = vmatpush1.bf16.msra.mxu0 0
    %2949 = vmatprep.subr.bf16.mxu0 0
    %2950 = vmatpush1.bf16.msra.mxu0 0
    %2951 = vmatprep.subr.bf16.mxu0 0
    %2952 = vmatpush1.bf16.msra.mxu0 0
    %2953 = vmatprep.subr.bf16.mxu0 0
    %2954 = vmatpush1.bf16.msra.mxu0 0
    %2955 = vmatprep.subr.bf16.mxu0 0
    %2956 = vmatpush1.bf16.msra.mxu0 0
    %2957 = vmatprep.subr.bf16.mxu0 0
    %2958 = vmatpush1.bf16.msra.mxu0 0
    %2959 = vmatprep.subr.bf16.mxu0 0
    %2960 = vmatpush1.bf16.msra.mxu0 0
    %2961 = vmatprep.mubr.bf16.mxu0 0
    %2962 = vmatmul.mubr.bf16.gmra.mrb[0].mxu0 %v2927
    %v2963 = vpop.f32.mrb[0].mxu0
    %v2964 = vadd.f32 %v2921, %v2963
    %v2965 = vpop.f32.mrb[0].mxu0
    %v2966 = vpop.f32.mrb[0].mxu0
    %v2967 = vpop.f32.mrb[0].mxu0
    %2968 = vdwg.mxu0
    %v2969 = vlaneseq
    %v2970 = vshrl.u32 %v2969, 7
    %v2971 = vsub.s32 0, %v2970
    %v2972 = vrot.slane %v2320, %v2971
    %v2973 = vadd.f32 %v2776, %v2972
    %v2974 = vadd.f32 %v2964, %v2972
    %v2975 = vadd.f32 %v2133, %v2973
    %v2976 = vadd.f32 %v2134, %v2974
    %v2977 = vsel %vm139, %v2975, 0.0
    %2978 = vadd.xlane.f32.xlu0 %v2977
    %v2979 = vpop.xlane.xlu0 %2978
    %v2980 = vsel %vm139, %v2976, 0.0
    %2981 = vadd.xlane.f32.xlu0 %v2980
    %v2982 = vpop.xlane.xlu0 %2981
    %v2983 = vmul.f32 %v2979, %v998
    %v2984 = vmul.f32 %v2982, %v998
    %v2985 = vsub.f32 %v2975, %v2983
    %v2986 = vsub.f32 %v2976, %v2984
    %v2987 = vmul.f32 %v2985, %v2985
    %v2988 = vmul.f32 %v2986, %v2986
    %v2989 = vsel %vm139, %v2987, 0.0
    %2990 = vadd.xlane.f32.xlu0 %v2989
    %v2991 = vpop.xlane.xlu0 %2990
    %v2992 = vsel %vm139, %v2988, 0.0
    %2993 = vadd.xlane.f32.xlu0 %v2992
    %v2994 = vpop.xlane.xlu0 %2993
    %v2995 = vmul.f32 %v2991, %v998
    %v2996 = vmul.f32 %v2994, %v998
    %v2997 = vadd.f32 %v2995, 1e-05
    %v2998 = vadd.f32 %v2996, 1e-05
    %v2999 = vrsqrt.pop %v2997
    %v3000 = vrsqrt.pop %v2998
    %v3001 = vmul.f32 %v2985, %v2999
    %v3002 = vmul.f32 %v2986, %v3000
    %v3003 = vld [vmem:[#allocation4 + $0x16] sm:$0x1]
    %v3004 = vlaneseq
    %v3005 = vshrl.u32 %v3004, 7
    %v3006 = vsub.s32 0, %v3005
    %v3007 = vrot.slane %v3003, %v3006
    %v3008 = vmul.f32 %v3001, %v3007
    %v3009 = vmul.f32 %v3002, %v3007
    %v3010 = vld [vmem:[#allocation4 + $0x17] sm:$0x1]
    %v3011 = vlaneseq
    %v3012 = vshrl.u32 %v3011, 7
    %v3013 = vsub.s32 0, %v3012
    %v3014 = vrot.slane %v3010, %v3013
    %v3015 = vadd.f32 %v3008, %v3014
    %v3016 = vadd.f32 %v3009, %v3014
    %v3017 = vld [vmem:[#allocation6 + $0x28] sm:$0xf]
    %v3018 = vld [vmem:[#allocation6 + $0x58] sm:$0xf]
    %v3019 = vld [vmem:[#allocation6 + $0x88] sm:$0xf]
    %v3020 = vld [vmem:[#allocation6 + $0xb8] sm:$0xf]
    %v3021 = vld [vmem:[#allocation6 + $0xe8] sm:$0xf]
    %v3022 = vld [vmem:[#allocation6 + $0x118] sm:$0xf]
    %v3023 = vld [vmem:[#allocation6 + $0x148] sm:$0xf]
    %v3024 = vld [vmem:[#allocation6 + $0x178] sm:$0xf]
    %v3025 = vld [vmem:[#allocation4 + $0x18] sm:$0x1]
    %v3026 = vld [vmem:[#allocation7 + $0x4] sm:$0xf]
    %v3027 = vld [vmem:[#allocation7 + $0xc] sm:$0xf]
    %v3028 = vld [vmem:[#allocation7 + $0x14] sm:$0xf]
    %v3029 = vld [vmem:[#allocation7 + $0x1c] sm:$0xf]
    %v3030 = vld [vmem:[#allocation7 + $0x24] sm:$0xf]
    %v3031 = vld [vmem:[#allocation7 + $0x2c] sm:$0xf]
    %v3032 = vld [vmem:[#allocation7 + $0x34] sm:$0xf]
    %v3033 = vld [vmem:[#allocation7 + $0x3c] sm:$0xf]
    %v3034 = vld [vmem:[#allocation7 + $0x44] sm:$0xf]
    %v3035 = vld [vmem:[#allocation7 + $0x4c] sm:$0xf]
    %v3036 = vld [vmem:[#allocation7 + $0x54] sm:$0xf]
    %v3037 = vld [vmem:[#allocation7 + $0x5c] sm:$0xf]
    %v3038 = vld [vmem:[#allocation7 + $0x64] sm:$0xf]
    %v3039 = vld [vmem:[#allocation7 + $0x6c] sm:$0xf]
    %v3040 = vld [vmem:[#allocation7 + $0x74] sm:$0xf]
    %v3041 = vld [vmem:[#allocation7 + $0x7c] sm:$0xf]
    %v3042 = vld [vmem:[#allocation4 + $0x19] sm:$0x1]
    %v3043 = vpack.c.bf16 %v3016, %v3015
    %v3044 = vlaneseq
    %v3045 = vshrl.u32 %v3044, 7
    %v3046 = vsub.s32 0, %v3045
    %v3047 = vrot.slane %v3025, %v3046
    %v3056 = vunpack.c.l.b16 %v3017
    %v3057 = vunpack.c.l.b16 %v3018
    %v3058 = vunpack.c.l.b16 %v3019
    %v3059 = vunpack.c.l.b16 %v3020
    %v3060 = vunpack.c.l.b16 %v3021
    %v3061 = vunpack.c.l.b16 %v3022
    %v3062 = vunpack.c.l.b16 %v3023
    %v3063 = vunpack.c.l.b16 %v3024
    %v3064 = vpack.c.b16 %v3057, %v3056
    %v3065 = vpack.c.b16 %v3059, %v3058
    %v3066 = vpack.c.b16 %v3061, %v3060
    %v3067 = vpack.c.b16 %v3063, %v3062
    %v3073 = vsel %vm139, %v3043, 0
    %3075 = vmatprep.subr.bf16.mxu0 0
    %3076 = vmatpush1.bf16.msra.mxu0 %v3064
    %3077 = vmatprep.subr.bf16.mxu0 0
    %3078 = vmatpush1.bf16.msra.mxu0 %v3065
    %3079 = vmatprep.subr.bf16.mxu0 0
    %3080 = vmatpush1.bf16.msra.mxu0 %v3066
    %3081 = vmatprep.subr.bf16.mxu0 0
    %3082 = vmatpush1.bf16.msra.mxu0 %v3067
    %3083 = vmatprep.subr.bf16.mxu0 0
    %3084 = vmatpush1.bf16.msra.mxu0 0
    %3085 = vmatprep.subr.bf16.mxu0 0
    %3086 = vmatpush1.bf16.msra.mxu0 0
    %3087 = vmatprep.subr.bf16.mxu0 0
    %3088 = vmatpush1.bf16.msra.mxu0 0
    %3089 = vmatprep.subr.bf16.mxu0 0
    %3090 = vmatpush1.bf16.msra.mxu0 0
    %3091 = vmatprep.subr.bf16.mxu0 0
    %3092 = vmatpush1.bf16.msra.mxu0 0
    %3093 = vmatprep.subr.bf16.mxu0 0
    %3094 = vmatpush1.bf16.msra.mxu0 0
    %3095 = vmatprep.subr.bf16.mxu0 0
    %3096 = vmatpush1.bf16.msra.mxu0 0
    %3097 = vmatprep.subr.bf16.mxu0 0
    %3098 = vmatpush1.bf16.msra.mxu0 0
    %3099 = vmatprep.subr.bf16.mxu0 0
    %3100 = vmatpush1.bf16.msra.mxu0 0
    %3101 = vmatprep.subr.bf16.mxu0 0
    %3102 = vmatpush1.bf16.msra.mxu0 0
    %3103 = vmatprep.subr.bf16.mxu0 0
    %3104 = vmatpush1.bf16.msra.mxu0 0
    %3105 = vmatprep.subr.bf16.mxu0 0
    %3106 = vmatpush1.bf16.msra.mxu0 0
    %3107 = vmatprep.mubr.bf16.mxu0 0
    %3108 = vmatmul.mubr.bf16.gmra.mrb[0].mxu0 %v3073
    %v3109 = vpop.f32.mrb[0].mxu0
    %v3110 = vadd.f32 %v3047, %v3109
    %v3111 = vpop.f32.mrb[0].mxu0
    %v3112 = vpop.f32.mrb[0].mxu0
    %v3113 = vadd.f32 %v3047, %v3112
    %v3114 = vpop.f32.mrb[0].mxu0
    %3115 = vdwg.mxu0
    %v3116 = vmax.f32 %v3110, 0.0
    %v3117 = vmax.f32 %v3113, 0.0
    %v3118 = vpack.c.bf16 %v3117, %v3116
    %v3119 = vlaneseq
    %v3120 = vshrl.u32 %v3119, 7
    %v3121 = vsub.s32 0, %v3120
    %v3122 = vrot.slane %v3042, %v3121
    %v3139 = vunpack.c.l.b16 %v3026
    %v3140 = vunpack.c.l.b16 %v3027
    %v3141 = vunpack.c.l.b16 %v3028
    %v3142 = vunpack.c.l.b16 %v3029
    %v3143 = vunpack.c.l.b16 %v3030
    %v3144 = vunpack.c.l.b16 %v3031
    %v3145 = vunpack.c.l.b16 %v3032
    %v3146 = vunpack.c.l.b16 %v3033
    %v3147 = vunpack.c.l.b16 %v3034
    %v3148 = vunpack.c.l.b16 %v3035
    %v3149 = vunpack.c.l.b16 %v3036
    %v3150 = vunpack.c.l.b16 %v3037
    %v3151 = vunpack.c.l.b16 %v3038
    %v3152 = vunpack.c.l.b16 %v3039
    %v3153 = vunpack.c.l.b16 %v3040
    %v3154 = vunpack.c.l.b16 %v3041
    %v3155 = vpack.c.b16 %v3140, %v3139
    %v3156 = vpack.c.b16 %v3142, %v3141
    %v3157 = vpack.c.b16 %v3144, %v3143
    %v3158 = vpack.c.b16 %v3146, %v3145
    %v3159 = vpack.c.b16 %v3148, %v3147
    %v3160 = vpack.c.b16 %v3150, %v3149
    %v3161 = vpack.c.b16 %v3152, %v3151
    %v3162 = vpack.c.b16 %v3154, %v3153
    %3171 = vmatprep.subr.bf16.mxu0 0
    %3172 = vmatpush1.bf16.msra.mxu0 %v3155
    %3173 = vmatprep.subr.bf16.mxu0 0
    %3174 = vmatpush1.bf16.msra.mxu0 %v3156
    %3175 = vmatprep.subr.bf16.mxu0 0
    %3176 = vmatpush1.bf16.msra.mxu0 %v3157
    %3177 = vmatprep.subr.bf16.mxu0 0
    %3178 = vmatpush1.bf16.msra.mxu0 %v3158
    %3179 = vmatprep.subr.bf16.mxu0 0
    %3180 = vmatpush1.bf16.msra.mxu0 %v3159
    %3181 = vmatprep.subr.bf16.mxu0 0
    %3182 = vmatpush1.bf16.msra.mxu0 %v3160
    %3183 = vmatprep.subr.bf16.mxu0 0
    %3184 = vmatpush1.bf16.msra.mxu0 %v3161
    %3185 = vmatprep.subr.bf16.mxu0 0
    %3186 = vmatpush1.bf16.msra.mxu0 %v3162
    %3187 = vmatprep.subr.bf16.mxu0 0
    %3188 = vmatpush1.bf16.msra.mxu0 0
    %3189 = vmatprep.subr.bf16.mxu0 0
    %3190 = vmatpush1.bf16.msra.mxu0 0
    %3191 = vmatprep.subr.bf16.mxu0 0
    %3192 = vmatpush1.bf16.msra.mxu0 0
    %3193 = vmatprep.subr.bf16.mxu0 0
    %3194 = vmatpush1.bf16.msra.mxu0 0
    %3195 = vmatprep.subr.bf16.mxu0 0
    %3196 = vmatpush1.bf16.msra.mxu0 0
    %3197 = vmatprep.subr.bf16.mxu0 0
    %3198 = vmatpush1.bf16.msra.mxu0 0
    %3199 = vmatprep.subr.bf16.mxu0 0
    %3200 = vmatpush1.bf16.msra.mxu0 0
    %3201 = vmatprep.subr.bf16.mxu0 0
    %3202 = vmatpush1.bf16.msra.mxu0 0
    %3203 = vmatprep.mubr.bf16.mxu0 0
    %3204 = vmatmul.mubr.bf16.gmra.mrb[0].mxu0 %v3118
    %v3205 = vpop.f32.mrb[0].mxu0
    %v3206 = vadd.f32 %v3122, %v3205
    %v3207 = vpop.f32.mrb[0].mxu0
    %v3208 = vpop.f32.mrb[0].mxu0
    %v3209 = vadd.f32 %v3122, %v3208
    %v3210 = vpop.f32.mrb[0].mxu0
    %3211 = vdwg.mxu0
    %v3212 = vadd.f32 %v3015, %v3206
    %v3213 = vadd.f32 %v3016, %v3209
    %v3214 = vsel %vm139, %v3212, 0.0
    %3215 = vadd.xlane.f32.xlu0 %v3214
    %v3216 = vpop.xlane.xlu0 %3215
    %v3217 = vsel %vm139, %v3213, 0.0
    %3218 = vadd.xlane.f32.xlu0 %v3217
    %v3219 = vpop.xlane.xlu0 %3218
    %v3220 = vmul.f32 %v3216, %v998
    %v3221 = vmul.f32 %v3219, %v998
    %v3222 = vsub.f32 %v3212, %v3220
    %v3223 = vsub.f32 %v3213, %v3221
    %v3224 = vmul.f32 %v3222, %v3222
    %v3225 = vmul.f32 %v3223, %v3223
    %v3226 = vsel %vm139, %v3224, 0.0
    %3227 = vadd.xlane.f32.xlu0 %v3226
    %v3228 = vpop.xlane.xlu0 %3227
    %v3229 = vsel %vm139, %v3225, 0.0
    %3230 = vadd.xlane.f32.xlu0 %v3229
    %v3231 = vpop.xlane.xlu0 %3230
    %v3232 = vmul.f32 %v3228, %v998
    %v3233 = vmul.f32 %v3231, %v998
    %v3234 = vadd.f32 %v3232, 1e-05
    %v3235 = vadd.f32 %v3233, 1e-05
    %v3236 = vrsqrt.pop %v3234
    %v3237 = vrsqrt.pop %v3235
    %v3238 = vmul.f32 %v3222, %v3236
    %v3239 = vmul.f32 %v3223, %v3237
    %v3240 = vld [vmem:[#allocation4 + $0x1a] sm:$0x1]
    %v3241 = vlaneseq
    %v3242 = vshrl.u32 %v3241, 7
    %v3243 = vsub.s32 0, %v3242
    %v3244 = vrot.slane %v3240, %v3243
    %v3245 = vmul.f32 %v3238, %v3244
    %v3246 = vmul.f32 %v3239, %v3244
    %v3247 = vld [vmem:[#allocation4 + $0x1b] sm:$0x1]
    %v3248 = vlaneseq
    %v3249 = vshrl.u32 %v3248, 7
    %v3250 = vsub.s32 0, %v3249
    %v3251 = vrot.slane %v3247, %v3250
    %v3252 = vadd.f32 %v3245, %v3251
    %v3253 = vadd.f32 %v3246, %v3251
    %v3254 = vsel %vm139, %v3252, 0.0
    %3255 = vadd.xlane.f32.xlu0 %v3254
    %v3256 = vpop.xlane.xlu0 %3255
    %v3257 = vsel %vm139, %v3253, 0.0
    %3258 = vadd.xlane.f32.xlu0 %v3257
    %v3259 = vpop.xlane.xlu0 %3258
    %v3260 = vmul.f32 %v3256, %v998
    %v3261 = vmul.f32 %v3259, %v998
    %v3262 = vsub.f32 %v3252, %v3260
    %v3263 = vsub.f32 %v3253, %v3261
    %v3264 = vmul.f32 %v3262, %v3262
    %v3265 = vmul.f32 %v3263, %v3263
    %v3266 = vsel %vm139, %v3264, 0.0
    %3267 = vadd.xlane.f32.xlu0 %v3266
    %v3268 = vpop.xlane.xlu0 %3267
    %v3269 = vsel %vm139, %v3265, 0.0
    %3270 = vadd.xlane.f32.xlu0 %v3269
    %v3271 = vpop.xlane.xlu0 %3270
    %v3272 = vmul.f32 %v3268, %v998
    %v3273 = vmul.f32 %v3271, %v998
    %v3274 = vadd.f32 %v3272, 1e-05
    %v3275 = vadd.f32 %v3273, 1e-05
    %v3276 = vrsqrt.pop %v3274
    %v3277 = vrsqrt.pop %v3275
    %v3278 = vmul.f32 %v3262, %v3276
    %v3279 = vmul.f32 %v3263, %v3277
    %v3280 = vld [vmem:[#allocation4 + $0x1c] sm:$0x1]
    %v3281 = vlaneseq
    %v3282 = vshrl.u32 %v3281, 7
    %v3283 = vsub.s32 0, %v3282
    %v3284 = vrot.slane %v3280, %v3283
    %v3285 = vmul.f32 %v3278, %v3284
    %v3286 = vmul.f32 %v3279, %v3284
    %v3287 = vld [vmem:[#allocation4 + $0x1d] sm:$0x1]
    %v3288 = vlaneseq
    %v3289 = vshrl.u32 %v3288, 7
    %v3290 = vsub.s32 0, %v3289
    %v3291 = vrot.slane %v3287, %v3290
    %v3292 = vadd.f32 %v3285, %v3291
    %v3293 = vadd.f32 %v3286, %v3291
    %v3294 = vld [vmem:[#allocation6 + $0x2c] sm:$0xf]
    %v3295 = vld [vmem:[#allocation6 + $0x5c] sm:$0xf]
    %v3296 = vld [vmem:[#allocation6 + $0x8c] sm:$0xf]
    %v3297 = vld [vmem:[#allocation6 + $0xbc] sm:$0xf]
    %v3298 = vld [vmem:[#allocation6 + $0xec] sm:$0xf]
    %v3299 = vld [vmem:[#allocation6 + $0x11c] sm:$0xf]
    %v3300 = vld [vmem:[#allocation6 + $0x14c] sm:$0xf]
    %v3301 = vld [vmem:[#allocation6 + $0x17c] sm:$0xf]
    %v3302 = vpack.c.bf16 %v3293, %v3292
    %v3303 = vld [vmem:[#allocation4 + $0x1e] sm:$0x1]
    %v3304 = vlaneseq
    %v3305 = vshrl.u32 %v3304, 7
    %v3306 = vsub.s32 0, %v3305
    %v3307 = vrot.slane %v3303, %v3306
    %v3316 = vunpack.c.l.b16 %v3294
    %v3317 = vunpack.c.l.b16 %v3295
    %v3318 = vunpack.c.l.b16 %v3296
    %v3319 = vunpack.c.l.b16 %v3297
    %v3320 = vunpack.c.l.b16 %v3298
    %v3321 = vunpack.c.l.b16 %v3299
    %v3322 = vunpack.c.l.b16 %v3300
    %v3323 = vunpack.c.l.b16 %v3301
    %v3324 = vpack.c.b16 %v3317, %v3316
    %v3325 = vpack.c.b16 %v3319, %v3318
    %v3326 = vpack.c.b16 %v3321, %v3320
    %v3327 = vpack.c.b16 %v3323, %v3322
    %v3333 = vsel %vm139, %v3302, 0
    %3335 = vmatprep.subr.bf16.mxu0 0
    %3336 = vmatpush1.bf16.msra.mxu0 %v3324
    %3337 = vmatprep.subr.bf16.mxu0 0
    %3338 = vmatpush1.bf16.msra.mxu0 %v3325
    %3339 = vmatprep.subr.bf16.mxu0 0
    %3340 = vmatpush1.bf16.msra.mxu0 %v3326
    %3341 = vmatprep.subr.bf16.mxu0 0
    %3342 = vmatpush1.bf16.msra.mxu0 %v3327
    %3343 = vmatprep.subr.bf16.mxu0 0
    %3344 = vmatpush1.bf16.msra.mxu0 0
    %3345 = vmatprep.subr.bf16.mxu0 0
    %3346 = vmatpush1.bf16.msra.mxu0 0
    %3347 = vmatprep.subr.bf16.mxu0 0
    %3348 = vmatpush1.bf16.msra.mxu0 0
    %3349 = vmatprep.subr.bf16.mxu0 0
    %3350 = vmatpush1.bf16.msra.mxu0 0
    %3351 = vmatprep.subr.bf16.mxu0 0
    %3352 = vmatpush1.bf16.msra.mxu0 0
    %3353 = vmatprep.subr.bf16.mxu0 0
    %3354 = vmatpush1.bf16.msra.mxu0 0
    %3355 = vmatprep.subr.bf16.mxu0 0
    %3356 = vmatpush1.bf16.msra.mxu0 0
    %3357 = vmatprep.subr.bf16.mxu0 0
    %3358 = vmatpush1.bf16.msra.mxu0 0
    %3359 = vmatprep.subr.bf16.mxu0 0
    %3360 = vmatpush1.bf16.msra.mxu0 0
    %3361 = vmatprep.subr.bf16.mxu0 0
    %3362 = vmatpush1.bf16.msra.mxu0 0
    %3363 = vmatprep.subr.bf16.mxu0 0
    %3364 = vmatpush1.bf16.msra.mxu0 0
    %3365 = vmatprep.subr.bf16.mxu0 0
    %3366 = vmatpush1.bf16.msra.mxu0 0
    %3367 = vmatprep.mubr.bf16.mxu0 0
    %3368 = vmatmul.mubr.bf16.gmra.mrb[0].mxu0 %v3333
    %v3369 = vpop.f32.mrb[0].mxu0
    %v3370 = vadd.f32 %v3307, %v3369
    %v3371 = vpop.f32.mrb[0].mxu0
    %v3372 = vpop.f32.mrb[0].mxu0
    %v3373 = vadd.f32 %v3307, %v3372
    %v3374 = vpop.f32.mrb[0].mxu0
    %3375 = vdwg.mxu0
    %3376 = vst [vmem:[%s6] sm:$0xff] %v3370
    %3377 = vst [vmem:[%s6 + $0x8] sm:$0xff] %v3373
    // Predicated region
    $region42: #{transformer_forward.1} parent=1 // pred_check
      _
    $region43: #{transformer_forward.1} parent=1 // pred_check_branch
      %3379 = sbr.rel (0) target = $region45
    $region44: #{transformer_forward.1} parent=1 // pred_region
      _
    $region45: #{transformer_forward.1} parent=1 // pred_fallthru
      _
    // Predicated region
    $region46: #{transformer_forward.1} parent=1 // pred_check
      _
    $region47: #{transformer_forward.1} parent=1 // pred_check_branch
      %3381 = sbr.rel (0) target = $region49
    $region48: #{transformer_forward.1} parent=1 // pred_region
      _
    $region49: #{transformer_forward.1} parent=1 // pred_fallthru
      _
    %3382 = vsyncpa [#allocation3], 1
    %3383 = vsyncpa [#allocation5], 1
    %3384 = vsyncpa [#allocation8], 1

</llo_original>
